<compile_context>
chip_gen: v7x
topology: tpu7x:2x2x1
jax: 0.10.0
libtpu: 0.0.40
codegen_flags: <defaults>
</compile_context>

<pallas_src>
import functools

import jax
import jax.numpy as jnp
from jax.experimental import pallas as pl
from jax.experimental.pallas import tpu as pltpu

K = 3  # conv kernel size (stride=1, padding=1 -> "same")


def _elu(x):
    # ELU with alpha=1.0 (PyTorch F.elu default); min guard keeps exp in range.
    return jnp.where(x > 0, x, jnp.exp(jnp.minimum(x, 0.0)) - 1.0)


def _decode_nodown_kernel(x1_ref, x2_ref, w1_ref, b1_ref, w2_ref, b2_ref,
                          mask_ref, out_ref, *, H, W, P):
    # x1_ref/x2_ref: (1, C/2, H*W)   inputs, channels on sublanes, pixels on lanes
    # w1_ref: (9, Cout, Cin) per-tap weight tiles, w2_ref: (9, Cout, Cout)
    # b1_ref/b2_ref: (Cout, 1)
    # mask_ref: (2, H*W) 0/1 column-validity masks (row 0: j-1 valid, row 1: j+1 valid)
    # out_ref: (1, Cout, H*W)
    HW = H * W
    cout = out_ref.shape[1]

    # Fused channel concat (this is also the centre tap of conv1 and the residual).
    x = jnp.concatenate([x1_ref[0], x2_ref[0]], axis=0)          # (Cin, HW)

    masks = mask_ref[...]
    m_left = masks[0:1, :]      # zero where j == 0     (kw == 0 taps)
    m_right = masks[1:2, :]     # zero where j == W - 1 (kw == 2 taps)

    def conv3x3_elu(inp, w_ref, b_ref):
        c_in = inp.shape[0]
        # Zero-pad the flattened image with P (>= W+1, lane-tile aligned) zeros on
        # both sides so tap (kh, kw) is the static lane slice [off : off + HW]
        # with off = P + (kh-1)*W + (kw-1).  Out-of-range rows read zeros from the
        # pad; out-of-range columns are killed by m_left / m_right.
        zpad = jnp.zeros((c_in, P), inp.dtype)
        xp = jnp.concatenate([zpad, inp, zpad], axis=1)          # (c_in, HW + 2P)
        w_all = w_ref[...]                                       # (9, cout, c_in)

        acc = jnp.zeros((cout, HW), jnp.float32)
        for kh in range(K):
            for kw in range(K):
                if kh == 1 and kw == 1:
                    patch = inp                                  # centre tap == input
                else:
                    off = P + (kh - 1) * W + (kw - 1)
                    patch = xp[:, off:off + HW]                  # (c_in, HW)
                if kw == 0:
                    patch = patch * m_left
                elif kw == 2:
                    patch = patch * m_right
                w_tap = w_all[kh * K + kw]                       # (cout, c_in)
                for ci in range(c_in):                           # VPU broadcast FMAs
                    acc = acc + w_tap[:, ci:ci + 1] * patch[ci:ci + 1, :]
        return _elu(acc + b_ref[...])

    h1 = conv3x3_elu(x, w1_ref, b1_ref)
    h2 = conv3x3_elu(h1, w2_ref, b2_ref)

    # Residual add reuses the already-built concat; lane-dense unmasked store.
    out_ref[0] = x + h2


def decode_nodown(x1, x2, w1, b1, w2, b2):
    """Fused DecodeNoDown forward.

    x1, x2 : (N, C/2, H, W) float32  (NCHW, like the PyTorch module)
    w1, b1 : (C, C, 3, 3), (C,)      ResBlock.conv1 params (PyTorch OIHW layout)
    w2, b2 : (C, C, 3, 3), (C,)      ResBlock.conv2 params
    returns: (N, C, H, W) float32
    """
    n, c_half, h, w = x1.shape
    cin = 2 * c_half
    cout = w1.shape[0]
    assert cin == cout, "ResBlock residual add requires in_channel == out_channel"
    hw = h * w

    # Lane-dense (C, H*W) layout: pure reshapes, no HBM pad/concat/transpose of data.
    x1f = x1.reshape(n, c_half, hw)
    x2f = x2.reshape(n, c_half, hw)
    # Per-tap (Cout, Cin) weight tiles, taps on the leading dim.
    w1t = jnp.transpose(w1, (2, 3, 0, 1)).reshape(K * K, cout, cin)
    w2t = jnp.transpose(w2, (2, 3, 0, 1)).reshape(K * K, cout, cout)
    b1c = b1.reshape(cout, 1)
    b2c = b2.reshape(cout, 1)

    # 0/1 column-validity masks (computed once, 2*H*W floats).
    col = jnp.arange(hw, dtype=jnp.int32) % w
    col_masks = jnp.stack([(col >= 1).astype(jnp.float32),
                           (col <= w - 2).astype(jnp.float32)], axis=0)  # (2, HW)

    # Flat-row zero pad width: >= W+1 and rounded up to a full lane tile so the
    # in-kernel concat boundaries stay 128-aligned.
    pad = ((max(w + 1, 128) + 127) // 128) * 128

    kernel = functools.partial(_decode_nodown_kernel, H=h, W=w, P=pad)

    out = pl.pallas_call(
        kernel,
        out_shape=jax.ShapeDtypeStruct((n, cout, hw), jnp.float32),
        grid_spec=pltpu.PrefetchScalarGridSpec(
            num_scalar_prefetch=0,
            grid=(n,),
            in_specs=[
                pl.BlockSpec((1, c_half, hw), lambda i: (i, 0, 0)),
                pl.BlockSpec((1, c_half, hw), lambda i: (i, 0, 0)),
                pl.BlockSpec((K * K, cout, cin), lambda i: (0, 0, 0)),
                pl.BlockSpec((cout, 1), lambda i: (0, 0)),
                pl.BlockSpec((K * K, cout, cout), lambda i: (0, 0, 0)),
                pl.BlockSpec((cout, 1), lambda i: (0, 0)),
                pl.BlockSpec((2, hw), lambda i: (0, 0)),
            ],
            out_specs=pl.BlockSpec((1, cout, hw), lambda i: (i, 0, 0)),
        ),
        compiler_params=pltpu.CompilerParams(
            dimension_semantics=("parallel",)),
    )(x1f, x2f, w1t, b1c, w2t, b2c, col_masks)

    # TODO(synk): for large H*W add row-strip tiling (grid over row strips with a
    # 1-row halo, strip sized per-chip VMEM) and, for C >= ~128, switch to an MXU
    # tap-matmul path with bf16 operands; at C=4 / 16x16 one image per step fits
    # easily in VMEM and the VPU path is the right regime.
    return out.reshape(n, cout, h, w)


def reference(x1, x2, w1, b1, w2, b2):
    """Pure-JAX reference mirroring the PyTorch forward (NCHW / OIHW)."""
    x = jnp.concatenate([x1, x2], axis=1)

    def conv(inp, wgt, bias):
        y = jax.lax.conv_general_dilated(
            inp, wgt, window_strides=(1, 1), padding=((1, 1), (1, 1)),
            dimension_numbers=("NCHW", "OIHW", "NCHW"))
        return y + bias[None, :, None, None]

    h1 = jax.nn.elu(conv(x, w1, b1))
    h2 = jax.nn.elu(conv(h1, w2, b2))
    return x + h2


if __name__ == "__main__":
    # Small shapes: batch=2, spatial=16x16, x1/x2 each 2 channels
    # -> in_channel = out_channel = 4 (required by the residual add).
    N, H, W = 2, 16, 16
    C_half = 2
    CIN = 2 * C_half
    COUT = CIN

    key = jax.random.PRNGKey(0)
    k_x1, k_x2, k_w1, k_b1, k_w2, k_b2 = jax.random.split(key, 6)

    x1 = jax.random.normal(k_x1, (N, C_half, H, W), jnp.float32)
    x2 = jax.random.normal(k_x2, (N, C_half, H, W), jnp.float32)

    w1 = jax.random.normal(k_w1, (COUT, CIN, K, K), jnp.float32) * 0.1
    b1 = jax.random.normal(k_b1, (COUT,), jnp.float32) * 0.1
    w2 = jax.random.normal(k_w2, (COUT, COUT, K, K), jnp.float32) * 0.1
    b2 = jax.random.normal(k_b2, (COUT,), jnp.float32) * 0.1

    out = jax.block_until_ready(decode_nodown(x1, x2, w1, b1, w2, b2))
    ref = jax.block_until_ready(reference(x1, x2, w1, b1, w2, b2))

    assert out.shape == (N, COUT, H, W)
    err = float(jnp.max(jnp.abs(out - ref)))
    assert err < 1e-4, f"mismatch vs reference: {err}"

    print("KERNEL_OK")
</pallas_src>

<mosaic_0001>
module attributes {stable_mosaic.version = 11 : i64} {
  func.func @_decode_nodown_kernel(%arg0: i32, %arg1: memref<1x2x256xf32, #tpu.memory_space<vmem>>, %arg2: memref<1x2x256xf32, #tpu.memory_space<vmem>>, %arg3: memref<9x4x4xf32, #tpu.memory_space<vmem>>, %arg4: memref<4x1xf32, #tpu.memory_space<vmem>>, %arg5: memref<9x4x4xf32, #tpu.memory_space<vmem>>, %arg6: memref<4x1xf32, #tpu.memory_space<vmem>>, %arg7: memref<2x256xf32, #tpu.memory_space<vmem>>, %arg8: memref<1x4x256xf32, #tpu.memory_space<vmem>>) attributes {dimension_semantics = [#tpu.dimension_semantics<parallel>], iteration_bounds = array<i64: 2>, scalar_prefetch = 0 : i64, scratch_operands = 0 : i64, tpu.core_type = #tpu.core_type<tc>, window_params = [{transform_indices = @transform_0, window_bounds = array<i64: 1, 2, 256>}, {transform_indices = @transform_1, window_bounds = array<i64: 1, 2, 256>}, {pipeline_mode = #tpu.pipeline_mode<synchronous>, transform_indices = @transform_2, window_bounds = array<i64: 9, 4, 4>}, {pipeline_mode = #tpu.pipeline_mode<synchronous>, transform_indices = @transform_3, window_bounds = array<i64: 4, 1>}, {pipeline_mode = #tpu.pipeline_mode<synchronous>, transform_indices = @transform_4, window_bounds = array<i64: 9, 4, 4>}, {pipeline_mode = #tpu.pipeline_mode<synchronous>, transform_indices = @transform_5, window_bounds = array<i64: 4, 1>}, {pipeline_mode = #tpu.pipeline_mode<synchronous>, transform_indices = @transform_6, window_bounds = array<i64: 2, 256>}, {transform_indices = @transform_7, window_bounds = array<i64: 1, 4, 256>}]} {
    %c0 = arith.constant 0 : index
    %c0_0 = arith.constant 0 : index
    %c0_1 = arith.constant 0 : index
    %0 = vector.load %arg1[%c0, %c0_0, %c0_1] : memref<1x2x256xf32, #tpu.memory_space<vmem>>, vector<1x2x256xf32>
    %1 = vector.shape_cast %0 : vector<1x2x256xf32> to vector<2x256xf32>
    %c0_2 = arith.constant 0 : index
    %c0_3 = arith.constant 0 : index
    %c0_4 = arith.constant 0 : index
    %2 = vector.load %arg2[%c0_2, %c0_3, %c0_4] : memref<1x2x256xf32, #tpu.memory_space<vmem>>, vector<1x2x256xf32>
    %3 = vector.shape_cast %2 : vector<1x2x256xf32> to vector<2x256xf32>
    %4 = tpu.concatenate %1, %3 in 0 : vector<2x256xf32>, vector<2x256xf32> -> vector<4x256xf32>
    %c0_5 = arith.constant 0 : index
    %c0_6 = arith.constant 0 : index
    %5 = vector.load %arg7[%c0_5, %c0_6] : memref<2x256xf32, #tpu.memory_space<vmem>>, vector<2x256xf32>
    %6 = vector.extract_strided_slice %5 {offsets = [0, 0], sizes = [1, 256], strides = [1, 1]} : vector<2x256xf32> to vector<1x256xf32>
    %7 = vector.extract_strided_slice %5 {offsets = [1, 0], sizes = [1, 256], strides = [1, 1]} : vector<2x256xf32> to vector<1x256xf32>
    %cst = arith.constant 0.000000e+00 : f32
    %8 = vector.broadcast %cst : f32 to vector<4x128xf32>
    %9 = tpu.concatenate %8, %4, %8 in 1 : vector<4x128xf32>, vector<4x256xf32>, vector<4x128xf32> -> vector<4x512xf32>
    %c0_7 = arith.constant 0 : index
    %c0_8 = arith.constant 0 : index
    %c0_9 = arith.constant 0 : index
    %10 = vector.load %arg3[%c0_7, %c0_8, %c0_9] : memref<9x4x4xf32, #tpu.memory_space<vmem>>, vector<9x4x4xf32>
    %cst_10 = arith.constant 0.000000e+00 : f32
    %11 = vector.broadcast %cst_10 : f32 to vector<4x256xf32>
    %12 = vector.extract_strided_slice %9 {offsets = [0, 111], sizes = [4, 256], strides = [1, 1]} : vector<4x512xf32> to vector<4x256xf32>
    %13 = vector.broadcast %6 : vector<1x256xf32> to vector<4x256xf32>
    %14 = arith.mulf %12, %13 : vector<4x256xf32>
    %15 = vector.extract_strided_slice %10 {offsets = [0, 0, 0], sizes = [1, 4, 4], strides = [1, 1, 1]} : vector<9x4x4xf32> to vector<1x4x4xf32>
    %16 = vector.shape_cast %15 : vector<1x4x4xf32> to vector<4x4xf32>
    %17 = vector.extract_strided_slice %16 {offsets = [0, 0], sizes = [4, 1], strides = [1, 1]} : vector<4x4xf32> to vector<4x1xf32>
    %18 = vector.extract_strided_slice %14 {offsets = [0, 0], sizes = [1, 256], strides = [1, 1]} : vector<4x256xf32> to vector<1x256xf32>
    %19 = vector.broadcast %17 : vector<4x1xf32> to vector<4x256xf32>
    %20 = vector.broadcast %18 : vector<1x256xf32> to vector<4x256xf32>
    %21 = arith.mulf %19, %20 : vector<4x256xf32>
    %22 = arith.addf %11, %21 : vector<4x256xf32>
    %23 = vector.extract_strided_slice %16 {offsets = [0, 1], sizes = [4, 1], strides = [1, 1]} : vector<4x4xf32> to vector<4x1xf32>
    %24 = vector.extract_strided_slice %14 {offsets = [1, 0], sizes = [1, 256], strides = [1, 1]} : vector<4x256xf32> to vector<1x256xf32>
    %25 = vector.broadcast %23 : vector<4x1xf32> to vector<4x256xf32>
    %26 = vector.broadcast %24 : vector<1x256xf32> to vector<4x256xf32>
    %27 = arith.mulf %25, %26 : vector<4x256xf32>
    %28 = arith.addf %22, %27 : vector<4x256xf32>
    %29 = vector.extract_strided_slice %16 {offsets = [0, 2], sizes = [4, 1], strides = [1, 1]} : vector<4x4xf32> to vector<4x1xf32>
    %30 = vector.extract_strided_slice %14 {offsets = [2, 0], sizes = [1, 256], strides = [1, 1]} : vector<4x256xf32> to vector<1x256xf32>
    %31 = vector.broadcast %29 : vector<4x1xf32> to vector<4x256xf32>
    %32 = vector.broadcast %30 : vector<1x256xf32> to vector<4x256xf32>
    %33 = arith.mulf %31, %32 : vector<4x256xf32>
    %34 = arith.addf %28, %33 : vector<4x256xf32>
    %35 = vector.extract_strided_slice %16 {offsets = [0, 3], sizes = [4, 1], strides = [1, 1]} : vector<4x4xf32> to vector<4x1xf32>
    %36 = vector.extract_strided_slice %14 {offsets = [3, 0], sizes = [1, 256], strides = [1, 1]} : vector<4x256xf32> to vector<1x256xf32>
    %37 = vector.broadcast %35 : vector<4x1xf32> to vector<4x256xf32>
    %38 = vector.broadcast %36 : vector<1x256xf32> to vector<4x256xf32>
    %39 = arith.mulf %37, %38 : vector<4x256xf32>
    %40 = arith.addf %34, %39 : vector<4x256xf32>
    %41 = vector.extract_strided_slice %9 {offsets = [0, 112], sizes = [4, 256], strides = [1, 1]} : vector<4x512xf32> to vector<4x256xf32>
    %42 = vector.extract_strided_slice %10 {offsets = [1, 0, 0], sizes = [1, 4, 4], strides = [1, 1, 1]} : vector<9x4x4xf32> to vector<1x4x4xf32>
    %43 = vector.shape_cast %42 : vector<1x4x4xf32> to vector<4x4xf32>
    %44 = vector.extract_strided_slice %43 {offsets = [0, 0], sizes = [4, 1], strides = [1, 1]} : vector<4x4xf32> to vector<4x1xf32>
    %45 = vector.extract_strided_slice %41 {offsets = [0, 0], sizes = [1, 256], strides = [1, 1]} : vector<4x256xf32> to vector<1x256xf32>
    %46 = vector.broadcast %44 : vector<4x1xf32> to vector<4x256xf32>
    %47 = vector.broadcast %45 : vector<1x256xf32> to vector<4x256xf32>
    %48 = arith.mulf %46, %47 : vector<4x256xf32>
    %49 = arith.addf %40, %48 : vector<4x256xf32>
    %50 = vector.extract_strided_slice %43 {offsets = [0, 1], sizes = [4, 1], strides = [1, 1]} : vector<4x4xf32> to vector<4x1xf32>
    %51 = vector.extract_strided_slice %41 {offsets = [1, 0], sizes = [1, 256], strides = [1, 1]} : vector<4x256xf32> to vector<1x256xf32>
    %52 = vector.broadcast %50 : vector<4x1xf32> to vector<4x256xf32>
    %53 = vector.broadcast %51 : vector<1x256xf32> to vector<4x256xf32>
    %54 = arith.mulf %52, %53 : vector<4x256xf32>
    %55 = arith.addf %49, %54 : vector<4x256xf32>
    %56 = vector.extract_strided_slice %43 {offsets = [0, 2], sizes = [4, 1], strides = [1, 1]} : vector<4x4xf32> to vector<4x1xf32>
    %57 = vector.extract_strided_slice %41 {offsets = [2, 0], sizes = [1, 256], strides = [1, 1]} : vector<4x256xf32> to vector<1x256xf32>
    %58 = vector.broadcast %56 : vector<4x1xf32> to vector<4x256xf32>
    %59 = vector.broadcast %57 : vector<1x256xf32> to vector<4x256xf32>
    %60 = arith.mulf %58, %59 : vector<4x256xf32>
    %61 = arith.addf %55, %60 : vector<4x256xf32>
    %62 = vector.extract_strided_slice %43 {offsets = [0, 3], sizes = [4, 1], strides = [1, 1]} : vector<4x4xf32> to vector<4x1xf32>
    %63 = vector.extract_strided_slice %41 {offsets = [3, 0], sizes = [1, 256], strides = [1, 1]} : vector<4x256xf32> to vector<1x256xf32>
    %64 = vector.broadcast %62 : vector<4x1xf32> to vector<4x256xf32>
    %65 = vector.broadcast %63 : vector<1x256xf32> to vector<4x256xf32>
    %66 = arith.mulf %64, %65 : vector<4x256xf32>
    %67 = arith.addf %61, %66 : vector<4x256xf32>
    %68 = vector.extract_strided_slice %9 {offsets = [0, 113], sizes = [4, 256], strides = [1, 1]} : vector<4x512xf32> to vector<4x256xf32>
    %69 = vector.broadcast %7 : vector<1x256xf32> to vector<4x256xf32>
    %70 = arith.mulf %68, %69 : vector<4x256xf32>
    %71 = vector.extract_strided_slice %10 {offsets = [2, 0, 0], sizes = [1, 4, 4], strides = [1, 1, 1]} : vector<9x4x4xf32> to vector<1x4x4xf32>
    %72 = vector.shape_cast %71 : vector<1x4x4xf32> to vector<4x4xf32>
    %73 = vector.extract_strided_slice %72 {offsets = [0, 0], sizes = [4, 1], strides = [1, 1]} : vector<4x4xf32> to vector<4x1xf32>
    %74 = vector.extract_strided_slice %70 {offsets = [0, 0], sizes = [1, 256], strides = [1, 1]} : vector<4x256xf32> to vector<1x256xf32>
    %75 = vector.broadcast %73 : vector<4x1xf32> to vector<4x256xf32>
    %76 = vector.broadcast %74 : vector<1x256xf32> to vector<4x256xf32>
    %77 = arith.mulf %75, %76 : vector<4x256xf32>
    %78 = arith.addf %67, %77 : vector<4x256xf32>
    %79 = vector.extract_strided_slice %72 {offsets = [0, 1], sizes = [4, 1], strides = [1, 1]} : vector<4x4xf32> to vector<4x1xf32>
    %80 = vector.extract_strided_slice %70 {offsets = [1, 0], sizes = [1, 256], strides = [1, 1]} : vector<4x256xf32> to vector<1x256xf32>
    %81 = vector.broadcast %79 : vector<4x1xf32> to vector<4x256xf32>
    %82 = vector.broadcast %80 : vector<1x256xf32> to vector<4x256xf32>
    %83 = arith.mulf %81, %82 : vector<4x256xf32>
    %84 = arith.addf %78, %83 : vector<4x256xf32>
    %85 = vector.extract_strided_slice %72 {offsets = [0, 2], sizes = [4, 1], strides = [1, 1]} : vector<4x4xf32> to vector<4x1xf32>
    %86 = vector.extract_strided_slice %70 {offsets = [2, 0], sizes = [1, 256], strides = [1, 1]} : vector<4x256xf32> to vector<1x256xf32>
    %87 = vector.broadcast %85 : vector<4x1xf32> to vector<4x256xf32>
    %88 = vector.broadcast %86 : vector<1x256xf32> to vector<4x256xf32>
    %89 = arith.mulf %87, %88 : vector<4x256xf32>
    %90 = arith.addf %84, %89 : vector<4x256xf32>
    %91 = vector.extract_strided_slice %72 {offsets = [0, 3], sizes = [4, 1], strides = [1, 1]} : vector<4x4xf32> to vector<4x1xf32>
    %92 = vector.extract_strided_slice %70 {offsets = [3, 0], sizes = [1, 256], strides = [1, 1]} : vector<4x256xf32> to vector<1x256xf32>
    %93 = vector.broadcast %91 : vector<4x1xf32> to vector<4x256xf32>
    %94 = vector.broadcast %92 : vector<1x256xf32> to vector<4x256xf32>
    %95 = arith.mulf %93, %94 : vector<4x256xf32>
    %96 = arith.addf %90, %95 : vector<4x256xf32>
    %97 = vector.extract_strided_slice %9 {offsets = [0, 127], sizes = [4, 256], strides = [1, 1]} : vector<4x512xf32> to vector<4x256xf32>
    %98 = vector.broadcast %6 : vector<1x256xf32> to vector<4x256xf32>
    %99 = arith.mulf %97, %98 : vector<4x256xf32>
    %100 = vector.extract_strided_slice %10 {offsets = [3, 0, 0], sizes = [1, 4, 4], strides = [1, 1, 1]} : vector<9x4x4xf32> to vector<1x4x4xf32>
    %101 = vector.shape_cast %100 : vector<1x4x4xf32> to vector<4x4xf32>
    %102 = vector.extract_strided_slice %101 {offsets = [0, 0], sizes = [4, 1], strides = [1, 1]} : vector<4x4xf32> to vector<4x1xf32>
    %103 = vector.extract_strided_slice %99 {offsets = [0, 0], sizes = [1, 256], strides = [1, 1]} : vector<4x256xf32> to vector<1x256xf32>
    %104 = vector.broadcast %102 : vector<4x1xf32> to vector<4x256xf32>
    %105 = vector.broadcast %103 : vector<1x256xf32> to vector<4x256xf32>
    %106 = arith.mulf %104, %105 : vector<4x256xf32>
    %107 = arith.addf %96, %106 : vector<4x256xf32>
    %108 = vector.extract_strided_slice %101 {offsets = [0, 1], sizes = [4, 1], strides = [1, 1]} : vector<4x4xf32> to vector<4x1xf32>
    %109 = vector.extract_strided_slice %99 {offsets = [1, 0], sizes = [1, 256], strides = [1, 1]} : vector<4x256xf32> to vector<1x256xf32>
    %110 = vector.broadcast %108 : vector<4x1xf32> to vector<4x256xf32>
    %111 = vector.broadcast %109 : vector<1x256xf32> to vector<4x256xf32>
    %112 = arith.mulf %110, %111 : vector<4x256xf32>
    %113 = arith.addf %107, %112 : vector<4x256xf32>
    %114 = vector.extract_strided_slice %101 {offsets = [0, 2], sizes = [4, 1], strides = [1, 1]} : vector<4x4xf32> to vector<4x1xf32>
    %115 = vector.extract_strided_slice %99 {offsets = [2, 0], sizes = [1, 256], strides = [1, 1]} : vector<4x256xf32> to vector<1x256xf32>
    %116 = vector.broadcast %114 : vector<4x1xf32> to vector<4x256xf32>
    %117 = vector.broadcast %115 : vector<1x256xf32> to vector<4x256xf32>
    %118 = arith.mulf %116, %117 : vector<4x256xf32>
    %119 = arith.addf %113, %118 : vector<4x256xf32>
    %120 = vector.extract_strided_slice %101 {offsets = [0, 3], sizes = [4, 1], strides = [1, 1]} : vector<4x4xf32> to vector<4x1xf32>
    %121 = vector.extract_strided_slice %99 {offsets = [3, 0], sizes = [1, 256], strides = [1, 1]} : vector<4x256xf32> to vector<1x256xf32>
    %122 = vector.broadcast %120 : vector<4x1xf32> to vector<4x256xf32>
    %123 = vector.broadcast %121 : vector<1x256xf32> to vector<4x256xf32>
    %124 = arith.mulf %122, %123 : vector<4x256xf32>
    %125 = arith.addf %119, %124 : vector<4x256xf32>
    %126 = vector.extract_strided_slice %10 {offsets = [4, 0, 0], sizes = [1, 4, 4], strides = [1, 1, 1]} : vector<9x4x4xf32> to vector<1x4x4xf32>
    %127 = vector.shape_cast %126 : vector<1x4x4xf32> to vector<4x4xf32>
    %128 = vector.extract_strided_slice %127 {offsets = [0, 0], sizes = [4, 1], strides = [1, 1]} : vector<4x4xf32> to vector<4x1xf32>
    %129 = vector.extract_strided_slice %4 {offsets = [0, 0], sizes = [1, 256], strides = [1, 1]} : vector<4x256xf32> to vector<1x256xf32>
    %130 = vector.broadcast %128 : vector<4x1xf32> to vector<4x256xf32>
    %131 = vector.broadcast %129 : vector<1x256xf32> to vector<4x256xf32>
    %132 = arith.mulf %130, %131 : vector<4x256xf32>
    %133 = arith.addf %125, %132 : vector<4x256xf32>
    %134 = vector.extract_strided_slice %127 {offsets = [0, 1], sizes = [4, 1], strides = [1, 1]} : vector<4x4xf32> to vector<4x1xf32>
    %135 = vector.extract_strided_slice %4 {offsets = [1, 0], sizes = [1, 256], strides = [1, 1]} : vector<4x256xf32> to vector<1x256xf32>
    %136 = vector.broadcast %134 : vector<4x1xf32> to vector<4x256xf32>
    %137 = vector.broadcast %135 : vector<1x256xf32> to vector<4x256xf32>
    %138 = arith.mulf %136, %137 : vector<4x256xf32>
    %139 = arith.addf %133, %138 : vector<4x256xf32>
    %140 = vector.extract_strided_slice %127 {offsets = [0, 2], sizes = [4, 1], strides = [1, 1]} : vector<4x4xf32> to vector<4x1xf32>
    %141 = vector.extract_strided_slice %4 {offsets = [2, 0], sizes = [1, 256], strides = [1, 1]} : vector<4x256xf32> to vector<1x256xf32>
    %142 = vector.broadcast %140 : vector<4x1xf32> to vector<4x256xf32>
    %143 = vector.broadcast %141 : vector<1x256xf32> to vector<4x256xf32>
    %144 = arith.mulf %142, %143 : vector<4x256xf32>
    %145 = arith.addf %139, %144 : vector<4x256xf32>
    %146 = vector.extract_strided_slice %127 {offsets = [0, 3], sizes = [4, 1], strides = [1, 1]} : vector<4x4xf32> to vector<4x1xf32>
    %147 = vector.extract_strided_slice %4 {offsets = [3, 0], sizes = [1, 256], strides = [1, 1]} : vector<4x256xf32> to vector<1x256xf32>
    %148 = vector.broadcast %146 : vector<4x1xf32> to vector<4x256xf32>
    %149 = vector.broadcast %147 : vector<1x256xf32> to vector<4x256xf32>
    %150 = arith.mulf %148, %149 : vector<4x256xf32>
    %151 = arith.addf %145, %150 : vector<4x256xf32>
    %152 = vector.extract_strided_slice %9 {offsets = [0, 129], sizes = [4, 256], strides = [1, 1]} : vector<4x512xf32> to vector<4x256xf32>
    %153 = vector.broadcast %7 : vector<1x256xf32> to vector<4x256xf32>
    %154 = arith.mulf %152, %153 : vector<4x256xf32>
    %155 = vector.extract_strided_slice %10 {offsets = [5, 0, 0], sizes = [1, 4, 4], strides = [1, 1, 1]} : vector<9x4x4xf32> to vector<1x4x4xf32>
    %156 = vector.shape_cast %155 : vector<1x4x4xf32> to vector<4x4xf32>
    %157 = vector.extract_strided_slice %156 {offsets = [0, 0], sizes = [4, 1], strides = [1, 1]} : vector<4x4xf32> to vector<4x1xf32>
    %158 = vector.extract_strided_slice %154 {offsets = [0, 0], sizes = [1, 256], strides = [1, 1]} : vector<4x256xf32> to vector<1x256xf32>
    %159 = vector.broadcast %157 : vector<4x1xf32> to vector<4x256xf32>
    %160 = vector.broadcast %158 : vector<1x256xf32> to vector<4x256xf32>
    %161 = arith.mulf %159, %160 : vector<4x256xf32>
    %162 = arith.addf %151, %161 : vector<4x256xf32>
    %163 = vector.extract_strided_slice %156 {offsets = [0, 1], sizes = [4, 1], strides = [1, 1]} : vector<4x4xf32> to vector<4x1xf32>
    %164 = vector.extract_strided_slice %154 {offsets = [1, 0], sizes = [1, 256], strides = [1, 1]} : vector<4x256xf32> to vector<1x256xf32>
    %165 = vector.broadcast %163 : vector<4x1xf32> to vector<4x256xf32>
    %166 = vector.broadcast %164 : vector<1x256xf32> to vector<4x256xf32>
    %167 = arith.mulf %165, %166 : vector<4x256xf32>
    %168 = arith.addf %162, %167 : vector<4x256xf32>
    %169 = vector.extract_strided_slice %156 {offsets = [0, 2], sizes = [4, 1], strides = [1, 1]} : vector<4x4xf32> to vector<4x1xf32>
    %170 = vector.extract_strided_slice %154 {offsets = [2, 0], sizes = [1, 256], strides = [1, 1]} : vector<4x256xf32> to vector<1x256xf32>
    %171 = vector.broadcast %169 : vector<4x1xf32> to vector<4x256xf32>
    %172 = vector.broadcast %170 : vector<1x256xf32> to vector<4x256xf32>
    %173 = arith.mulf %171, %172 : vector<4x256xf32>
    %174 = arith.addf %168, %173 : vector<4x256xf32>
    %175 = vector.extract_strided_slice %156 {offsets = [0, 3], sizes = [4, 1], strides = [1, 1]} : vector<4x4xf32> to vector<4x1xf32>
    %176 = vector.extract_strided_slice %154 {offsets = [3, 0], sizes = [1, 256], strides = [1, 1]} : vector<4x256xf32> to vector<1x256xf32>
    %177 = vector.broadcast %175 : vector<4x1xf32> to vector<4x256xf32>
    %178 = vector.broadcast %176 : vector<1x256xf32> to vector<4x256xf32>
    %179 = arith.mulf %177, %178 : vector<4x256xf32>
    %180 = arith.addf %174, %179 : vector<4x256xf32>
    %181 = vector.extract_strided_slice %9 {offsets = [0, 143], sizes = [4, 256], strides = [1, 1]} : vector<4x512xf32> to vector<4x256xf32>
    %182 = vector.broadcast %6 : vector<1x256xf32> to vector<4x256xf32>
    %183 = arith.mulf %181, %182 : vector<4x256xf32>
    %184 = vector.extract_strided_slice %10 {offsets = [6, 0, 0], sizes = [1, 4, 4], strides = [1, 1, 1]} : vector<9x4x4xf32> to vector<1x4x4xf32>
    %185 = vector.shape_cast %184 : vector<1x4x4xf32> to vector<4x4xf32>
    %186 = vector.extract_strided_slice %185 {offsets = [0, 0], sizes = [4, 1], strides = [1, 1]} : vector<4x4xf32> to vector<4x1xf32>
    %187 = vector.extract_strided_slice %183 {offsets = [0, 0], sizes = [1, 256], strides = [1, 1]} : vector<4x256xf32> to vector<1x256xf32>
    %188 = vector.broadcast %186 : vector<4x1xf32> to vector<4x256xf32>
    %189 = vector.broadcast %187 : vector<1x256xf32> to vector<4x256xf32>
    %190 = arith.mulf %188, %189 : vector<4x256xf32>
    %191 = arith.addf %180, %190 : vector<4x256xf32>
    %192 = vector.extract_strided_slice %185 {offsets = [0, 1], sizes = [4, 1], strides = [1, 1]} : vector<4x4xf32> to vector<4x1xf32>
    %193 = vector.extract_strided_slice %183 {offsets = [1, 0], sizes = [1, 256], strides = [1, 1]} : vector<4x256xf32> to vector<1x256xf32>
    %194 = vector.broadcast %192 : vector<4x1xf32> to vector<4x256xf32>
    %195 = vector.broadcast %193 : vector<1x256xf32> to vector<4x256xf32>
    %196 = arith.mulf %194, %195 : vector<4x256xf32>
    %197 = arith.addf %191, %196 : vector<4x256xf32>
    %198 = vector.extract_strided_slice %185 {offsets = [0, 2], sizes = [4, 1], strides = [1, 1]} : vector<4x4xf32> to vector<4x1xf32>
    %199 = vector.extract_strided_slice %183 {offsets = [2, 0], sizes = [1, 256], strides = [1, 1]} : vector<4x256xf32> to vector<1x256xf32>
    %200 = vector.broadcast %198 : vector<4x1xf32> to vector<4x256xf32>
    %201 = vector.broadcast %199 : vector<1x256xf32> to vector<4x256xf32>
    %202 = arith.mulf %200, %201 : vector<4x256xf32>
    %203 = arith.addf %197, %202 : vector<4x256xf32>
    %204 = vector.extract_strided_slice %185 {offsets = [0, 3], sizes = [4, 1], strides = [1, 1]} : vector<4x4xf32> to vector<4x1xf32>
    %205 = vector.extract_strided_slice %183 {offsets = [3, 0], sizes = [1, 256], strides = [1, 1]} : vector<4x256xf32> to vector<1x256xf32>
    %206 = vector.broadcast %204 : vector<4x1xf32> to vector<4x256xf32>
    %207 = vector.broadcast %205 : vector<1x256xf32> to vector<4x256xf32>
    %208 = arith.mulf %206, %207 : vector<4x256xf32>
    %209 = arith.addf %203, %208 : vector<4x256xf32>
    %210 = vector.extract_strided_slice %9 {offsets = [0, 144], sizes = [4, 256], strides = [1, 1]} : vector<4x512xf32> to vector<4x256xf32>
    %211 = vector.extract_strided_slice %10 {offsets = [7, 0, 0], sizes = [1, 4, 4], strides = [1, 1, 1]} : vector<9x4x4xf32> to vector<1x4x4xf32>
    %212 = vector.shape_cast %211 : vector<1x4x4xf32> to vector<4x4xf32>
    %213 = vector.extract_strided_slice %212 {offsets = [0, 0], sizes = [4, 1], strides = [1, 1]} : vector<4x4xf32> to vector<4x1xf32>
    %214 = vector.extract_strided_slice %210 {offsets = [0, 0], sizes = [1, 256], strides = [1, 1]} : vector<4x256xf32> to vector<1x256xf32>
    %215 = vector.broadcast %213 : vector<4x1xf32> to vector<4x256xf32>
    %216 = vector.broadcast %214 : vector<1x256xf32> to vector<4x256xf32>
    %217 = arith.mulf %215, %216 : vector<4x256xf32>
    %218 = arith.addf %209, %217 : vector<4x256xf32>
    %219 = vector.extract_strided_slice %212 {offsets = [0, 1], sizes = [4, 1], strides = [1, 1]} : vector<4x4xf32> to vector<4x1xf32>
    %220 = vector.extract_strided_slice %210 {offsets = [1, 0], sizes = [1, 256], strides = [1, 1]} : vector<4x256xf32> to vector<1x256xf32>
    %221 = vector.broadcast %219 : vector<4x1xf32> to vector<4x256xf32>
    %222 = vector.broadcast %220 : vector<1x256xf32> to vector<4x256xf32>
    %223 = arith.mulf %221, %222 : vector<4x256xf32>
    %224 = arith.addf %218, %223 : vector<4x256xf32>
    %225 = vector.extract_strided_slice %212 {offsets = [0, 2], sizes = [4, 1], strides = [1, 1]} : vector<4x4xf32> to vector<4x1xf32>
    %226 = vector.extract_strided_slice %210 {offsets = [2, 0], sizes = [1, 256], strides = [1, 1]} : vector<4x256xf32> to vector<1x256xf32>
    %227 = vector.broadcast %225 : vector<4x1xf32> to vector<4x256xf32>
    %228 = vector.broadcast %226 : vector<1x256xf32> to vector<4x256xf32>
    %229 = arith.mulf %227, %228 : vector<4x256xf32>
    %230 = arith.addf %224, %229 : vector<4x256xf32>
    %231 = vector.extract_strided_slice %212 {offsets = [0, 3], sizes = [4, 1], strides = [1, 1]} : vector<4x4xf32> to vector<4x1xf32>
    %232 = vector.extract_strided_slice %210 {offsets = [3, 0], sizes = [1, 256], strides = [1, 1]} : vector<4x256xf32> to vector<1x256xf32>
    %233 = vector.broadcast %231 : vector<4x1xf32> to vector<4x256xf32>
    %234 = vector.broadcast %232 : vector<1x256xf32> to vector<4x256xf32>
    %235 = arith.mulf %233, %234 : vector<4x256xf32>
    %236 = arith.addf %230, %235 : vector<4x256xf32>
    %237 = vector.extract_strided_slice %9 {offsets = [0, 145], sizes = [4, 256], strides = [1, 1]} : vector<4x512xf32> to vector<4x256xf32>
    %238 = vector.broadcast %7 : vector<1x256xf32> to vector<4x256xf32>
    %239 = arith.mulf %237, %238 : vector<4x256xf32>
    %240 = vector.extract_strided_slice %10 {offsets = [8, 0, 0], sizes = [1, 4, 4], strides = [1, 1, 1]} : vector<9x4x4xf32> to vector<1x4x4xf32>
    %241 = vector.shape_cast %240 : vector<1x4x4xf32> to vector<4x4xf32>
    %242 = vector.extract_strided_slice %241 {offsets = [0, 0], sizes = [4, 1], strides = [1, 1]} : vector<4x4xf32> to vector<4x1xf32>
    %243 = vector.extract_strided_slice %239 {offsets = [0, 0], sizes = [1, 256], strides = [1, 1]} : vector<4x256xf32> to vector<1x256xf32>
    %244 = vector.broadcast %242 : vector<4x1xf32> to vector<4x256xf32>
    %245 = vector.broadcast %243 : vector<1x256xf32> to vector<4x256xf32>
    %246 = arith.mulf %244, %245 : vector<4x256xf32>
    %247 = arith.addf %236, %246 : vector<4x256xf32>
    %248 = vector.extract_strided_slice %241 {offsets = [0, 1], sizes = [4, 1], strides = [1, 1]} : vector<4x4xf32> to vector<4x1xf32>
    %249 = vector.extract_strided_slice %239 {offsets = [1, 0], sizes = [1, 256], strides = [1, 1]} : vector<4x256xf32> to vector<1x256xf32>
    %250 = vector.broadcast %248 : vector<4x1xf32> to vector<4x256xf32>
    %251 = vector.broadcast %249 : vector<1x256xf32> to vector<4x256xf32>
    %252 = arith.mulf %250, %251 : vector<4x256xf32>
    %253 = arith.addf %247, %252 : vector<4x256xf32>
    %254 = vector.extract_strided_slice %241 {offsets = [0, 2], sizes = [4, 1], strides = [1, 1]} : vector<4x4xf32> to vector<4x1xf32>
    %255 = vector.extract_strided_slice %239 {offsets = [2, 0], sizes = [1, 256], strides = [1, 1]} : vector<4x256xf32> to vector<1x256xf32>
    %256 = vector.broadcast %254 : vector<4x1xf32> to vector<4x256xf32>
    %257 = vector.broadcast %255 : vector<1x256xf32> to vector<4x256xf32>
    %258 = arith.mulf %256, %257 : vector<4x256xf32>
    %259 = arith.addf %253, %258 : vector<4x256xf32>
    %260 = vector.extract_strided_slice %241 {offsets = [0, 3], sizes = [4, 1], strides = [1, 1]} : vector<4x4xf32> to vector<4x1xf32>
    %261 = vector.extract_strided_slice %239 {offsets = [3, 0], sizes = [1, 256], strides = [1, 1]} : vector<4x256xf32> to vector<1x256xf32>
    %262 = vector.broadcast %260 : vector<4x1xf32> to vector<4x256xf32>
    %263 = vector.broadcast %261 : vector<1x256xf32> to vector<4x256xf32>
    %264 = arith.mulf %262, %263 : vector<4x256xf32>
    %265 = arith.addf %259, %264 : vector<4x256xf32>
    %c0_11 = arith.constant 0 : index
    %c0_12 = arith.constant 0 : index
    %266 = vector.load %arg4[%c0_11, %c0_12] : memref<4x1xf32, #tpu.memory_space<vmem>>, vector<4x1xf32>
    %267 = vector.broadcast %266 : vector<4x1xf32> to vector<4x256xf32>
    %268 = arith.addf %265, %267 : vector<4x256xf32>
    %cst_13 = arith.constant 0.000000e+00 : f32
    %269 = vector.broadcast %cst_13 : f32 to vector<4x256xf32>
    %270 = arith.cmpf ogt, %268, %269 : vector<4x256xf32>
    %cst_14 = arith.constant 0.000000e+00 : f32
    %271 = vector.broadcast %cst_14 : f32 to vector<4x256xf32>
    %272 = arith.minimumf %268, %271 : vector<4x256xf32>
    %273 = math.exp %272 : vector<4x256xf32>
    %cst_15 = arith.constant 1.000000e+00 : f32
    %274 = vector.broadcast %cst_15 : f32 to vector<4x256xf32>
    %275 = arith.subf %273, %274 : vector<4x256xf32>
    %276 = arith.select %270, %268, %275 : vector<4x256xi1>, vector<4x256xf32>
    %cst_16 = arith.constant 0.000000e+00 : f32
    %277 = vector.broadcast %cst_16 : f32 to vector<4x128xf32>
    %278 = tpu.concatenate %277, %276, %277 in 1 : vector<4x128xf32>, vector<4x256xf32>, vector<4x128xf32> -> vector<4x512xf32>
    %c0_17 = arith.constant 0 : index
    %c0_18 = arith.constant 0 : index
    %c0_19 = arith.constant 0 : index
    %279 = vector.load %arg5[%c0_17, %c0_18, %c0_19] : memref<9x4x4xf32, #tpu.memory_space<vmem>>, vector<9x4x4xf32>
    %cst_20 = arith.constant 0.000000e+00 : f32
    %280 = vector.broadcast %cst_20 : f32 to vector<4x256xf32>
    %281 = vector.extract_strided_slice %278 {offsets = [0, 111], sizes = [4, 256], strides = [1, 1]} : vector<4x512xf32> to vector<4x256xf32>
    %282 = vector.broadcast %6 : vector<1x256xf32> to vector<4x256xf32>
    %283 = arith.mulf %281, %282 : vector<4x256xf32>
    %284 = vector.extract_strided_slice %279 {offsets = [0, 0, 0], sizes = [1, 4, 4], strides = [1, 1, 1]} : vector<9x4x4xf32> to vector<1x4x4xf32>
    %285 = vector.shape_cast %284 : vector<1x4x4xf32> to vector<4x4xf32>
    %286 = vector.extract_strided_slice %285 {offsets = [0, 0], sizes = [4, 1], strides = [1, 1]} : vector<4x4xf32> to vector<4x1xf32>
    %287 = vector.extract_strided_slice %283 {offsets = [0, 0], sizes = [1, 256], strides = [1, 1]} : vector<4x256xf32> to vector<1x256xf32>
    %288 = vector.broadcast %286 : vector<4x1xf32> to vector<4x256xf32>
    %289 = vector.broadcast %287 : vector<1x256xf32> to vector<4x256xf32>
    %290 = arith.mulf %288, %289 : vector<4x256xf32>
    %291 = arith.addf %280, %290 : vector<4x256xf32>
    %292 = vector.extract_strided_slice %285 {offsets = [0, 1], sizes = [4, 1], strides = [1, 1]} : vector<4x4xf32> to vector<4x1xf32>
    %293 = vector.extract_strided_slice %283 {offsets = [1, 0], sizes = [1, 256], strides = [1, 1]} : vector<4x256xf32> to vector<1x256xf32>
    %294 = vector.broadcast %292 : vector<4x1xf32> to vector<4x256xf32>
    %295 = vector.broadcast %293 : vector<1x256xf32> to vector<4x256xf32>
    %296 = arith.mulf %294, %295 : vector<4x256xf32>
    %297 = arith.addf %291, %296 : vector<4x256xf32>
    %298 = vector.extract_strided_slice %285 {offsets = [0, 2], sizes = [4, 1], strides = [1, 1]} : vector<4x4xf32> to vector<4x1xf32>
    %299 = vector.extract_strided_slice %283 {offsets = [2, 0], sizes = [1, 256], strides = [1, 1]} : vector<4x256xf32> to vector<1x256xf32>
    %300 = vector.broadcast %298 : vector<4x1xf32> to vector<4x256xf32>
    %301 = vector.broadcast %299 : vector<1x256xf32> to vector<4x256xf32>
    %302 = arith.mulf %300, %301 : vector<4x256xf32>
    %303 = arith.addf %297, %302 : vector<4x256xf32>
    %304 = vector.extract_strided_slice %285 {offsets = [0, 3], sizes = [4, 1], strides = [1, 1]} : vector<4x4xf32> to vector<4x1xf32>
    %305 = vector.extract_strided_slice %283 {offsets = [3, 0], sizes = [1, 256], strides = [1, 1]} : vector<4x256xf32> to vector<1x256xf32>
    %306 = vector.broadcast %304 : vector<4x1xf32> to vector<4x256xf32>
    %307 = vector.broadcast %305 : vector<1x256xf32> to vector<4x256xf32>
    %308 = arith.mulf %306, %307 : vector<4x256xf32>
    %309 = arith.addf %303, %308 : vector<4x256xf32>
    %310 = vector.extract_strided_slice %278 {offsets = [0, 112], sizes = [4, 256], strides = [1, 1]} : vector<4x512xf32> to vector<4x256xf32>
    %311 = vector.extract_strided_slice %279 {offsets = [1, 0, 0], sizes = [1, 4, 4], strides = [1, 1, 1]} : vector<9x4x4xf32> to vector<1x4x4xf32>
    %312 = vector.shape_cast %311 : vector<1x4x4xf32> to vector<4x4xf32>
    %313 = vector.extract_strided_slice %312 {offsets = [0, 0], sizes = [4, 1], strides = [1, 1]} : vector<4x4xf32> to vector<4x1xf32>
    %314 = vector.extract_strided_slice %310 {offsets = [0, 0], sizes = [1, 256], strides = [1, 1]} : vector<4x256xf32> to vector<1x256xf32>
    %315 = vector.broadcast %313 : vector<4x1xf32> to vector<4x256xf32>
    %316 = vector.broadcast %314 : vector<1x256xf32> to vector<4x256xf32>
    %317 = arith.mulf %315, %316 : vector<4x256xf32>
    %318 = arith.addf %309, %317 : vector<4x256xf32>
    %319 = vector.extract_strided_slice %312 {offsets = [0, 1], sizes = [4, 1], strides = [1, 1]} : vector<4x4xf32> to vector<4x1xf32>
    %320 = vector.extract_strided_slice %310 {offsets = [1, 0], sizes = [1, 256], strides = [1, 1]} : vector<4x256xf32> to vector<1x256xf32>
    %321 = vector.broadcast %319 : vector<4x1xf32> to vector<4x256xf32>
    %322 = vector.broadcast %320 : vector<1x256xf32> to vector<4x256xf32>
    %323 = arith.mulf %321, %322 : vector<4x256xf32>
    %324 = arith.addf %318, %323 : vector<4x256xf32>
    %325 = vector.extract_strided_slice %312 {offsets = [0, 2], sizes = [4, 1], strides = [1, 1]} : vector<4x4xf32> to vector<4x1xf32>
    %326 = vector.extract_strided_slice %310 {offsets = [2, 0], sizes = [1, 256], strides = [1, 1]} : vector<4x256xf32> to vector<1x256xf32>
    %327 = vector.broadcast %325 : vector<4x1xf32> to vector<4x256xf32>
    %328 = vector.broadcast %326 : vector<1x256xf32> to vector<4x256xf32>
    %329 = arith.mulf %327, %328 : vector<4x256xf32>
    %330 = arith.addf %324, %329 : vector<4x256xf32>
    %331 = vector.extract_strided_slice %312 {offsets = [0, 3], sizes = [4, 1], strides = [1, 1]} : vector<4x4xf32> to vector<4x1xf32>
    %332 = vector.extract_strided_slice %310 {offsets = [3, 0], sizes = [1, 256], strides = [1, 1]} : vector<4x256xf32> to vector<1x256xf32>
    %333 = vector.broadcast %331 : vector<4x1xf32> to vector<4x256xf32>
    %334 = vector.broadcast %332 : vector<1x256xf32> to vector<4x256xf32>
    %335 = arith.mulf %333, %334 : vector<4x256xf32>
    %336 = arith.addf %330, %335 : vector<4x256xf32>
    %337 = vector.extract_strided_slice %278 {offsets = [0, 113], sizes = [4, 256], strides = [1, 1]} : vector<4x512xf32> to vector<4x256xf32>
    %338 = vector.broadcast %7 : vector<1x256xf32> to vector<4x256xf32>
    %339 = arith.mulf %337, %338 : vector<4x256xf32>
    %340 = vector.extract_strided_slice %279 {offsets = [2, 0, 0], sizes = [1, 4, 4], strides = [1, 1, 1]} : vector<9x4x4xf32> to vector<1x4x4xf32>
    %341 = vector.shape_cast %340 : vector<1x4x4xf32> to vector<4x4xf32>
    %342 = vector.extract_strided_slice %341 {offsets = [0, 0], sizes = [4, 1], strides = [1, 1]} : vector<4x4xf32> to vector<4x1xf32>
    %343 = vector.extract_strided_slice %339 {offsets = [0, 0], sizes = [1, 256], strides = [1, 1]} : vector<4x256xf32> to vector<1x256xf32>
    %344 = vector.broadcast %342 : vector<4x1xf32> to vector<4x256xf32>
    %345 = vector.broadcast %343 : vector<1x256xf32> to vector<4x256xf32>
    %346 = arith.mulf %344, %345 : vector<4x256xf32>
    %347 = arith.addf %336, %346 : vector<4x256xf32>
    %348 = vector.extract_strided_slice %341 {offsets = [0, 1], sizes = [4, 1], strides = [1, 1]} : vector<4x4xf32> to vector<4x1xf32>
    %349 = vector.extract_strided_slice %339 {offsets = [1, 0], sizes = [1, 256], strides = [1, 1]} : vector<4x256xf32> to vector<1x256xf32>
    %350 = vector.broadcast %348 : vector<4x1xf32> to vector<4x256xf32>
    %351 = vector.broadcast %349 : vector<1x256xf32> to vector<4x256xf32>
    %352 = arith.mulf %350, %351 : vector<4x256xf32>
    %353 = arith.addf %347, %352 : vector<4x256xf32>
    %354 = vector.extract_strided_slice %341 {offsets = [0, 2], sizes = [4, 1], strides = [1, 1]} : vector<4x4xf32> to vector<4x1xf32>
    %355 = vector.extract_strided_slice %339 {offsets = [2, 0], sizes = [1, 256], strides = [1, 1]} : vector<4x256xf32> to vector<1x256xf32>
    %356 = vector.broadcast %354 : vector<4x1xf32> to vector<4x256xf32>
    %357 = vector.broadcast %355 : vector<1x256xf32> to vector<4x256xf32>
    %358 = arith.mulf %356, %357 : vector<4x256xf32>
    %359 = arith.addf %353, %358 : vector<4x256xf32>
    %360 = vector.extract_strided_slice %341 {offsets = [0, 3], sizes = [4, 1], strides = [1, 1]} : vector<4x4xf32> to vector<4x1xf32>
    %361 = vector.extract_strided_slice %339 {offsets = [3, 0], sizes = [1, 256], strides = [1, 1]} : vector<4x256xf32> to vector<1x256xf32>
    %362 = vector.broadcast %360 : vector<4x1xf32> to vector<4x256xf32>
    %363 = vector.broadcast %361 : vector<1x256xf32> to vector<4x256xf32>
    %364 = arith.mulf %362, %363 : vector<4x256xf32>
    %365 = arith.addf %359, %364 : vector<4x256xf32>
    %366 = vector.extract_strided_slice %278 {offsets = [0, 127], sizes = [4, 256], strides = [1, 1]} : vector<4x512xf32> to vector<4x256xf32>
    %367 = vector.broadcast %6 : vector<1x256xf32> to vector<4x256xf32>
    %368 = arith.mulf %366, %367 : vector<4x256xf32>
    %369 = vector.extract_strided_slice %279 {offsets = [3, 0, 0], sizes = [1, 4, 4], strides = [1, 1, 1]} : vector<9x4x4xf32> to vector<1x4x4xf32>
    %370 = vector.shape_cast %369 : vector<1x4x4xf32> to vector<4x4xf32>
    %371 = vector.extract_strided_slice %370 {offsets = [0, 0], sizes = [4, 1], strides = [1, 1]} : vector<4x4xf32> to vector<4x1xf32>
    %372 = vector.extract_strided_slice %368 {offsets = [0, 0], sizes = [1, 256], strides = [1, 1]} : vector<4x256xf32> to vector<1x256xf32>
    %373 = vector.broadcast %371 : vector<4x1xf32> to vector<4x256xf32>
    %374 = vector.broadcast %372 : vector<1x256xf32> to vector<4x256xf32>
    %375 = arith.mulf %373, %374 : vector<4x256xf32>
    %376 = arith.addf %365, %375 : vector<4x256xf32>
    %377 = vector.extract_strided_slice %370 {offsets = [0, 1], sizes = [4, 1], strides = [1, 1]} : vector<4x4xf32> to vector<4x1xf32>
    %378 = vector.extract_strided_slice %368 {offsets = [1, 0], sizes = [1, 256], strides = [1, 1]} : vector<4x256xf32> to vector<1x256xf32>
    %379 = vector.broadcast %377 : vector<4x1xf32> to vector<4x256xf32>
    %380 = vector.broadcast %378 : vector<1x256xf32> to vector<4x256xf32>
    %381 = arith.mulf %379, %380 : vector<4x256xf32>
    %382 = arith.addf %376, %381 : vector<4x256xf32>
    %383 = vector.extract_strided_slice %370 {offsets = [0, 2], sizes = [4, 1], strides = [1, 1]} : vector<4x4xf32> to vector<4x1xf32>
    %384 = vector.extract_strided_slice %368 {offsets = [2, 0], sizes = [1, 256], strides = [1, 1]} : vector<4x256xf32> to vector<1x256xf32>
    %385 = vector.broadcast %383 : vector<4x1xf32> to vector<4x256xf32>
    %386 = vector.broadcast %384 : vector<1x256xf32> to vector<4x256xf32>
    %387 = arith.mulf %385, %386 : vector<4x256xf32>
    %388 = arith.addf %382, %387 : vector<4x256xf32>
    %389 = vector.extract_strided_slice %370 {offsets = [0, 3], sizes = [4, 1], strides = [1, 1]} : vector<4x4xf32> to vector<4x1xf32>
    %390 = vector.extract_strided_slice %368 {offsets = [3, 0], sizes = [1, 256], strides = [1, 1]} : vector<4x256xf32> to vector<1x256xf32>
    %391 = vector.broadcast %389 : vector<4x1xf32> to vector<4x256xf32>
    %392 = vector.broadcast %390 : vector<1x256xf32> to vector<4x256xf32>
    %393 = arith.mulf %391, %392 : vector<4x256xf32>
    %394 = arith.addf %388, %393 : vector<4x256xf32>
    %395 = vector.extract_strided_slice %279 {offsets = [4, 0, 0], sizes = [1, 4, 4], strides = [1, 1, 1]} : vector<9x4x4xf32> to vector<1x4x4xf32>
    %396 = vector.shape_cast %395 : vector<1x4x4xf32> to vector<4x4xf32>
    %397 = vector.extract_strided_slice %396 {offsets = [0, 0], sizes = [4, 1], strides = [1, 1]} : vector<4x4xf32> to vector<4x1xf32>
    %398 = vector.extract_strided_slice %276 {offsets = [0, 0], sizes = [1, 256], strides = [1, 1]} : vector<4x256xf32> to vector<1x256xf32>
    %399 = vector.broadcast %397 : vector<4x1xf32> to vector<4x256xf32>
    %400 = vector.broadcast %398 : vector<1x256xf32> to vector<4x256xf32>
    %401 = arith.mulf %399, %400 : vector<4x256xf32>
    %402 = arith.addf %394, %401 : vector<4x256xf32>
    %403 = vector.extract_strided_slice %396 {offsets = [0, 1], sizes = [4, 1], strides = [1, 1]} : vector<4x4xf32> to vector<4x1xf32>
    %404 = vector.extract_strided_slice %276 {offsets = [1, 0], sizes = [1, 256], strides = [1, 1]} : vector<4x256xf32> to vector<1x256xf32>
    %405 = vector.broadcast %403 : vector<4x1xf32> to vector<4x256xf32>
    %406 = vector.broadcast %404 : vector<1x256xf32> to vector<4x256xf32>
    %407 = arith.mulf %405, %406 : vector<4x256xf32>
    %408 = arith.addf %402, %407 : vector<4x256xf32>
    %409 = vector.extract_strided_slice %396 {offsets = [0, 2], sizes = [4, 1], strides = [1, 1]} : vector<4x4xf32> to vector<4x1xf32>
    %410 = vector.extract_strided_slice %276 {offsets = [2, 0], sizes = [1, 256], strides = [1, 1]} : vector<4x256xf32> to vector<1x256xf32>
    %411 = vector.broadcast %409 : vector<4x1xf32> to vector<4x256xf32>
    %412 = vector.broadcast %410 : vector<1x256xf32> to vector<4x256xf32>
    %413 = arith.mulf %411, %412 : vector<4x256xf32>
    %414 = arith.addf %408, %413 : vector<4x256xf32>
    %415 = vector.extract_strided_slice %396 {offsets = [0, 3], sizes = [4, 1], strides = [1, 1]} : vector<4x4xf32> to vector<4x1xf32>
    %416 = vector.extract_strided_slice %276 {offsets = [3, 0], sizes = [1, 256], strides = [1, 1]} : vector<4x256xf32> to vector<1x256xf32>
    %417 = vector.broadcast %415 : vector<4x1xf32> to vector<4x256xf32>
    %418 = vector.broadcast %416 : vector<1x256xf32> to vector<4x256xf32>
    %419 = arith.mulf %417, %418 : vector<4x256xf32>
    %420 = arith.addf %414, %419 : vector<4x256xf32>
    %421 = vector.extract_strided_slice %278 {offsets = [0, 129], sizes = [4, 256], strides = [1, 1]} : vector<4x512xf32> to vector<4x256xf32>
    %422 = vector.broadcast %7 : vector<1x256xf32> to vector<4x256xf32>
    %423 = arith.mulf %421, %422 : vector<4x256xf32>
    %424 = vector.extract_strided_slice %279 {offsets = [5, 0, 0], sizes = [1, 4, 4], strides = [1, 1, 1]} : vector<9x4x4xf32> to vector<1x4x4xf32>
    %425 = vector.shape_cast %424 : vector<1x4x4xf32> to vector<4x4xf32>
    %426 = vector.extract_strided_slice %425 {offsets = [0, 0], sizes = [4, 1], strides = [1, 1]} : vector<4x4xf32> to vector<4x1xf32>
    %427 = vector.extract_strided_slice %423 {offsets = [0, 0], sizes = [1, 256], strides = [1, 1]} : vector<4x256xf32> to vector<1x256xf32>
    %428 = vector.broadcast %426 : vector<4x1xf32> to vector<4x256xf32>
    %429 = vector.broadcast %427 : vector<1x256xf32> to vector<4x256xf32>
    %430 = arith.mulf %428, %429 : vector<4x256xf32>
    %431 = arith.addf %420, %430 : vector<4x256xf32>
    %432 = vector.extract_strided_slice %425 {offsets = [0, 1], sizes = [4, 1], strides = [1, 1]} : vector<4x4xf32> to vector<4x1xf32>
    %433 = vector.extract_strided_slice %423 {offsets = [1, 0], sizes = [1, 256], strides = [1, 1]} : vector<4x256xf32> to vector<1x256xf32>
    %434 = vector.broadcast %432 : vector<4x1xf32> to vector<4x256xf32>
    %435 = vector.broadcast %433 : vector<1x256xf32> to vector<4x256xf32>
    %436 = arith.mulf %434, %435 : vector<4x256xf32>
    %437 = arith.addf %431, %436 : vector<4x256xf32>
    %438 = vector.extract_strided_slice %425 {offsets = [0, 2], sizes = [4, 1], strides = [1, 1]} : vector<4x4xf32> to vector<4x1xf32>
    %439 = vector.extract_strided_slice %423 {offsets = [2, 0], sizes = [1, 256], strides = [1, 1]} : vector<4x256xf32> to vector<1x256xf32>
    %440 = vector.broadcast %438 : vector<4x1xf32> to vector<4x256xf32>
    %441 = vector.broadcast %439 : vector<1x256xf32> to vector<4x256xf32>
    %442 = arith.mulf %440, %441 : vector<4x256xf32>
    %443 = arith.addf %437, %442 : vector<4x256xf32>
    %444 = vector.extract_strided_slice %425 {offsets = [0, 3], sizes = [4, 1], strides = [1, 1]} : vector<4x4xf32> to vector<4x1xf32>
    %445 = vector.extract_strided_slice %423 {offsets = [3, 0], sizes = [1, 256], strides = [1, 1]} : vector<4x256xf32> to vector<1x256xf32>
    %446 = vector.broadcast %444 : vector<4x1xf32> to vector<4x256xf32>
    %447 = vector.broadcast %445 : vector<1x256xf32> to vector<4x256xf32>
    %448 = arith.mulf %446, %447 : vector<4x256xf32>
    %449 = arith.addf %443, %448 : vector<4x256xf32>
    %450 = vector.extract_strided_slice %278 {offsets = [0, 143], sizes = [4, 256], strides = [1, 1]} : vector<4x512xf32> to vector<4x256xf32>
    %451 = vector.broadcast %6 : vector<1x256xf32> to vector<4x256xf32>
    %452 = arith.mulf %450, %451 : vector<4x256xf32>
    %453 = vector.extract_strided_slice %279 {offsets = [6, 0, 0], sizes = [1, 4, 4], strides = [1, 1, 1]} : vector<9x4x4xf32> to vector<1x4x4xf32>
    %454 = vector.shape_cast %453 : vector<1x4x4xf32> to vector<4x4xf32>
    %455 = vector.extract_strided_slice %454 {offsets = [0, 0], sizes = [4, 1], strides = [1, 1]} : vector<4x4xf32> to vector<4x1xf32>
    %456 = vector.extract_strided_slice %452 {offsets = [0, 0], sizes = [1, 256], strides = [1, 1]} : vector<4x256xf32> to vector<1x256xf32>
    %457 = vector.broadcast %455 : vector<4x1xf32> to vector<4x256xf32>
    %458 = vector.broadcast %456 : vector<1x256xf32> to vector<4x256xf32>
    %459 = arith.mulf %457, %458 : vector<4x256xf32>
    %460 = arith.addf %449, %459 : vector<4x256xf32>
    %461 = vector.extract_strided_slice %454 {offsets = [0, 1], sizes = [4, 1], strides = [1, 1]} : vector<4x4xf32> to vector<4x1xf32>
    %462 = vector.extract_strided_slice %452 {offsets = [1, 0], sizes = [1, 256], strides = [1, 1]} : vector<4x256xf32> to vector<1x256xf32>
    %463 = vector.broadcast %461 : vector<4x1xf32> to vector<4x256xf32>
    %464 = vector.broadcast %462 : vector<1x256xf32> to vector<4x256xf32>
    %465 = arith.mulf %463, %464 : vector<4x256xf32>
    %466 = arith.addf %460, %465 : vector<4x256xf32>
    %467 = vector.extract_strided_slice %454 {offsets = [0, 2], sizes = [4, 1], strides = [1, 1]} : vector<4x4xf32> to vector<4x1xf32>
    %468 = vector.extract_strided_slice %452 {offsets = [2, 0], sizes = [1, 256], strides = [1, 1]} : vector<4x256xf32> to vector<1x256xf32>
    %469 = vector.broadcast %467 : vector<4x1xf32> to vector<4x256xf32>
    %470 = vector.broadcast %468 : vector<1x256xf32> to vector<4x256xf32>
    %471 = arith.mulf %469, %470 : vector<4x256xf32>
    %472 = arith.addf %466, %471 : vector<4x256xf32>
    %473 = vector.extract_strided_slice %454 {offsets = [0, 3], sizes = [4, 1], strides = [1, 1]} : vector<4x4xf32> to vector<4x1xf32>
    %474 = vector.extract_strided_slice %452 {offsets = [3, 0], sizes = [1, 256], strides = [1, 1]} : vector<4x256xf32> to vector<1x256xf32>
    %475 = vector.broadcast %473 : vector<4x1xf32> to vector<4x256xf32>
    %476 = vector.broadcast %474 : vector<1x256xf32> to vector<4x256xf32>
    %477 = arith.mulf %475, %476 : vector<4x256xf32>
    %478 = arith.addf %472, %477 : vector<4x256xf32>
    %479 = vector.extract_strided_slice %278 {offsets = [0, 144], sizes = [4, 256], strides = [1, 1]} : vector<4x512xf32> to vector<4x256xf32>
    %480 = vector.extract_strided_slice %279 {offsets = [7, 0, 0], sizes = [1, 4, 4], strides = [1, 1, 1]} : vector<9x4x4xf32> to vector<1x4x4xf32>
    %481 = vector.shape_cast %480 : vector<1x4x4xf32> to vector<4x4xf32>
    %482 = vector.extract_strided_slice %481 {offsets = [0, 0], sizes = [4, 1], strides = [1, 1]} : vector<4x4xf32> to vector<4x1xf32>
    %483 = vector.extract_strided_slice %479 {offsets = [0, 0], sizes = [1, 256], strides = [1, 1]} : vector<4x256xf32> to vector<1x256xf32>
    %484 = vector.broadcast %482 : vector<4x1xf32> to vector<4x256xf32>
    %485 = vector.broadcast %483 : vector<1x256xf32> to vector<4x256xf32>
    %486 = arith.mulf %484, %485 : vector<4x256xf32>
    %487 = arith.addf %478, %486 : vector<4x256xf32>
    %488 = vector.extract_strided_slice %481 {offsets = [0, 1], sizes = [4, 1], strides = [1, 1]} : vector<4x4xf32> to vector<4x1xf32>
    %489 = vector.extract_strided_slice %479 {offsets = [1, 0], sizes = [1, 256], strides = [1, 1]} : vector<4x256xf32> to vector<1x256xf32>
    %490 = vector.broadcast %488 : vector<4x1xf32> to vector<4x256xf32>
    %491 = vector.broadcast %489 : vector<1x256xf32> to vector<4x256xf32>
    %492 = arith.mulf %490, %491 : vector<4x256xf32>
    %493 = arith.addf %487, %492 : vector<4x256xf32>
    %494 = vector.extract_strided_slice %481 {offsets = [0, 2], sizes = [4, 1], strides = [1, 1]} : vector<4x4xf32> to vector<4x1xf32>
    %495 = vector.extract_strided_slice %479 {offsets = [2, 0], sizes = [1, 256], strides = [1, 1]} : vector<4x256xf32> to vector<1x256xf32>
    %496 = vector.broadcast %494 : vector<4x1xf32> to vector<4x256xf32>
    %497 = vector.broadcast %495 : vector<1x256xf32> to vector<4x256xf32>
    %498 = arith.mulf %496, %497 : vector<4x256xf32>
    %499 = arith.addf %493, %498 : vector<4x256xf32>
    %500 = vector.extract_strided_slice %481 {offsets = [0, 3], sizes = [4, 1], strides = [1, 1]} : vector<4x4xf32> to vector<4x1xf32>
    %501 = vector.extract_strided_slice %479 {offsets = [3, 0], sizes = [1, 256], strides = [1, 1]} : vector<4x256xf32> to vector<1x256xf32>
    %502 = vector.broadcast %500 : vector<4x1xf32> to vector<4x256xf32>
    %503 = vector.broadcast %501 : vector<1x256xf32> to vector<4x256xf32>
    %504 = arith.mulf %502, %503 : vector<4x256xf32>
    %505 = arith.addf %499, %504 : vector<4x256xf32>
    %506 = vector.extract_strided_slice %278 {offsets = [0, 145], sizes = [4, 256], strides = [1, 1]} : vector<4x512xf32> to vector<4x256xf32>
    %507 = vector.broadcast %7 : vector<1x256xf32> to vector<4x256xf32>
    %508 = arith.mulf %506, %507 : vector<4x256xf32>
    %509 = vector.extract_strided_slice %279 {offsets = [8, 0, 0], sizes = [1, 4, 4], strides = [1, 1, 1]} : vector<9x4x4xf32> to vector<1x4x4xf32>
    %510 = vector.shape_cast %509 : vector<1x4x4xf32> to vector<4x4xf32>
    %511 = vector.extract_strided_slice %510 {offsets = [0, 0], sizes = [4, 1], strides = [1, 1]} : vector<4x4xf32> to vector<4x1xf32>
    %512 = vector.extract_strided_slice %508 {offsets = [0, 0], sizes = [1, 256], strides = [1, 1]} : vector<4x256xf32> to vector<1x256xf32>
    %513 = vector.broadcast %511 : vector<4x1xf32> to vector<4x256xf32>
    %514 = vector.broadcast %512 : vector<1x256xf32> to vector<4x256xf32>
    %515 = arith.mulf %513, %514 : vector<4x256xf32>
    %516 = arith.addf %505, %515 : vector<4x256xf32>
    %517 = vector.extract_strided_slice %510 {offsets = [0, 1], sizes = [4, 1], strides = [1, 1]} : vector<4x4xf32> to vector<4x1xf32>
    %518 = vector.extract_strided_slice %508 {offsets = [1, 0], sizes = [1, 256], strides = [1, 1]} : vector<4x256xf32> to vector<1x256xf32>
    %519 = vector.broadcast %517 : vector<4x1xf32> to vector<4x256xf32>
    %520 = vector.broadcast %518 : vector<1x256xf32> to vector<4x256xf32>
    %521 = arith.mulf %519, %520 : vector<4x256xf32>
    %522 = arith.addf %516, %521 : vector<4x256xf32>
    %523 = vector.extract_strided_slice %510 {offsets = [0, 2], sizes = [4, 1], strides = [1, 1]} : vector<4x4xf32> to vector<4x1xf32>
    %524 = vector.extract_strided_slice %508 {offsets = [2, 0], sizes = [1, 256], strides = [1, 1]} : vector<4x256xf32> to vector<1x256xf32>
    %525 = vector.broadcast %523 : vector<4x1xf32> to vector<4x256xf32>
    %526 = vector.broadcast %524 : vector<1x256xf32> to vector<4x256xf32>
    %527 = arith.mulf %525, %526 : vector<4x256xf32>
    %528 = arith.addf %522, %527 : vector<4x256xf32>
    %529 = vector.extract_strided_slice %510 {offsets = [0, 3], sizes = [4, 1], strides = [1, 1]} : vector<4x4xf32> to vector<4x1xf32>
    %530 = vector.extract_strided_slice %508 {offsets = [3, 0], sizes = [1, 256], strides = [1, 1]} : vector<4x256xf32> to vector<1x256xf32>
    %531 = vector.broadcast %529 : vector<4x1xf32> to vector<4x256xf32>
    %532 = vector.broadcast %530 : vector<1x256xf32> to vector<4x256xf32>
    %533 = arith.mulf %531, %532 : vector<4x256xf32>
    %534 = arith.addf %528, %533 : vector<4x256xf32>
    %c0_21 = arith.constant 0 : index
    %c0_22 = arith.constant 0 : index
    %535 = vector.load %arg6[%c0_21, %c0_22] : memref<4x1xf32, #tpu.memory_space<vmem>>, vector<4x1xf32>
    %536 = vector.broadcast %535 : vector<4x1xf32> to vector<4x256xf32>
    %537 = arith.addf %534, %536 : vector<4x256xf32>
    %cst_23 = arith.constant 0.000000e+00 : f32
    %538 = vector.broadcast %cst_23 : f32 to vector<4x256xf32>
    %539 = arith.cmpf ogt, %537, %538 : vector<4x256xf32>
    %cst_24 = arith.constant 0.000000e+00 : f32
    %540 = vector.broadcast %cst_24 : f32 to vector<4x256xf32>
    %541 = arith.minimumf %537, %540 : vector<4x256xf32>
    %542 = math.exp %541 : vector<4x256xf32>
    %cst_25 = arith.constant 1.000000e+00 : f32
    %543 = vector.broadcast %cst_25 : f32 to vector<4x256xf32>
    %544 = arith.subf %542, %543 : vector<4x256xf32>
    %545 = arith.select %539, %537, %544 : vector<4x256xi1>, vector<4x256xf32>
    %546 = arith.addf %4, %545 : vector<4x256xf32>
    %c0_26 = arith.constant 0 : index
    %c0_27 = arith.constant 0 : index
    %c0_28 = arith.constant 0 : index
    %547 = vector.load %arg8[%c0_26, %c0_27, %c0_28] : memref<1x4x256xf32, #tpu.memory_space<vmem>>, vector<1x4x256xf32>
    %548 = vector.shape_cast %547 : vector<1x4x256xf32> to vector<4x256xf32>
    %549 = vector.shape_cast %546 : vector<4x256xf32> to vector<1x4x256xf32>
    tpu.vector_store %arg8[%c0_26, %c0_27, %c0_28], %549 {strides = array<i32>} : memref<1x4x256xf32, #tpu.memory_space<vmem>>, vector<1x4x256xf32>,
    return
  }
  func.func @transform_0(%arg0: i32) -> (i32, i32, i32) {
    %c0_i32 = arith.constant 0 : i32
    %c0_i32_0 = arith.constant 0 : i32
    %c0_i32_1 = arith.constant 0 : i32
    return %arg0, %c0_i32, %c0_i32_0 : i32, i32, i32
  }
  func.func @transform_1(%arg0: i32) -> (i32, i32, i32) {
    %c0_i32 = arith.constant 0 : i32
    %c0_i32_0 = arith.constant 0 : i32
    %c0_i32_1 = arith.constant 0 : i32
    return %arg0, %c0_i32, %c0_i32_0 : i32, i32, i32
  }
  func.func @transform_2(%arg0: i32) -> (i32, i32, i32) {
    %c0_i32 = arith.constant 0 : i32
    %c0_i32_0 = arith.constant 0 : i32
    %c0_i32_1 = arith.constant 0 : i32
    %c0_i32_2 = arith.constant 0 : i32
    return %c0_i32, %c0_i32_0, %c0_i32_1 : i32, i32, i32
  }
  func.func @transform_3(%arg0: i32) -> (i32, i32) {
    %c0_i32 = arith.constant 0 : i32
    %c0_i32_0 = arith.constant 0 : i32
    %c0_i32_1 = arith.constant 0 : i32
    return %c0_i32, %c0_i32_0 : i32, i32
  }
  func.func @transform_4(%arg0: i32) -> (i32, i32, i32) {
    %c0_i32 = arith.constant 0 : i32
    %c0_i32_0 = arith.constant 0 : i32
    %c0_i32_1 = arith.constant 0 : i32
    %c0_i32_2 = arith.constant 0 : i32
    return %c0_i32, %c0_i32_0, %c0_i32_1 : i32, i32, i32
  }
  func.func @transform_5(%arg0: i32) -> (i32, i32) {
    %c0_i32 = arith.constant 0 : i32
    %c0_i32_0 = arith.constant 0 : i32
    %c0_i32_1 = arith.constant 0 : i32
    return %c0_i32, %c0_i32_0 : i32, i32
  }
  func.func @transform_6(%arg0: i32) -> (i32, i32) {
    %c0_i32 = arith.constant 0 : i32
    %c0_i32_0 = arith.constant 0 : i32
    %c0_i32_1 = arith.constant 0 : i32
    return %c0_i32, %c0_i32_0 : i32, i32
  }
  func.func @transform_7(%arg0: i32) -> (i32, i32, i32) {
    %c0_i32 = arith.constant 0 : i32
    %c0_i32_0 = arith.constant 0 : i32
    %c0_i32_1 = arith.constant 0 : i32
    return %arg0, %c0_i32, %c0_i32_0 : i32, i32, i32
  }
}

</mosaic_0001>

<llo_original>
// kernel: tpu_custom_call.1
$region0: #{tpu_custom_call.1}
  #allocation0 [shape = 'u32[]', space=smem, size = 0x4, offset = 0x4, fixed_abs, tag = 'smem constant byte address 0x4 - core index']
  #allocation1 [shape = 'u32[144,128]{1,0:T(1,128)}', space=vmem, size = 0x12000, scoped, tag = 'internal scratch']
  %s0 = inlined_call_operand.vmem [shape: f32[2,2,256], index: 0, kind: input, shape index: {}]
  %s1 = inlined_call_operand.vmem [shape: f32[2,2,256], index: 1, kind: input, shape index: {}]
  %s2 = inlined_call_operand.vmem [shape: f32[9,4,4], index: 2, kind: input, shape index: {}]
  %s3 = inlined_call_operand.vmem [shape: f32[4,1], index: 3, kind: input, shape index: {}]
  %s4 = inlined_call_operand.vmem [shape: f32[9,4,4], index: 4, kind: input, shape index: {}]
  %s5 = inlined_call_operand.vmem [shape: f32[4,1], index: 5, kind: input, shape index: {}]
  %s6 = inlined_call_operand.vmem [shape: f32[2,256], index: 6, kind: input, shape index: {}]
  %s7 = inlined_call_operand.hbm [shape: f32[2,4,256], index: 7, kind: output, shape index: {}]
  %s8 = sld [smem:[#allocation0]]
  $region61: #{tpu_custom_call.1} parent=0
    _
  %s10 = ssub.s32 1, %s8
  %s11 = scalar_select 0, %s10, %s8
  $region1: #{tpu_custom_call.1} parent=0
    #allocation2 [shape = 'u8[8192]{0}', space=vmem, size = 0x2000, scoped, tag = 'output window, operand 0']
    #allocation3 [shape = 's32[2]{0}', space=sflag, size = 0x8, scoped, tag = 'scoped memory for tpu_custom_call.1']
    %12 = vsyncpa [#allocation3], 0
    %s13 = scalar_lea.sflag [#allocation3], 1
    %14 = vsyncpa %s13, 0
    loop: start=0, step=1, limit=4
    $region2: #{tpu_custom_call.1} parent=1 // loop_pre_header
      _
    $region3: #{tpu_custom_call.1} parent=1 // loop_header
      %s16 = sphi 0, %s20
      %p17 = scmp.ge.s32.totalorder %s16, 4
      %s26 = sphi 0, %s28
      %s29 = sphi 0, %s26
      %s30 = sphi 0, %s29
      %s46 = sphi 0, %s30
      %s52 = sphi 0, %s54
      %s55 = sphi 0, %s52
      %s56 = sphi 0, %s55
      %s72 = sphi 0, %s56
      %s76 = sphi 0, %s76
      %s78 = sphi 0, %s76
      %s79 = sphi 0, %s78
      %s93 = sphi 0, %s79
      %s97 = sphi 0, %s97
      %s99 = sphi 0, %s97
      %s100 = sphi 0, %s99
      %s114 = sphi 0, %s100
      %s118 = sphi 0, %s118
      %s120 = sphi 0, %s118
      %s121 = sphi 0, %s120
      %s135 = sphi 0, %s121
      %s139 = sphi 0, %s139
      %s141 = sphi 0, %s139
      %s142 = sphi 0, %s141
      %s156 = sphi 0, %s142
      %s160 = sphi 0, %s160
      %s162 = sphi 0, %s160
      %s163 = sphi 0, %s162
      %s177 = sphi 0, %s163
      %s183 = sphi 0, %s185
      %s186 = sphi 0, %s183
      %s187 = sphi 0, %s186
      %s203 = sphi 0, %s187
    $region4: #{tpu_custom_call.1} parent=1 // loop_header_branch
      %19 = sbr.rel (%p17) target = $region8
    $region5: #{tpu_custom_call.1} parent=1 // loop_body
      %s21 = ssub.s32 %s16, 1
      %s22 = ssub.s32 %s16, 2
      %s23 = sadd.s32 %s16, 1
      %s24 = ssub.s32 %s16, %s23
      %p25 = scmp.eq.s32.totalorder %s24, 0
      %s27 = sadd.s32 %s26, 1
      %s28 = scalar_select %p25, %s26, %s27
      %p31 = pneg %p25
      %p32 = scmp.eq.s32.totalorder %s16, 1
      %p33 = por %p31, %p32
      %p34 = scmp.ne.s32.totalorder %s26, %s29
      %p35 = scmp.eq.s32.totalorder %s16, 0
      %p36 = por %p34, %p35
      %p37 = scmp.ne.s32.totalorder %s26, %s29
      %p38 = scmp.eq.s32.totalorder %s21, 1
      %p39 = por %p37, %p38
      %p40 = scmp.ne.s32.totalorder %s29, %s30
      %p41 = scmp.eq.s32.totalorder %s21, 0
      %p42 = por %p40, %p41
      %p43 = scmp.ne.s32.totalorder %s29, %s30
      %p44 = scmp.eq.s32.totalorder %s22, 1
      %p45 = por %p43, %p44
      %p47 = scmp.ne.s32.totalorder %s30, %s46
      %p48 = scmp.eq.s32.totalorder %s22, 0
      %p49 = por %p47, %p48
      %s50 = ssub.s32 %s16, %s23
      %p51 = scmp.eq.s32.totalorder %s50, 0
      %s53 = sadd.s32 %s52, 1
      %s54 = scalar_select %p51, %s52, %s53
      %p57 = pneg %p51
      %p58 = scmp.eq.s32.totalorder %s16, 1
      %p59 = por %p57, %p58
      %p60 = scmp.ne.s32.totalorder %s52, %s55
      %p61 = scmp.eq.s32.totalorder %s16, 0
      %p62 = por %p60, %p61
      %p63 = scmp.ne.s32.totalorder %s52, %s55
      %p64 = scmp.eq.s32.totalorder %s21, 1
      %p65 = por %p63, %p64
      %p66 = scmp.ne.s32.totalorder %s55, %s56
      %p67 = scmp.eq.s32.totalorder %s21, 0
      %p68 = por %p66, %p67
      %p69 = scmp.ne.s32.totalorder %s55, %s56
      %p70 = scmp.eq.s32.totalorder %s22, 1
      %p71 = por %p69, %p70
      %p73 = scmp.ne.s32.totalorder %s56, %s72
      %p74 = scmp.eq.s32.totalorder %s22, 0
      %p75 = por %p73, %p74
      %s77 = sadd.s32 %s76, 1
      %p80 = scmp.eq.s32.totalorder %s16, 1
      %p81 = scmp.ne.s32.totalorder %s76, %s78
      %p82 = scmp.eq.s32.totalorder %s16, 0
      %p83 = por %p81, %p82
      %p84 = scmp.ne.s32.totalorder %s76, %s78
      %p85 = scmp.eq.s32.totalorder %s21, 1
      %p86 = por %p84, %p85
      %p87 = scmp.ne.s32.totalorder %s78, %s79
      %p88 = scmp.eq.s32.totalorder %s21, 0
      %p89 = por %p87, %p88
      %p90 = scmp.ne.s32.totalorder %s78, %s79
      %p91 = scmp.eq.s32.totalorder %s22, 1
      %p92 = por %p90, %p91
      %p94 = scmp.ne.s32.totalorder %s79, %s93
      %p95 = scmp.eq.s32.totalorder %s22, 0
      %p96 = por %p94, %p95
      %s98 = sadd.s32 %s97, 1
      %p101 = scmp.eq.s32.totalorder %s16, 1
      %p102 = scmp.ne.s32.totalorder %s97, %s99
      %p103 = scmp.eq.s32.totalorder %s16, 0
      %p104 = por %p102, %p103
      %p105 = scmp.ne.s32.totalorder %s97, %s99
      %p106 = scmp.eq.s32.totalorder %s21, 1
      %p107 = por %p105, %p106
      %p108 = scmp.ne.s32.totalorder %s99, %s100
      %p109 = scmp.eq.s32.totalorder %s21, 0
      %p110 = por %p108, %p109
      %p111 = scmp.ne.s32.totalorder %s99, %s100
      %p112 = scmp.eq.s32.totalorder %s22, 1
      %p113 = por %p111, %p112
      %p115 = scmp.ne.s32.totalorder %s100, %s114
      %p116 = scmp.eq.s32.totalorder %s22, 0
      %p117 = por %p115, %p116
      %s119 = sadd.s32 %s118, 1
      %p122 = scmp.eq.s32.totalorder %s16, 1
      %p123 = scmp.ne.s32.totalorder %s118, %s120
      %p124 = scmp.eq.s32.totalorder %s16, 0
      %p125 = por %p123, %p124
      %p126 = scmp.ne.s32.totalorder %s118, %s120
      %p127 = scmp.eq.s32.totalorder %s21, 1
      %p128 = por %p126, %p127
      %p129 = scmp.ne.s32.totalorder %s120, %s121
      %p130 = scmp.eq.s32.totalorder %s21, 0
      %p131 = por %p129, %p130
      %p132 = scmp.ne.s32.totalorder %s120, %s121
      %p133 = scmp.eq.s32.totalorder %s22, 1
      %p134 = por %p132, %p133
      %p136 = scmp.ne.s32.totalorder %s121, %s135
      %p137 = scmp.eq.s32.totalorder %s22, 0
      %p138 = por %p136, %p137
      %s140 = sadd.s32 %s139, 1
      %p143 = scmp.eq.s32.totalorder %s16, 1
      %p144 = scmp.ne.s32.totalorder %s139, %s141
      %p145 = scmp.eq.s32.totalorder %s16, 0
      %p146 = por %p144, %p145
      %p147 = scmp.ne.s32.totalorder %s139, %s141
      %p148 = scmp.eq.s32.totalorder %s21, 1
      %p149 = por %p147, %p148
      %p150 = scmp.ne.s32.totalorder %s141, %s142
      %p151 = scmp.eq.s32.totalorder %s21, 0
      %p152 = por %p150, %p151
      %p153 = scmp.ne.s32.totalorder %s141, %s142
      %p154 = scmp.eq.s32.totalorder %s22, 1
      %p155 = por %p153, %p154
      %p157 = scmp.ne.s32.totalorder %s142, %s156
      %p158 = scmp.eq.s32.totalorder %s22, 0
      %p159 = por %p157, %p158
      %s161 = sadd.s32 %s160, 1
      %p164 = scmp.eq.s32.totalorder %s16, 1
      %p165 = scmp.ne.s32.totalorder %s160, %s162
      %p166 = scmp.eq.s32.totalorder %s16, 0
      %p167 = por %p165, %p166
      %p168 = scmp.ne.s32.totalorder %s160, %s162
      %p169 = scmp.eq.s32.totalorder %s21, 1
      %p170 = por %p168, %p169
      %p171 = scmp.ne.s32.totalorder %s162, %s163
      %p172 = scmp.eq.s32.totalorder %s21, 0
      %p173 = por %p171, %p172
      %p174 = scmp.ne.s32.totalorder %s162, %s163
      %p175 = scmp.eq.s32.totalorder %s22, 1
      %p176 = por %p174, %p175
      %p178 = scmp.ne.s32.totalorder %s163, %s177
      %p179 = scmp.eq.s32.totalorder %s22, 0
      %p180 = por %p178, %p179
      %s181 = ssub.s32 %s16, %s23
      %p182 = scmp.eq.s32.totalorder %s181, 0
      %s184 = sadd.s32 %s183, 1
      %s185 = scalar_select %p182, %s183, %s184
      %p188 = pneg %p182
      %p189 = scmp.eq.s32.totalorder %s16, 1
      %p190 = por %p188, %p189
      %p191 = scmp.ne.s32.totalorder %s183, %s186
      %p192 = scmp.eq.s32.totalorder %s16, 0
      %p193 = por %p191, %p192
      %p194 = scmp.ne.s32.totalorder %s183, %s186
      %p195 = scmp.eq.s32.totalorder %s21, 1
      %p196 = por %p194, %p195
      %p197 = scmp.ne.s32.totalorder %s186, %s187
      %p198 = scmp.eq.s32.totalorder %s21, 0
      %p199 = por %p197, %p198
      %p200 = scmp.ne.s32.totalorder %s186, %s187
      %p201 = scmp.eq.s32.totalorder %s22, 1
      %p202 = por %p200, %p201
      %p204 = scmp.ne.s32.totalorder %s187, %s203
      %p205 = scmp.eq.s32.totalorder %s22, 0
      %p206 = por %p204, %p205
      %p207 = scmp.le.s32.totalorder 1, %s16
      %p208 = scmp.lt.s32.totalorder %s16, 3
      %p209 = pnand %p207, %p208
      %p210 = pneg %p209
      // Predicated region
      $region9: #{tpu_custom_call.1} parent=5 // pred_check
        _
      $region10: #{tpu_custom_call.1} parent=5 // pred_check_branch
        %212 = sbr.rel (%p209) target = $region12
      $region11: #{tpu_custom_call.1} parent=5 // pred_region
        %s213 = ssub.s32 %s16, 1
        // Predicated region
        $region13: #{tpu_custom_call.1} parent=11 // pred_check
          %p214 = pneg %p89
        $region14: #{tpu_custom_call.1} parent=11 // pred_check_branch
          %216 = sbr.rel (%p214) target = $region16
        $region15: #{tpu_custom_call.1} parent=11 // pred_region
          _
        $region16: #{tpu_custom_call.1} parent=11 // pred_fallthru
          _
        // Predicated region
        $region17: #{tpu_custom_call.1} parent=11 // pred_check
          %p217 = pneg %p110
        $region18: #{tpu_custom_call.1} parent=11 // pred_check_branch
          %219 = sbr.rel (%p217) target = $region20
        $region19: #{tpu_custom_call.1} parent=11 // pred_region
          _
        $region20: #{tpu_custom_call.1} parent=11 // pred_fallthru
          _
        // Predicated region
        $region21: #{tpu_custom_call.1} parent=11 // pred_check
          %p220 = pneg %p131
        $region22: #{tpu_custom_call.1} parent=11 // pred_check_branch
          %222 = sbr.rel (%p220) target = $region24
        $region23: #{tpu_custom_call.1} parent=11 // pred_region
          _
        $region24: #{tpu_custom_call.1} parent=11 // pred_fallthru
          _
        // Predicated region
        $region25: #{tpu_custom_call.1} parent=11 // pred_check
          %p223 = pneg %p152
        $region26: #{tpu_custom_call.1} parent=11 // pred_check_branch
          %225 = sbr.rel (%p223) target = $region28
        $region27: #{tpu_custom_call.1} parent=11 // pred_region
          _
        $region28: #{tpu_custom_call.1} parent=11 // pred_fallthru
          _
        // Predicated region
        $region29: #{tpu_custom_call.1} parent=11 // pred_check
          %p226 = pneg %p173
        $region30: #{tpu_custom_call.1} parent=11 // pred_check_branch
          %228 = sbr.rel (%p226) target = $region32
        $region31: #{tpu_custom_call.1} parent=11 // pred_region
          _
        $region32: #{tpu_custom_call.1} parent=11 // pred_fallthru
          _
      $region12: #{tpu_custom_call.1} parent=5 // pred_fallthru
        _
      %p229 = scmp.lt.s32.totalorder %s16, 2
      // Predicated region
      $region33: #{tpu_custom_call.1} parent=5 // pred_check
        %p230 = pneg %p229
      $region34: #{tpu_custom_call.1} parent=5 // pred_check_branch
        %232 = sbr.rel (%p230) target = $region36
      $region35: #{tpu_custom_call.1} parent=5 // pred_region
        // Predicated region
        $region37: #{tpu_custom_call.1} parent=35 // pred_check
          %p233 = pneg %p36
        $region38: #{tpu_custom_call.1} parent=35 // pred_check_branch
          %235 = sbr.rel (%p233) target = $region40
        $region39: #{tpu_custom_call.1} parent=35 // pred_region
          %p236 = scmp.lt.s32.totalorder %s16, 1
          %s237 = scalar_select %p236, %s16, 1
          %s238 = smul.addr %s237, 2
          %s239 = smul.addr %s238, 2
          %s240 = scalar_lea.vmem %s0, %s239
        $region40: #{tpu_custom_call.1} parent=35 // pred_fallthru
          _
        // Predicated region
        $region41: #{tpu_custom_call.1} parent=35 // pred_check
          %p241 = pneg %p62
        $region42: #{tpu_custom_call.1} parent=35 // pred_check_branch
          %243 = sbr.rel (%p241) target = $region44
        $region43: #{tpu_custom_call.1} parent=35 // pred_region
          %p244 = scmp.lt.s32.totalorder %s16, 1
          %s245 = scalar_select %p244, %s16, 1
          %s246 = smul.addr %s245, 2
          %s247 = smul.addr %s246, 2
          %s248 = scalar_lea.vmem %s1, %s247
        $region44: #{tpu_custom_call.1} parent=35 // pred_fallthru
          _
      $region36: #{tpu_custom_call.1} parent=5 // pred_fallthru
        _
      %p249 = scmp.le.s32.totalorder 1, %s16
      %p250 = scmp.lt.s32.totalorder %s16, 3
      %p251 = pnand %p249, %p250
      %p252 = pneg %p251
      // Predicated region
      $region45: #{tpu_custom_call.1} parent=5 // pred_check
        _
      $region46: #{tpu_custom_call.1} parent=5 // pred_check_branch
        %254 = sbr.rel (%p251) target = $region48
      $region47: #{tpu_custom_call.1} parent=5 // pred_region
        %s255 = ssub.s32 %s16, 1
        %p256 = scmp.lt.s32.totalorder %s21, 1
        %s257 = scalar_select %p256, %s21, 1
        %s258 = smul.addr %s257, 2
        %s259 = smul.addr %s258, 2
        %s260 = scalar_lea.vmem %s0, %s259
        %p261 = pneg %p42
        %p262 = pneg %p39
        %p263 = scmp.lt.s32.totalorder %s21, 1
        %s264 = scalar_select %p263, %s21, 1
        %s265 = smul.addr %s264, 2
        %s266 = smul.addr %s265, 2
        %s267 = scalar_lea.vmem %s1, %s266
        %p268 = pneg %p68
        %p269 = pneg %p65
        %p270 = pneg %p89
        %p271 = pneg %p86
        %p272 = pneg %p110
        %p273 = pneg %p107
        %p274 = pneg %p131
        %p275 = pneg %p128
        %p276 = pneg %p152
        %p277 = pneg %p149
        %p278 = pneg %p173
        %p279 = pneg %p170
        %p280 = pneg %p199
        %p281 = pneg %p196
        %s282 = sand.u32 %s186, 1
        %s283 = scalar_lea.sflag [#allocation3], %s282
        %s284 = sand.u32 %s186, 1
        %s285 = smul.addr %s284, 8
        %s286 = scalar_lea.vmem [#allocation2], %s285
        %p287 = scmp.lt.s32.totalorder %s21, 1
        %s288 = scalar_select %p287, %s21, 1
        %s289 = smul.addr %s288, 2
        %s290 = smul.addr %s289, 2
        %s291 = scalar_lea.vmem %s0, %s290
        %p292 = scmp.lt.s32.totalorder %s21, 1
        %s293 = scalar_select %p292, %s21, 1
        %s294 = smul.addr %s293, 2
        %s295 = smul.addr %s294, 2
        %s296 = scalar_lea.vmem %s1, %s295
        %v297 = vld [vmem:[%s291] sm:$0xf]
        %v298 = vld [vmem:[%s296] sm:$0xf]
        %v301 = vunpack.c.l.s4 1983009808
        %v302 = vunpack.c.0.s8 %v301
        %v303 = vlaneseq
        %v304 = vshrl.u32 %v303, 7
        %v305 = vsub.s32 %v302, %v304
        %v306 = vrot.slane %v297, %v305
        %v307 = vcombine.high %v306, %v306
        %v311 = vcombine.low %v298, %v298
        %v313 = vunpack.c.l.s4 1983009808
        %v314 = vunpack.c.0.s8 %v313
        %v315 = vlaneseq
        %v316 = vshrl.u32 %v315, 7
        %v317 = vsub.s32 %v314, %v316
        %v318 = vrot.slane %v311, %v317
        %v319 = vcombine.high %v318, %v318
        %vm322 = vcmask 1041408
        %v323 = vsel %vm322, %v306, %v318
        %v324 = vsel %vm322, %v307, %v319
        %v325 = vld [vmem:[%s6] sm:$0xf]
        %v326 = vld [vmem:[%s2] sm:$0xf]
        %v327 = vld [vmem:[%s2 + $0x4] sm:$0xf]
        %v328 = vld [vmem:[%s2 + $0x8] sm:$0xf]
        %v329 = vld [vmem:[%s2 + $0xc] sm:$0xf]
        %v330 = vld [vmem:[%s2 + $0x10] sm:$0xf]
        %v331 = vld [vmem:[%s2 + $0x14] sm:$0xf]
        %v332 = vld [vmem:[%s2 + $0x18] sm:$0xf]
        %v333 = vld [vmem:[%s2 + $0x1c] sm:$0xf]
        %v334 = vld [vmem:[%s2 + $0x20] sm:$0xf]
        %v336 = vlaneseq
        %v337 = vshrl.u32 %v336, 7
        %v338 = vsub.s32 0, %v337
        %v339 = vrot.slane %v325, %v338
        %v340 = vlaneseq
        %v341 = vshrl.u32 %v340, 7
        %v342 = vsub.s32 2, %v341
        %v343 = vrot.slane %v325, %v342
        %v346 = vlaneseq
        %v347 = vshrl.u32 %v346, 7
        %v348 = vsub.s32 0, %v347
        %v349 = vrot.slane %v339, %v348
        %v350 = vlaneseq
        %v351 = vshrl.u32 %v350, 7
        %v352 = vsub.s32 0, %v351
        %v353 = vrot.slane %v343, %v352
        %356 = vrot.lane.b32.xlu0 %v349, 111
        %v357 = vpop.permute.xlu0 %356
        %358 = vrot.lane.b32.xlu0 %v353, 111
        %v359 = vpop.permute.xlu0 %358
        %vm360 = vcmask 908288
        %v361 = vsel %vm360, %v357, %v359
        %v365 = vmul.f32 %v357, 0.0
        %v366 = vmul.f32 %v323, %v361
        %v367 = vmul.f32 %v324, %v359
        %369 = vset.pattern.permute.xlu0 0
        %370 = vperm.xlu0 %369, %v326
        %v371 = vpop.permute.xlu0 %370
        %v373 = vlaneseq
        %v374 = vshrl.u32 %v373, 7
        %v375 = vsub.s32 0, %v374
        %v376 = vrot.slane %v365, %v375
        %v377 = vlaneseq
        %v378 = vshrl.u32 %v377, 7
        %v379 = vsub.s32 0, %v378
        %v380 = vrot.slane %v366, %v379
        %v381 = vlaneseq
        %v382 = vshrl.u32 %v381, 7
        %v383 = vsub.s32 0, %v382
        %v384 = vrot.slane %v367, %v383
        %v385 = vmul.f32 %v371, %v376
        %v386 = vmul.f32 %v371, %v380
        %v387 = vmul.f32 %v371, %v384
        %v388 = vadd.f32 %v385, 0.0
        %v389 = vadd.f32 %v386, 0.0
        %v390 = vadd.f32 %v387, 0.0
        %391 = vset.pattern.permute.xlu0 1
        %392 = vperm.xlu0 %391, %v326
        %v393 = vpop.permute.xlu0 %392
        %v395 = vlaneseq
        %v396 = vshrl.u32 %v395, 7
        %v397 = vsub.s32 1, %v396
        %v398 = vrot.slane %v365, %v397
        %v399 = vlaneseq
        %v400 = vshrl.u32 %v399, 7
        %v401 = vsub.s32 1, %v400
        %v402 = vrot.slane %v366, %v401
        %v403 = vlaneseq
        %v404 = vshrl.u32 %v403, 7
        %v405 = vsub.s32 1, %v404
        %v406 = vrot.slane %v367, %v405
        %v407 = vmul.f32 %v393, %v398
        %v408 = vmul.f32 %v393, %v402
        %v409 = vmul.f32 %v393, %v406
        %v410 = vadd.f32 %v388, %v407
        %v411 = vadd.f32 %v389, %v408
        %v412 = vadd.f32 %v390, %v409
        %413 = vset.pattern.permute.xlu0 2
        %414 = vperm.xlu0 %413, %v326
        %v415 = vpop.permute.xlu0 %414
        %v417 = vlaneseq
        %v418 = vshrl.u32 %v417, 7
        %v419 = vsub.s32 2, %v418
        %v420 = vrot.slane %v365, %v419
        %v421 = vlaneseq
        %v422 = vshrl.u32 %v421, 7
        %v423 = vsub.s32 2, %v422
        %v424 = vrot.slane %v366, %v423
        %v425 = vlaneseq
        %v426 = vshrl.u32 %v425, 7
        %v427 = vsub.s32 2, %v426
        %v428 = vrot.slane %v367, %v427
        %v429 = vmul.f32 %v415, %v420
        %v430 = vmul.f32 %v415, %v424
        %v431 = vmul.f32 %v415, %v428
        %v432 = vadd.f32 %v410, %v429
        %v433 = vadd.f32 %v411, %v430
        %v434 = vadd.f32 %v412, %v431
        %435 = vset.pattern.permute.xlu0 3
        %436 = vperm.xlu0 %435, %v326
        %v437 = vpop.permute.xlu0 %436
        %v439 = vlaneseq
        %v440 = vshrl.u32 %v439, 7
        %v441 = vsub.s32 3, %v440
        %v442 = vrot.slane %v365, %v441
        %v443 = vlaneseq
        %v444 = vshrl.u32 %v443, 7
        %v445 = vsub.s32 3, %v444
        %v446 = vrot.slane %v366, %v445
        %v447 = vlaneseq
        %v448 = vshrl.u32 %v447, 7
        %v449 = vsub.s32 3, %v448
        %v450 = vrot.slane %v367, %v449
        %v451 = vmul.f32 %v437, %v442
        %v452 = vmul.f32 %v437, %v446
        %v453 = vmul.f32 %v437, %v450
        %v454 = vadd.f32 %v432, %v451
        %v455 = vadd.f32 %v433, %v452
        %v456 = vadd.f32 %v434, %v453
        %458 = vset.pattern.permute.xlu0 0
        %459 = vperm.xlu0 %458, %v327
        %v460 = vpop.permute.xlu0 %459
        %v462 = vlaneseq
        %v463 = vshrl.u32 %v462, 7
        %v464 = vsub.s32 0, %v463
        %v465 = vlaneseq
        %v466 = vshrl.u32 %v465, 7
        %v467 = vsub.s32 0, %v466
        %v468 = vrot.slane %v323, %v467
        %v469 = vlaneseq
        %v470 = vshrl.u32 %v469, 7
        %v471 = vsub.s32 0, %v470
        %v472 = vrot.slane %v324, %v471
        %v473 = vmul.f32 %v460, 0.0
        %v474 = vmul.f32 %v460, %v468
        %v475 = vmul.f32 %v460, %v472
        %479 = vrot.lane.b32.xlu0 %v473, 127
        %v480 = vpop.permute.xlu0 %479
        %481 = vrot.lane.b32.xlu0 %v474, 127
        %v482 = vpop.permute.xlu0 %481
        %483 = vrot.lane.b32.xlu0 %v475, 127
        %v484 = vpop.permute.xlu0 %483
        %vm485 = vcmask 1039360
        %v486 = vsel %vm485, %v480, %v482
        %v487 = vsel %vm485, %v482, %v484
        %v491 = vadd.f32 %v454, %v486
        %v492 = vadd.f32 %v455, %v487
        %v493 = vadd.f32 %v456, %v484
        %494 = vset.pattern.permute.xlu0 1
        %495 = vperm.xlu0 %494, %v327
        %v496 = vpop.permute.xlu0 %495
        %v498 = vlaneseq
        %v499 = vshrl.u32 %v498, 7
        %v500 = vsub.s32 1, %v499
        %v501 = vlaneseq
        %v502 = vshrl.u32 %v501, 7
        %v503 = vsub.s32 1, %v502
        %v504 = vrot.slane %v323, %v503
        %v505 = vlaneseq
        %v506 = vshrl.u32 %v505, 7
        %v507 = vsub.s32 1, %v506
        %v508 = vrot.slane %v324, %v507
        %v509 = vmul.f32 %v496, 0.0
        %v510 = vmul.f32 %v496, %v504
        %v511 = vmul.f32 %v496, %v508
        %515 = vrot.lane.b32.xlu0 %v509, 127
        %v516 = vpop.permute.xlu0 %515
        %517 = vrot.lane.b32.xlu0 %v510, 127
        %v518 = vpop.permute.xlu0 %517
        %519 = vrot.lane.b32.xlu0 %v511, 127
        %v520 = vpop.permute.xlu0 %519
        %v521 = vsel %vm485, %v516, %v518
        %v522 = vsel %vm485, %v518, %v520
        %v526 = vadd.f32 %v491, %v521
        %v527 = vadd.f32 %v492, %v522
        %v528 = vadd.f32 %v493, %v520
        %529 = vset.pattern.permute.xlu0 2
        %530 = vperm.xlu0 %529, %v327
        %v531 = vpop.permute.xlu0 %530
        %v533 = vlaneseq
        %v534 = vshrl.u32 %v533, 7
        %v535 = vsub.s32 2, %v534
        %v536 = vlaneseq
        %v537 = vshrl.u32 %v536, 7
        %v538 = vsub.s32 2, %v537
        %v539 = vrot.slane %v323, %v538
        %v540 = vlaneseq
        %v541 = vshrl.u32 %v540, 7
        %v542 = vsub.s32 2, %v541
        %v543 = vrot.slane %v324, %v542
        %v544 = vmul.f32 %v531, 0.0
        %v545 = vmul.f32 %v531, %v539
        %v546 = vmul.f32 %v531, %v543
        %550 = vrot.lane.b32.xlu0 %v544, 127
        %v551 = vpop.permute.xlu0 %550
        %552 = vrot.lane.b32.xlu0 %v545, 127
        %v553 = vpop.permute.xlu0 %552
        %554 = vrot.lane.b32.xlu0 %v546, 127
        %v555 = vpop.permute.xlu0 %554
        %v556 = vsel %vm485, %v551, %v553
        %v557 = vsel %vm485, %v553, %v555
        %v561 = vadd.f32 %v526, %v556
        %v562 = vadd.f32 %v527, %v557
        %v563 = vadd.f32 %v528, %v555
        %564 = vset.pattern.permute.xlu0 3
        %565 = vperm.xlu0 %564, %v327
        %v566 = vpop.permute.xlu0 %565
        %v568 = vlaneseq
        %v569 = vshrl.u32 %v568, 7
        %v570 = vsub.s32 3, %v569
        %v571 = vlaneseq
        %v572 = vshrl.u32 %v571, 7
        %v573 = vsub.s32 3, %v572
        %v574 = vrot.slane %v323, %v573
        %v575 = vlaneseq
        %v576 = vshrl.u32 %v575, 7
        %v577 = vsub.s32 3, %v576
        %v578 = vrot.slane %v324, %v577
        %v579 = vmul.f32 %v566, 0.0
        %v580 = vmul.f32 %v566, %v574
        %v581 = vmul.f32 %v566, %v578
        %585 = vrot.lane.b32.xlu0 %v579, 127
        %v586 = vpop.permute.xlu0 %585
        %587 = vrot.lane.b32.xlu0 %v580, 127
        %v588 = vpop.permute.xlu0 %587
        %589 = vrot.lane.b32.xlu0 %v581, 127
        %v590 = vpop.permute.xlu0 %589
        %v591 = vsel %vm485, %v586, %v588
        %v592 = vsel %vm485, %v588, %v590
        %v596 = vadd.f32 %v561, %v591
        %v597 = vadd.f32 %v562, %v592
        %v598 = vadd.f32 %v563, %v590
        %v599 = vlaneseq
        %v600 = vshrl.u32 %v599, 7
        %v601 = vsub.s32 1, %v600
        %v602 = vrot.slane %v325, %v601
        %v603 = vlaneseq
        %v604 = vshrl.u32 %v603, 7
        %v605 = vsub.s32 3, %v604
        %v606 = vrot.slane %v325, %v605
        %v609 = vlaneseq
        %v610 = vshrl.u32 %v609, 7
        %v611 = vsub.s32 1, %v610
        %v612 = vrot.slane %v602, %v611
        %v613 = vlaneseq
        %v614 = vshrl.u32 %v613, 7
        %v615 = vsub.s32 1, %v614
        %v616 = vrot.slane %v606, %v615
        %619 = vrot.lane.b32.xlu0 %v612, 113
        %v620 = vpop.permute.xlu0 %619
        %621 = vrot.lane.b32.xlu0 %v616, 113
        %v622 = vpop.permute.xlu0 %621
        %vm623 = vcmask 924672
        %v624 = vsel %vm623, %v620, %v622
        %v628 = vmul.f32 %v620, 0.0
        %v629 = vmul.f32 %v323, %v624
        %v630 = vmul.f32 %v324, %v622
        %632 = vset.pattern.permute.xlu0 0
        %633 = vperm.xlu0 %632, %v328
        %v634 = vpop.permute.xlu0 %633
        %v636 = vlaneseq
        %v637 = vshrl.u32 %v636, 7
        %v638 = vsub.s32 0, %v637
        %v639 = vrot.slane %v628, %v638
        %v640 = vlaneseq
        %v641 = vshrl.u32 %v640, 7
        %v642 = vsub.s32 0, %v641
        %v643 = vrot.slane %v629, %v642
        %v644 = vlaneseq
        %v645 = vshrl.u32 %v644, 7
        %v646 = vsub.s32 0, %v645
        %v647 = vrot.slane %v630, %v646
        %v648 = vmul.f32 %v634, %v639
        %v649 = vmul.f32 %v634, %v643
        %v650 = vmul.f32 %v634, %v647
        %654 = vrot.lane.b32.xlu0 %v648, 126
        %v655 = vpop.permute.xlu0 %654
        %656 = vrot.lane.b32.xlu0 %v649, 126
        %v657 = vpop.permute.xlu0 %656
        %658 = vrot.lane.b32.xlu0 %v650, 126
        %v659 = vpop.permute.xlu0 %658
        %vm660 = vcmask 1031168
        %v661 = vsel %vm660, %v655, %v657
        %v662 = vsel %vm660, %v657, %v659
        %v666 = vadd.f32 %v596, %v661
        %v667 = vadd.f32 %v597, %v662
        %v668 = vadd.f32 %v598, %v659
        %669 = vset.pattern.permute.xlu0 1
        %670 = vperm.xlu0 %669, %v328
        %v671 = vpop.permute.xlu0 %670
        %v673 = vlaneseq
        %v674 = vshrl.u32 %v673, 7
        %v675 = vsub.s32 1, %v674
        %v676 = vrot.slane %v628, %v675
        %v677 = vlaneseq
        %v678 = vshrl.u32 %v677, 7
        %v679 = vsub.s32 1, %v678
        %v680 = vrot.slane %v629, %v679
        %v681 = vlaneseq
        %v682 = vshrl.u32 %v681, 7
        %v683 = vsub.s32 1, %v682
        %v684 = vrot.slane %v630, %v683
        %v685 = vmul.f32 %v671, %v676
        %v686 = vmul.f32 %v671, %v680
        %v687 = vmul.f32 %v671, %v684
        %691 = vrot.lane.b32.xlu0 %v685, 126
        %v692 = vpop.permute.xlu0 %691
        %693 = vrot.lane.b32.xlu0 %v686, 126
        %v694 = vpop.permute.xlu0 %693
        %695 = vrot.lane.b32.xlu0 %v687, 126
        %v696 = vpop.permute.xlu0 %695
        %v697 = vsel %vm660, %v692, %v694
        %v698 = vsel %vm660, %v694, %v696
        %v702 = vadd.f32 %v666, %v697
        %v703 = vadd.f32 %v667, %v698
        %v704 = vadd.f32 %v668, %v696
        %705 = vset.pattern.permute.xlu0 2
        %706 = vperm.xlu0 %705, %v328
        %v707 = vpop.permute.xlu0 %706
        %v709 = vlaneseq
        %v710 = vshrl.u32 %v709, 7
        %v711 = vsub.s32 2, %v710
        %v712 = vrot.slane %v628, %v711
        %v713 = vlaneseq
        %v714 = vshrl.u32 %v713, 7
        %v715 = vsub.s32 2, %v714
        %v716 = vrot.slane %v629, %v715
        %v717 = vlaneseq
        %v718 = vshrl.u32 %v717, 7
        %v719 = vsub.s32 2, %v718
        %v720 = vrot.slane %v630, %v719
        %v721 = vmul.f32 %v707, %v712
        %v722 = vmul.f32 %v707, %v716
        %v723 = vmul.f32 %v707, %v720
        %727 = vrot.lane.b32.xlu0 %v721, 126
        %v728 = vpop.permute.xlu0 %727
        %729 = vrot.lane.b32.xlu0 %v722, 126
        %v730 = vpop.permute.xlu0 %729
        %731 = vrot.lane.b32.xlu0 %v723, 126
        %v732 = vpop.permute.xlu0 %731
        %v733 = vsel %vm660, %v728, %v730
        %v734 = vsel %vm660, %v730, %v732
        %v738 = vadd.f32 %v702, %v733
        %v739 = vadd.f32 %v703, %v734
        %v740 = vadd.f32 %v704, %v732
        %741 = vset.pattern.permute.xlu0 3
        %742 = vperm.xlu0 %741, %v328
        %v743 = vpop.permute.xlu0 %742
        %v745 = vlaneseq
        %v746 = vshrl.u32 %v745, 7
        %v747 = vsub.s32 3, %v746
        %v748 = vrot.slane %v628, %v747
        %v749 = vlaneseq
        %v750 = vshrl.u32 %v749, 7
        %v751 = vsub.s32 3, %v750
        %v752 = vrot.slane %v629, %v751
        %v753 = vlaneseq
        %v754 = vshrl.u32 %v753, 7
        %v755 = vsub.s32 3, %v754
        %v756 = vrot.slane %v630, %v755
        %v757 = vmul.f32 %v743, %v748
        %v758 = vmul.f32 %v743, %v752
        %v759 = vmul.f32 %v743, %v756
        %763 = vrot.lane.b32.xlu0 %v757, 126
        %v764 = vpop.permute.xlu0 %763
        %765 = vrot.lane.b32.xlu0 %v758, 126
        %v766 = vpop.permute.xlu0 %765
        %767 = vrot.lane.b32.xlu0 %v759, 126
        %v768 = vpop.permute.xlu0 %767
        %v769 = vsel %vm660, %v764, %v766
        %v770 = vsel %vm660, %v766, %v768
        %v774 = vadd.f32 %v738, %v769
        %v775 = vadd.f32 %v739, %v770
        %v776 = vadd.f32 %v740, %v768
        %777 = vrot.lane.b32.xlu0 %v349, 127
        %v778 = vpop.permute.xlu0 %777
        %779 = vrot.lane.b32.xlu0 %v353, 127
        %v780 = vpop.permute.xlu0 %779
        %v781 = vsel %vm485, %v778, %v780
        %v785 = vmul.f32 %v778, 0.0
        %v786 = vmul.f32 %v323, %v781
        %v787 = vmul.f32 %v324, %v780
        %789 = vset.pattern.permute.xlu0 0
        %790 = vperm.xlu0 %789, %v329
        %v791 = vpop.permute.xlu0 %790
        %v793 = vlaneseq
        %v794 = vshrl.u32 %v793, 7
        %v795 = vsub.s32 0, %v794
        %v796 = vrot.slane %v785, %v795
        %v797 = vlaneseq
        %v798 = vshrl.u32 %v797, 7
        %v799 = vsub.s32 0, %v798
        %v800 = vrot.slane %v786, %v799
        %v801 = vlaneseq
        %v802 = vshrl.u32 %v801, 7
        %v803 = vsub.s32 0, %v802
        %v804 = vrot.slane %v787, %v803
        %v805 = vmul.f32 %v791, %v796
        %v806 = vmul.f32 %v791, %v800
        %v807 = vmul.f32 %v791, %v804
        %811 = vrot.lane.b32.xlu0 %v805, 112
        %v812 = vpop.permute.xlu0 %811
        %813 = vrot.lane.b32.xlu0 %v806, 112
        %v814 = vpop.permute.xlu0 %813
        %815 = vrot.lane.b32.xlu0 %v807, 112
        %v816 = vpop.permute.xlu0 %815
        %vm817 = vcmask 916480
        %v818 = vsel %vm817, %v812, %v814
        %v819 = vsel %vm817, %v814, %v816
        %v823 = vadd.f32 %v774, %v818
        %v824 = vadd.f32 %v775, %v819
        %v825 = vadd.f32 %v776, %v816
        %826 = vset.pattern.permute.xlu0 1
        %827 = vperm.xlu0 %826, %v329
        %v828 = vpop.permute.xlu0 %827
        %v830 = vlaneseq
        %v831 = vshrl.u32 %v830, 7
        %v832 = vsub.s32 1, %v831
        %v833 = vrot.slane %v785, %v832
        %v834 = vlaneseq
        %v835 = vshrl.u32 %v834, 7
        %v836 = vsub.s32 1, %v835
        %v837 = vrot.slane %v786, %v836
        %v838 = vlaneseq
        %v839 = vshrl.u32 %v838, 7
        %v840 = vsub.s32 1, %v839
        %v841 = vrot.slane %v787, %v840
        %v842 = vmul.f32 %v828, %v833
        %v843 = vmul.f32 %v828, %v837
        %v844 = vmul.f32 %v828, %v841
        %848 = vrot.lane.b32.xlu0 %v842, 112
        %v849 = vpop.permute.xlu0 %848
        %850 = vrot.lane.b32.xlu0 %v843, 112
        %v851 = vpop.permute.xlu0 %850
        %852 = vrot.lane.b32.xlu0 %v844, 112
        %v853 = vpop.permute.xlu0 %852
        %v854 = vsel %vm817, %v849, %v851
        %v855 = vsel %vm817, %v851, %v853
        %v859 = vadd.f32 %v823, %v854
        %v860 = vadd.f32 %v824, %v855
        %v861 = vadd.f32 %v825, %v853
        %862 = vset.pattern.permute.xlu0 2
        %863 = vperm.xlu0 %862, %v329
        %v864 = vpop.permute.xlu0 %863
        %v866 = vlaneseq
        %v867 = vshrl.u32 %v866, 7
        %v868 = vsub.s32 2, %v867
        %v869 = vrot.slane %v785, %v868
        %v870 = vlaneseq
        %v871 = vshrl.u32 %v870, 7
        %v872 = vsub.s32 2, %v871
        %v873 = vrot.slane %v786, %v872
        %v874 = vlaneseq
        %v875 = vshrl.u32 %v874, 7
        %v876 = vsub.s32 2, %v875
        %v877 = vrot.slane %v787, %v876
        %v878 = vmul.f32 %v864, %v869
        %v879 = vmul.f32 %v864, %v873
        %v880 = vmul.f32 %v864, %v877
        %884 = vrot.lane.b32.xlu0 %v878, 112
        %v885 = vpop.permute.xlu0 %884
        %886 = vrot.lane.b32.xlu0 %v879, 112
        %v887 = vpop.permute.xlu0 %886
        %888 = vrot.lane.b32.xlu0 %v880, 112
        %v889 = vpop.permute.xlu0 %888
        %v890 = vsel %vm817, %v885, %v887
        %v891 = vsel %vm817, %v887, %v889
        %v895 = vadd.f32 %v859, %v890
        %v896 = vadd.f32 %v860, %v891
        %v897 = vadd.f32 %v861, %v889
        %898 = vset.pattern.permute.xlu0 3
        %899 = vperm.xlu0 %898, %v329
        %v900 = vpop.permute.xlu0 %899
        %v902 = vlaneseq
        %v903 = vshrl.u32 %v902, 7
        %v904 = vsub.s32 3, %v903
        %v905 = vrot.slane %v785, %v904
        %v906 = vlaneseq
        %v907 = vshrl.u32 %v906, 7
        %v908 = vsub.s32 3, %v907
        %v909 = vrot.slane %v786, %v908
        %v910 = vlaneseq
        %v911 = vshrl.u32 %v910, 7
        %v912 = vsub.s32 3, %v911
        %v913 = vrot.slane %v787, %v912
        %v914 = vmul.f32 %v900, %v905
        %v915 = vmul.f32 %v900, %v909
        %v916 = vmul.f32 %v900, %v913
        %920 = vrot.lane.b32.xlu0 %v914, 112
        %v921 = vpop.permute.xlu0 %920
        %922 = vrot.lane.b32.xlu0 %v915, 112
        %v923 = vpop.permute.xlu0 %922
        %924 = vrot.lane.b32.xlu0 %v916, 112
        %v925 = vpop.permute.xlu0 %924
        %v926 = vsel %vm817, %v921, %v923
        %v927 = vsel %vm817, %v923, %v925
        %v931 = vadd.f32 %v895, %v926
        %v932 = vadd.f32 %v896, %v927
        %v933 = vadd.f32 %v897, %v925
        %935 = vset.pattern.permute.xlu0 0
        %936 = vperm.xlu0 %935, %v330
        %v937 = vpop.permute.xlu0 %936
        %v939 = vmul.f32 %v937, %v468
        %v940 = vmul.f32 %v937, %v472
        %943 = vrot.lane.b32.xlu0 %v939, 111
        %v944 = vpop.permute.xlu0 %943
        %945 = vrot.lane.b32.xlu0 %v940, 111
        %v946 = vpop.permute.xlu0 %945
        %v947 = vsel %vm360, %v944, %v946
        %v951 = vadd.f32 %v931, %v944
        %v952 = vadd.f32 %v932, %v947
        %v953 = vadd.f32 %v933, %v946
        %954 = vset.pattern.permute.xlu0 1
        %955 = vperm.xlu0 %954, %v330
        %v956 = vpop.permute.xlu0 %955
        %v958 = vmul.f32 %v956, %v504
        %v959 = vmul.f32 %v956, %v508
        %962 = vrot.lane.b32.xlu0 %v958, 111
        %v963 = vpop.permute.xlu0 %962
        %964 = vrot.lane.b32.xlu0 %v959, 111
        %v965 = vpop.permute.xlu0 %964
        %v966 = vsel %vm360, %v963, %v965
        %v970 = vadd.f32 %v951, %v963
        %v971 = vadd.f32 %v952, %v966
        %v972 = vadd.f32 %v953, %v965
        %973 = vset.pattern.permute.xlu0 2
        %974 = vperm.xlu0 %973, %v330
        %v975 = vpop.permute.xlu0 %974
        %v977 = vmul.f32 %v975, %v539
        %v978 = vmul.f32 %v975, %v543
        %981 = vrot.lane.b32.xlu0 %v977, 111
        %v982 = vpop.permute.xlu0 %981
        %983 = vrot.lane.b32.xlu0 %v978, 111
        %v984 = vpop.permute.xlu0 %983
        %v985 = vsel %vm360, %v982, %v984
        %v989 = vadd.f32 %v970, %v982
        %v990 = vadd.f32 %v971, %v985
        %v991 = vadd.f32 %v972, %v984
        %992 = vset.pattern.permute.xlu0 3
        %993 = vperm.xlu0 %992, %v330
        %v994 = vpop.permute.xlu0 %993
        %v996 = vmul.f32 %v994, %v574
        %v997 = vmul.f32 %v994, %v578
        %1000 = vrot.lane.b32.xlu0 %v996, 111
        %v1001 = vpop.permute.xlu0 %1000
        %1002 = vrot.lane.b32.xlu0 %v997, 111
        %v1003 = vpop.permute.xlu0 %1002
        %v1004 = vsel %vm360, %v1001, %v1003
        %v1008 = vadd.f32 %v989, %v1001
        %v1009 = vadd.f32 %v990, %v1004
        %v1010 = vadd.f32 %v991, %v1003
        %1011 = vrot.lane.b32.xlu0 %v612, 1
        %v1012 = vpop.permute.xlu0 %1011
        %1013 = vrot.lane.b32.xlu0 %v616, 1
        %v1014 = vpop.permute.xlu0 %1013
        %vm1015 = vcmask 7168
        %v1016 = vsel %vm1015, %v1012, %v1014
        %v1020 = vmul.f32 %v323, %v1012
        %v1021 = vmul.f32 %v324, %v1016
        %v1022 = vmul.f32 %v1014, 0.0
        %1024 = vset.pattern.permute.xlu0 0
        %1025 = vperm.xlu0 %1024, %v331
        %v1026 = vpop.permute.xlu0 %1025
        %v1028 = vlaneseq
        %v1029 = vshrl.u32 %v1028, 7
        %v1030 = vsub.s32 0, %v1029
        %v1031 = vrot.slane %v1020, %v1030
        %v1032 = vlaneseq
        %v1033 = vshrl.u32 %v1032, 7
        %v1034 = vsub.s32 0, %v1033
        %v1035 = vrot.slane %v1021, %v1034
        %v1036 = vlaneseq
        %v1037 = vshrl.u32 %v1036, 7
        %v1038 = vsub.s32 0, %v1037
        %v1039 = vrot.slane %v1022, %v1038
        %v1040 = vmul.f32 %v1026, %v1031
        %v1041 = vmul.f32 %v1026, %v1035
        %v1042 = vmul.f32 %v1026, %v1039
        %1046 = vrot.lane.b32.xlu0 %v1040, 110
        %v1047 = vpop.permute.xlu0 %1046
        %1048 = vrot.lane.b32.xlu0 %v1041, 110
        %v1049 = vpop.permute.xlu0 %1048
        %1050 = vrot.lane.b32.xlu0 %v1042, 110
        %v1051 = vpop.permute.xlu0 %1050
        %vm1052 = vcmask 900096
        %v1053 = vsel %vm1052, %v1047, %v1049
        %v1054 = vsel %vm1052, %v1049, %v1051
        %v1058 = vadd.f32 %v1008, %v1047
        %v1059 = vadd.f32 %v1009, %v1053
        %v1060 = vadd.f32 %v1010, %v1054
        %1061 = vset.pattern.permute.xlu0 1
        %1062 = vperm.xlu0 %1061, %v331
        %v1063 = vpop.permute.xlu0 %1062
        %v1065 = vlaneseq
        %v1066 = vshrl.u32 %v1065, 7
        %v1067 = vsub.s32 1, %v1066
        %v1068 = vrot.slane %v1020, %v1067
        %v1069 = vlaneseq
        %v1070 = vshrl.u32 %v1069, 7
        %v1071 = vsub.s32 1, %v1070
        %v1072 = vrot.slane %v1021, %v1071
        %v1073 = vlaneseq
        %v1074 = vshrl.u32 %v1073, 7
        %v1075 = vsub.s32 1, %v1074
        %v1076 = vrot.slane %v1022, %v1075
        %v1077 = vmul.f32 %v1063, %v1068
        %v1078 = vmul.f32 %v1063, %v1072
        %v1079 = vmul.f32 %v1063, %v1076
        %1083 = vrot.lane.b32.xlu0 %v1077, 110
        %v1084 = vpop.permute.xlu0 %1083
        %1085 = vrot.lane.b32.xlu0 %v1078, 110
        %v1086 = vpop.permute.xlu0 %1085
        %1087 = vrot.lane.b32.xlu0 %v1079, 110
        %v1088 = vpop.permute.xlu0 %1087
        %v1089 = vsel %vm1052, %v1084, %v1086
        %v1090 = vsel %vm1052, %v1086, %v1088
        %v1094 = vadd.f32 %v1058, %v1084
        %v1095 = vadd.f32 %v1059, %v1089
        %v1096 = vadd.f32 %v1060, %v1090
        %1097 = vset.pattern.permute.xlu0 2
        %1098 = vperm.xlu0 %1097, %v331
        %v1099 = vpop.permute.xlu0 %1098
        %v1101 = vlaneseq
        %v1102 = vshrl.u32 %v1101, 7
        %v1103 = vsub.s32 2, %v1102
        %v1104 = vrot.slane %v1020, %v1103
        %v1105 = vlaneseq
        %v1106 = vshrl.u32 %v1105, 7
        %v1107 = vsub.s32 2, %v1106
        %v1108 = vrot.slane %v1021, %v1107
        %v1109 = vlaneseq
        %v1110 = vshrl.u32 %v1109, 7
        %v1111 = vsub.s32 2, %v1110
        %v1112 = vrot.slane %v1022, %v1111
        %v1113 = vmul.f32 %v1099, %v1104
        %v1114 = vmul.f32 %v1099, %v1108
        %v1115 = vmul.f32 %v1099, %v1112
        %1119 = vrot.lane.b32.xlu0 %v1113, 110
        %v1120 = vpop.permute.xlu0 %1119
        %1121 = vrot.lane.b32.xlu0 %v1114, 110
        %v1122 = vpop.permute.xlu0 %1121
        %1123 = vrot.lane.b32.xlu0 %v1115, 110
        %v1124 = vpop.permute.xlu0 %1123
        %v1125 = vsel %vm1052, %v1120, %v1122
        %v1126 = vsel %vm1052, %v1122, %v1124
        %v1130 = vadd.f32 %v1094, %v1120
        %v1131 = vadd.f32 %v1095, %v1125
        %v1132 = vadd.f32 %v1096, %v1126
        %1133 = vset.pattern.permute.xlu0 3
        %1134 = vperm.xlu0 %1133, %v331
        %v1135 = vpop.permute.xlu0 %1134
        %v1137 = vlaneseq
        %v1138 = vshrl.u32 %v1137, 7
        %v1139 = vsub.s32 3, %v1138
        %v1140 = vrot.slane %v1020, %v1139
        %v1141 = vlaneseq
        %v1142 = vshrl.u32 %v1141, 7
        %v1143 = vsub.s32 3, %v1142
        %v1144 = vrot.slane %v1021, %v1143
        %v1145 = vlaneseq
        %v1146 = vshrl.u32 %v1145, 7
        %v1147 = vsub.s32 3, %v1146
        %v1148 = vrot.slane %v1022, %v1147
        %v1149 = vmul.f32 %v1135, %v1140
        %v1150 = vmul.f32 %v1135, %v1144
        %v1151 = vmul.f32 %v1135, %v1148
        %1155 = vrot.lane.b32.xlu0 %v1149, 110
        %v1156 = vpop.permute.xlu0 %1155
        %1157 = vrot.lane.b32.xlu0 %v1150, 110
        %v1158 = vpop.permute.xlu0 %1157
        %1159 = vrot.lane.b32.xlu0 %v1151, 110
        %v1160 = vpop.permute.xlu0 %1159
        %v1161 = vsel %vm1052, %v1156, %v1158
        %v1162 = vsel %vm1052, %v1158, %v1160
        %v1166 = vadd.f32 %v1130, %v1156
        %v1167 = vadd.f32 %v1131, %v1161
        %v1168 = vadd.f32 %v1132, %v1162
        %1169 = vrot.lane.b32.xlu0 %v349, 15
        %v1170 = vpop.permute.xlu0 %1169
        %1171 = vrot.lane.b32.xlu0 %v353, 15
        %v1172 = vpop.permute.xlu0 %1171
        %vm1173 = vcmask 121856
        %v1174 = vsel %vm1173, %v1170, %v1172
        %v1178 = vmul.f32 %v323, %v1170
        %v1179 = vmul.f32 %v324, %v1174
        %v1180 = vmul.f32 %v1172, 0.0
        %1182 = vset.pattern.permute.xlu0 0
        %1183 = vperm.xlu0 %1182, %v332
        %v1184 = vpop.permute.xlu0 %1183
        %v1186 = vlaneseq
        %v1187 = vshrl.u32 %v1186, 7
        %v1188 = vsub.s32 0, %v1187
        %v1189 = vrot.slane %v1178, %v1188
        %v1190 = vlaneseq
        %v1191 = vshrl.u32 %v1190, 7
        %v1192 = vsub.s32 0, %v1191
        %v1193 = vrot.slane %v1179, %v1192
        %v1194 = vlaneseq
        %v1195 = vshrl.u32 %v1194, 7
        %v1196 = vsub.s32 0, %v1195
        %v1197 = vrot.slane %v1180, %v1196
        %v1198 = vmul.f32 %v1184, %v1189
        %v1199 = vmul.f32 %v1184, %v1193
        %v1200 = vmul.f32 %v1184, %v1197
        %1204 = vrot.lane.b32.xlu0 %v1198, 96
        %v1205 = vpop.permute.xlu0 %1204
        %1206 = vrot.lane.b32.xlu0 %v1199, 96
        %v1207 = vpop.permute.xlu0 %1206
        %1208 = vrot.lane.b32.xlu0 %v1200, 96
        %v1209 = vpop.permute.xlu0 %1208
        %vm1210 = vcmask 785408
        %v1211 = vsel %vm1210, %v1205, %v1207
        %v1212 = vsel %vm1210, %v1207, %v1209
        %v1216 = vadd.f32 %v1166, %v1205
        %v1217 = vadd.f32 %v1167, %v1211
        %v1218 = vadd.f32 %v1168, %v1212
        %1219 = vset.pattern.permute.xlu0 1
        %1220 = vperm.xlu0 %1219, %v332
        %v1221 = vpop.permute.xlu0 %1220
        %v1223 = vlaneseq
        %v1224 = vshrl.u32 %v1223, 7
        %v1225 = vsub.s32 1, %v1224
        %v1226 = vrot.slane %v1178, %v1225
        %v1227 = vlaneseq
        %v1228 = vshrl.u32 %v1227, 7
        %v1229 = vsub.s32 1, %v1228
        %v1230 = vrot.slane %v1179, %v1229
        %v1231 = vlaneseq
        %v1232 = vshrl.u32 %v1231, 7
        %v1233 = vsub.s32 1, %v1232
        %v1234 = vrot.slane %v1180, %v1233
        %v1235 = vmul.f32 %v1221, %v1226
        %v1236 = vmul.f32 %v1221, %v1230
        %v1237 = vmul.f32 %v1221, %v1234
        %1241 = vrot.lane.b32.xlu0 %v1235, 96
        %v1242 = vpop.permute.xlu0 %1241
        %1243 = vrot.lane.b32.xlu0 %v1236, 96
        %v1244 = vpop.permute.xlu0 %1243
        %1245 = vrot.lane.b32.xlu0 %v1237, 96
        %v1246 = vpop.permute.xlu0 %1245
        %v1247 = vsel %vm1210, %v1242, %v1244
        %v1248 = vsel %vm1210, %v1244, %v1246
        %v1252 = vadd.f32 %v1216, %v1242
        %v1253 = vadd.f32 %v1217, %v1247
        %v1254 = vadd.f32 %v1218, %v1248
        %1255 = vset.pattern.permute.xlu0 2
        %1256 = vperm.xlu0 %1255, %v332
        %v1257 = vpop.permute.xlu0 %1256
        %v1259 = vlaneseq
        %v1260 = vshrl.u32 %v1259, 7
        %v1261 = vsub.s32 2, %v1260
        %v1262 = vrot.slane %v1178, %v1261
        %v1263 = vlaneseq
        %v1264 = vshrl.u32 %v1263, 7
        %v1265 = vsub.s32 2, %v1264
        %v1266 = vrot.slane %v1179, %v1265
        %v1267 = vlaneseq
        %v1268 = vshrl.u32 %v1267, 7
        %v1269 = vsub.s32 2, %v1268
        %v1270 = vrot.slane %v1180, %v1269
        %v1271 = vmul.f32 %v1257, %v1262
        %v1272 = vmul.f32 %v1257, %v1266
        %v1273 = vmul.f32 %v1257, %v1270
        %1277 = vrot.lane.b32.xlu0 %v1271, 96
        %v1278 = vpop.permute.xlu0 %1277
        %1279 = vrot.lane.b32.xlu0 %v1272, 96
        %v1280 = vpop.permute.xlu0 %1279
        %1281 = vrot.lane.b32.xlu0 %v1273, 96
        %v1282 = vpop.permute.xlu0 %1281
        %v1283 = vsel %vm1210, %v1278, %v1280
        %v1284 = vsel %vm1210, %v1280, %v1282
        %v1288 = vadd.f32 %v1252, %v1278
        %v1289 = vadd.f32 %v1253, %v1283
        %v1290 = vadd.f32 %v1254, %v1284
        %1291 = vset.pattern.permute.xlu0 3
        %1292 = vperm.xlu0 %1291, %v332
        %v1293 = vpop.permute.xlu0 %1292
        %v1295 = vlaneseq
        %v1296 = vshrl.u32 %v1295, 7
        %v1297 = vsub.s32 3, %v1296
        %v1298 = vrot.slane %v1178, %v1297
        %v1299 = vlaneseq
        %v1300 = vshrl.u32 %v1299, 7
        %v1301 = vsub.s32 3, %v1300
        %v1302 = vrot.slane %v1179, %v1301
        %v1303 = vlaneseq
        %v1304 = vshrl.u32 %v1303, 7
        %v1305 = vsub.s32 3, %v1304
        %v1306 = vrot.slane %v1180, %v1305
        %v1307 = vmul.f32 %v1293, %v1298
        %v1308 = vmul.f32 %v1293, %v1302
        %v1309 = vmul.f32 %v1293, %v1306
        %1313 = vrot.lane.b32.xlu0 %v1307, 96
        %v1314 = vpop.permute.xlu0 %1313
        %1315 = vrot.lane.b32.xlu0 %v1308, 96
        %v1316 = vpop.permute.xlu0 %1315
        %1317 = vrot.lane.b32.xlu0 %v1309, 96
        %v1318 = vpop.permute.xlu0 %1317
        %v1319 = vsel %vm1210, %v1314, %v1316
        %v1320 = vsel %vm1210, %v1316, %v1318
        %v1324 = vadd.f32 %v1288, %v1314
        %v1325 = vadd.f32 %v1289, %v1319
        %v1326 = vadd.f32 %v1290, %v1320
        %1328 = vset.pattern.permute.xlu0 0
        %1329 = vperm.xlu0 %1328, %v333
        %v1330 = vpop.permute.xlu0 %1329
        %v1332 = vmul.f32 %v1330, %v468
        %v1333 = vmul.f32 %v1330, %v472
        %v1334 = vmul.f32 %v1330, 0.0
        %1338 = vrot.lane.b32.xlu0 %v1332, 95
        %v1339 = vpop.permute.xlu0 %1338
        %1340 = vrot.lane.b32.xlu0 %v1333, 95
        %v1341 = vpop.permute.xlu0 %1340
        %1342 = vrot.lane.b32.xlu0 %v1334, 95
        %v1343 = vpop.permute.xlu0 %1342
        %vm1344 = vcmask 777216
        %v1345 = vsel %vm1344, %v1339, %v1341
        %v1346 = vsel %vm1344, %v1341, %v1343
        %v1350 = vadd.f32 %v1324, %v1339
        %v1351 = vadd.f32 %v1325, %v1345
        %v1352 = vadd.f32 %v1326, %v1346
        %1353 = vset.pattern.permute.xlu0 1
        %1354 = vperm.xlu0 %1353, %v333
        %v1355 = vpop.permute.xlu0 %1354
        %v1357 = vmul.f32 %v1355, %v504
        %v1358 = vmul.f32 %v1355, %v508
        %v1359 = vmul.f32 %v1355, 0.0
        %1363 = vrot.lane.b32.xlu0 %v1357, 95
        %v1364 = vpop.permute.xlu0 %1363
        %1365 = vrot.lane.b32.xlu0 %v1358, 95
        %v1366 = vpop.permute.xlu0 %1365
        %1367 = vrot.lane.b32.xlu0 %v1359, 95
        %v1368 = vpop.permute.xlu0 %1367
        %v1369 = vsel %vm1344, %v1364, %v1366
        %v1370 = vsel %vm1344, %v1366, %v1368
        %v1374 = vadd.f32 %v1350, %v1364
        %v1375 = vadd.f32 %v1351, %v1369
        %v1376 = vadd.f32 %v1352, %v1370
        %1377 = vset.pattern.permute.xlu0 2
        %1378 = vperm.xlu0 %1377, %v333
        %v1379 = vpop.permute.xlu0 %1378
        %v1381 = vmul.f32 %v1379, %v539
        %v1382 = vmul.f32 %v1379, %v543
        %v1383 = vmul.f32 %v1379, 0.0
        %1387 = vrot.lane.b32.xlu0 %v1381, 95
        %v1388 = vpop.permute.xlu0 %1387
        %1389 = vrot.lane.b32.xlu0 %v1382, 95
        %v1390 = vpop.permute.xlu0 %1389
        %1391 = vrot.lane.b32.xlu0 %v1383, 95
        %v1392 = vpop.permute.xlu0 %1391
        %v1393 = vsel %vm1344, %v1388, %v1390
        %v1394 = vsel %vm1344, %v1390, %v1392
        %v1398 = vadd.f32 %v1374, %v1388
        %v1399 = vadd.f32 %v1375, %v1393
        %v1400 = vadd.f32 %v1376, %v1394
        %1401 = vset.pattern.permute.xlu0 3
        %1402 = vperm.xlu0 %1401, %v333
        %v1403 = vpop.permute.xlu0 %1402
        %v1405 = vmul.f32 %v1403, %v574
        %v1406 = vmul.f32 %v1403, %v578
        %v1407 = vmul.f32 %v1403, 0.0
        %1411 = vrot.lane.b32.xlu0 %v1405, 95
        %v1412 = vpop.permute.xlu0 %1411
        %1413 = vrot.lane.b32.xlu0 %v1406, 95
        %v1414 = vpop.permute.xlu0 %1413
        %1415 = vrot.lane.b32.xlu0 %v1407, 95
        %v1416 = vpop.permute.xlu0 %1415
        %v1417 = vsel %vm1344, %v1412, %v1414
        %v1418 = vsel %vm1344, %v1414, %v1416
        %v1422 = vadd.f32 %v1398, %v1412
        %v1423 = vadd.f32 %v1399, %v1417
        %v1424 = vadd.f32 %v1400, %v1418
        %1425 = vrot.lane.b32.xlu0 %v612, 17
        %v1426 = vpop.permute.xlu0 %1425
        %1427 = vrot.lane.b32.xlu0 %v616, 17
        %v1428 = vpop.permute.xlu0 %1427
        %vm1429 = vcmask 138240
        %v1430 = vsel %vm1429, %v1426, %v1428
        %v1434 = vmul.f32 %v323, %v1426
        %v1435 = vmul.f32 %v324, %v1430
        %v1436 = vmul.f32 %v1428, 0.0
        %1438 = vset.pattern.permute.xlu0 0
        %1439 = vperm.xlu0 %1438, %v334
        %v1440 = vpop.permute.xlu0 %1439
        %v1442 = vlaneseq
        %v1443 = vshrl.u32 %v1442, 7
        %v1444 = vsub.s32 0, %v1443
        %v1445 = vrot.slane %v1434, %v1444
        %v1446 = vlaneseq
        %v1447 = vshrl.u32 %v1446, 7
        %v1448 = vsub.s32 0, %v1447
        %v1449 = vrot.slane %v1435, %v1448
        %v1450 = vlaneseq
        %v1451 = vshrl.u32 %v1450, 7
        %v1452 = vsub.s32 0, %v1451
        %v1453 = vrot.slane %v1436, %v1452
        %v1454 = vmul.f32 %v1440, %v1445
        %v1455 = vmul.f32 %v1440, %v1449
        %v1456 = vmul.f32 %v1440, %v1453
        %1460 = vrot.lane.b32.xlu0 %v1454, 94
        %v1461 = vpop.permute.xlu0 %1460
        %1462 = vrot.lane.b32.xlu0 %v1455, 94
        %v1463 = vpop.permute.xlu0 %1462
        %1464 = vrot.lane.b32.xlu0 %v1456, 94
        %v1465 = vpop.permute.xlu0 %1464
        %vm1466 = vcmask 769024
        %v1467 = vsel %vm1466, %v1461, %v1463
        %v1468 = vsel %vm1466, %v1463, %v1465
        %v1472 = vadd.f32 %v1422, %v1461
        %v1473 = vadd.f32 %v1423, %v1467
        %v1474 = vadd.f32 %v1424, %v1468
        %1475 = vset.pattern.permute.xlu0 1
        %1476 = vperm.xlu0 %1475, %v334
        %v1477 = vpop.permute.xlu0 %1476
        %v1479 = vlaneseq
        %v1480 = vshrl.u32 %v1479, 7
        %v1481 = vsub.s32 1, %v1480
        %v1482 = vrot.slane %v1434, %v1481
        %v1483 = vlaneseq
        %v1484 = vshrl.u32 %v1483, 7
        %v1485 = vsub.s32 1, %v1484
        %v1486 = vrot.slane %v1435, %v1485
        %v1487 = vlaneseq
        %v1488 = vshrl.u32 %v1487, 7
        %v1489 = vsub.s32 1, %v1488
        %v1490 = vrot.slane %v1436, %v1489
        %v1491 = vmul.f32 %v1477, %v1482
        %v1492 = vmul.f32 %v1477, %v1486
        %v1493 = vmul.f32 %v1477, %v1490
        %1497 = vrot.lane.b32.xlu0 %v1491, 94
        %v1498 = vpop.permute.xlu0 %1497
        %1499 = vrot.lane.b32.xlu0 %v1492, 94
        %v1500 = vpop.permute.xlu0 %1499
        %1501 = vrot.lane.b32.xlu0 %v1493, 94
        %v1502 = vpop.permute.xlu0 %1501
        %v1503 = vsel %vm1466, %v1498, %v1500
        %v1504 = vsel %vm1466, %v1500, %v1502
        %v1508 = vadd.f32 %v1472, %v1498
        %v1509 = vadd.f32 %v1473, %v1503
        %v1510 = vadd.f32 %v1474, %v1504
        %1511 = vset.pattern.permute.xlu0 2
        %1512 = vperm.xlu0 %1511, %v334
        %v1513 = vpop.permute.xlu0 %1512
        %v1515 = vlaneseq
        %v1516 = vshrl.u32 %v1515, 7
        %v1517 = vsub.s32 2, %v1516
        %v1518 = vrot.slane %v1434, %v1517
        %v1519 = vlaneseq
        %v1520 = vshrl.u32 %v1519, 7
        %v1521 = vsub.s32 2, %v1520
        %v1522 = vrot.slane %v1435, %v1521
        %v1523 = vlaneseq
        %v1524 = vshrl.u32 %v1523, 7
        %v1525 = vsub.s32 2, %v1524
        %v1526 = vrot.slane %v1436, %v1525
        %v1527 = vmul.f32 %v1513, %v1518
        %v1528 = vmul.f32 %v1513, %v1522
        %v1529 = vmul.f32 %v1513, %v1526
        %1533 = vrot.lane.b32.xlu0 %v1527, 94
        %v1534 = vpop.permute.xlu0 %1533
        %1535 = vrot.lane.b32.xlu0 %v1528, 94
        %v1536 = vpop.permute.xlu0 %1535
        %1537 = vrot.lane.b32.xlu0 %v1529, 94
        %v1538 = vpop.permute.xlu0 %1537
        %v1539 = vsel %vm1466, %v1534, %v1536
        %v1540 = vsel %vm1466, %v1536, %v1538
        %v1544 = vadd.f32 %v1508, %v1534
        %v1545 = vadd.f32 %v1509, %v1539
        %v1546 = vadd.f32 %v1510, %v1540
        %1547 = vset.pattern.permute.xlu0 3
        %1548 = vperm.xlu0 %1547, %v334
        %v1549 = vpop.permute.xlu0 %1548
        %v1551 = vlaneseq
        %v1552 = vshrl.u32 %v1551, 7
        %v1553 = vsub.s32 3, %v1552
        %v1554 = vrot.slane %v1434, %v1553
        %v1555 = vlaneseq
        %v1556 = vshrl.u32 %v1555, 7
        %v1557 = vsub.s32 3, %v1556
        %v1558 = vrot.slane %v1435, %v1557
        %v1559 = vlaneseq
        %v1560 = vshrl.u32 %v1559, 7
        %v1561 = vsub.s32 3, %v1560
        %v1562 = vrot.slane %v1436, %v1561
        %v1563 = vmul.f32 %v1549, %v1554
        %v1564 = vmul.f32 %v1549, %v1558
        %v1565 = vmul.f32 %v1549, %v1562
        %1569 = vrot.lane.b32.xlu0 %v1563, 94
        %v1570 = vpop.permute.xlu0 %1569
        %1571 = vrot.lane.b32.xlu0 %v1564, 94
        %v1572 = vpop.permute.xlu0 %1571
        %1573 = vrot.lane.b32.xlu0 %v1565, 94
        %v1574 = vpop.permute.xlu0 %1573
        %v1575 = vsel %vm1466, %v1570, %v1572
        %v1576 = vsel %vm1466, %v1572, %v1574
        %v1580 = vadd.f32 %v1544, %v1570
        %v1581 = vadd.f32 %v1545, %v1575
        %v1582 = vadd.f32 %v1546, %v1576
        %v1583 = vld [vmem:[%s3] sm:$0xf]
        %1585 = vset.pattern.permute.xlu0 0
        %1586 = vperm.xlu0 %1585, %v1583
        %v1587 = vpop.permute.xlu0 %1586
        %v1589 = vadd.f32 %v1580, %v1587
        %v1590 = vadd.f32 %v1581, %v1587
        %v1591 = vadd.f32 %v1582, %v1587
        %vm1592 = vcmp.gt.f32.partialorder %v1589, 0.0
        %vm1593 = vcmp.gt.f32.partialorder %v1590, 0.0
        %vm1594 = vcmp.gt.f32.partialorder %v1591, 0.0
        %v1595 = vmin.f32 %v1589, 0.0
        %v1596 = vmin.f32 %v1590, 0.0
        %v1597 = vmin.f32 %v1591, 0.0
        %v1598 = vmul.f32 %v1595, 1.442695
        %v1599 = vpow.pop %v1598
        %v1600 = vmul.f32 %v1596, 1.442695
        %v1601 = vpow.pop %v1600
        %v1602 = vmul.f32 %v1597, 1.442695
        %v1603 = vpow.pop %v1602
        %v1604 = vsub.f32 %v1599, 1.0
        %v1605 = vsub.f32 %v1601, 1.0
        %v1606 = vsub.f32 %v1603, 1.0
        %v1607 = vsel %vm1592, %v1589, %v1604
        %v1608 = vsel %vm1593, %v1590, %v1605
        %v1609 = vsel %vm1594, %v1591, %v1606
        %1613 = vrot.lane.b32.xlu0 %v1607, 17
        %v1614 = vpop.permute.xlu0 %1613
        %1615 = vrot.lane.b32.xlu0 %v1608, 17
        %v1616 = vpop.permute.xlu0 %1615
        %1617 = vrot.lane.b32.xlu0 %v1609, 17
        %v1618 = vpop.permute.xlu0 %1617
        %v1619 = vsel %vm1429, %v1614, %v1616
        %v1620 = vsel %vm1429, %v1616, %v1618
        %v1623 = vld [vmem:[%s4] sm:$0xf]
        %v1624 = vld [vmem:[%s4 + $0x4] sm:$0xf]
        %v1625 = vld [vmem:[%s4 + $0x8] sm:$0xf]
        %v1626 = vld [vmem:[%s4 + $0xc] sm:$0xf]
        %v1627 = vld [vmem:[%s4 + $0x10] sm:$0xf]
        %v1628 = vld [vmem:[%s4 + $0x14] sm:$0xf]
        %v1629 = vld [vmem:[%s4 + $0x18] sm:$0xf]
        %v1630 = vld [vmem:[%s4 + $0x1c] sm:$0xf]
        %v1631 = vld [vmem:[%s4 + $0x20] sm:$0xf]
        %v1632 = vmul.f32 %v1619, %v361
        %v1633 = vmul.f32 %v1620, %v359
        %1635 = vset.pattern.permute.xlu0 0
        %1636 = vperm.xlu0 %1635, %v1623
        %v1637 = vpop.permute.xlu0 %1636
        %v1639 = vlaneseq
        %v1640 = vshrl.u32 %v1639, 7
        %v1641 = vsub.s32 0, %v1640
        %v1642 = vrot.slane %v1632, %v1641
        %v1643 = vlaneseq
        %v1644 = vshrl.u32 %v1643, 7
        %v1645 = vsub.s32 0, %v1644
        %v1646 = vrot.slane %v1633, %v1645
        %v1647 = vmul.f32 %v1637, %v376
        %v1648 = vmul.f32 %v1637, %v1642
        %v1649 = vmul.f32 %v1637, %v1646
        %v1650 = vadd.f32 %v1647, 0.0
        %v1651 = vadd.f32 %v1648, 0.0
        %v1652 = vadd.f32 %v1649, 0.0
        %1653 = vset.pattern.permute.xlu0 1
        %1654 = vperm.xlu0 %1653, %v1623
        %v1655 = vpop.permute.xlu0 %1654
        %v1657 = vlaneseq
        %v1658 = vshrl.u32 %v1657, 7
        %v1659 = vsub.s32 1, %v1658
        %v1660 = vrot.slane %v1632, %v1659
        %v1661 = vlaneseq
        %v1662 = vshrl.u32 %v1661, 7
        %v1663 = vsub.s32 1, %v1662
        %v1664 = vrot.slane %v1633, %v1663
        %v1665 = vmul.f32 %v1655, %v398
        %v1666 = vmul.f32 %v1655, %v1660
        %v1667 = vmul.f32 %v1655, %v1664
        %v1668 = vadd.f32 %v1650, %v1665
        %v1669 = vadd.f32 %v1651, %v1666
        %v1670 = vadd.f32 %v1652, %v1667
        %1671 = vset.pattern.permute.xlu0 2
        %1672 = vperm.xlu0 %1671, %v1623
        %v1673 = vpop.permute.xlu0 %1672
        %v1675 = vlaneseq
        %v1676 = vshrl.u32 %v1675, 7
        %v1677 = vsub.s32 2, %v1676
        %v1678 = vrot.slane %v1632, %v1677
        %v1679 = vlaneseq
        %v1680 = vshrl.u32 %v1679, 7
        %v1681 = vsub.s32 2, %v1680
        %v1682 = vrot.slane %v1633, %v1681
        %v1683 = vmul.f32 %v1673, %v420
        %v1684 = vmul.f32 %v1673, %v1678
        %v1685 = vmul.f32 %v1673, %v1682
        %v1686 = vadd.f32 %v1668, %v1683
        %v1687 = vadd.f32 %v1669, %v1684
        %v1688 = vadd.f32 %v1670, %v1685
        %1689 = vset.pattern.permute.xlu0 3
        %1690 = vperm.xlu0 %1689, %v1623
        %v1691 = vpop.permute.xlu0 %1690
        %v1693 = vlaneseq
        %v1694 = vshrl.u32 %v1693, 7
        %v1695 = vsub.s32 3, %v1694
        %v1696 = vrot.slane %v1632, %v1695
        %v1697 = vlaneseq
        %v1698 = vshrl.u32 %v1697, 7
        %v1699 = vsub.s32 3, %v1698
        %v1700 = vrot.slane %v1633, %v1699
        %v1701 = vmul.f32 %v1691, %v442
        %v1702 = vmul.f32 %v1691, %v1696
        %v1703 = vmul.f32 %v1691, %v1700
        %v1704 = vadd.f32 %v1686, %v1701
        %v1705 = vadd.f32 %v1687, %v1702
        %v1706 = vadd.f32 %v1688, %v1703
        %1708 = vset.pattern.permute.xlu0 0
        %1709 = vperm.xlu0 %1708, %v1624
        %v1710 = vpop.permute.xlu0 %1709
        %v1712 = vlaneseq
        %v1713 = vshrl.u32 %v1712, 7
        %v1714 = vsub.s32 0, %v1713
        %v1715 = vrot.slane %v1619, %v1714
        %v1716 = vlaneseq
        %v1717 = vshrl.u32 %v1716, 7
        %v1718 = vsub.s32 0, %v1717
        %v1719 = vrot.slane %v1620, %v1718
        %v1720 = vmul.f32 %v1710, 0.0
        %v1721 = vmul.f32 %v1710, %v1715
        %v1722 = vmul.f32 %v1710, %v1719
        %1726 = vrot.lane.b32.xlu0 %v1720, 127
        %v1727 = vpop.permute.xlu0 %1726
        %1728 = vrot.lane.b32.xlu0 %v1721, 127
        %v1729 = vpop.permute.xlu0 %1728
        %1730 = vrot.lane.b32.xlu0 %v1722, 127
        %v1731 = vpop.permute.xlu0 %1730
        %v1732 = vsel %vm485, %v1727, %v1729
        %v1733 = vsel %vm485, %v1729, %v1731
        %v1737 = vadd.f32 %v1704, %v1732
        %v1738 = vadd.f32 %v1705, %v1733
        %v1739 = vadd.f32 %v1706, %v1731
        %1740 = vset.pattern.permute.xlu0 1
        %1741 = vperm.xlu0 %1740, %v1624
        %v1742 = vpop.permute.xlu0 %1741
        %v1744 = vlaneseq
        %v1745 = vshrl.u32 %v1744, 7
        %v1746 = vsub.s32 1, %v1745
        %v1747 = vrot.slane %v1619, %v1746
        %v1748 = vlaneseq
        %v1749 = vshrl.u32 %v1748, 7
        %v1750 = vsub.s32 1, %v1749
        %v1751 = vrot.slane %v1620, %v1750
        %v1752 = vmul.f32 %v1742, 0.0
        %v1753 = vmul.f32 %v1742, %v1747
        %v1754 = vmul.f32 %v1742, %v1751
        %1758 = vrot.lane.b32.xlu0 %v1752, 127
        %v1759 = vpop.permute.xlu0 %1758
        %1760 = vrot.lane.b32.xlu0 %v1753, 127
        %v1761 = vpop.permute.xlu0 %1760
        %1762 = vrot.lane.b32.xlu0 %v1754, 127
        %v1763 = vpop.permute.xlu0 %1762
        %v1764 = vsel %vm485, %v1759, %v1761
        %v1765 = vsel %vm485, %v1761, %v1763
        %v1769 = vadd.f32 %v1737, %v1764
        %v1770 = vadd.f32 %v1738, %v1765
        %v1771 = vadd.f32 %v1739, %v1763
        %1772 = vset.pattern.permute.xlu0 2
        %1773 = vperm.xlu0 %1772, %v1624
        %v1774 = vpop.permute.xlu0 %1773
        %v1776 = vlaneseq
        %v1777 = vshrl.u32 %v1776, 7
        %v1778 = vsub.s32 2, %v1777
        %v1779 = vrot.slane %v1619, %v1778
        %v1780 = vlaneseq
        %v1781 = vshrl.u32 %v1780, 7
        %v1782 = vsub.s32 2, %v1781
        %v1783 = vrot.slane %v1620, %v1782
        %v1784 = vmul.f32 %v1774, 0.0
        %v1785 = vmul.f32 %v1774, %v1779
        %v1786 = vmul.f32 %v1774, %v1783
        %1790 = vrot.lane.b32.xlu0 %v1784, 127
        %v1791 = vpop.permute.xlu0 %1790
        %1792 = vrot.lane.b32.xlu0 %v1785, 127
        %v1793 = vpop.permute.xlu0 %1792
        %1794 = vrot.lane.b32.xlu0 %v1786, 127
        %v1795 = vpop.permute.xlu0 %1794
        %v1796 = vsel %vm485, %v1791, %v1793
        %v1797 = vsel %vm485, %v1793, %v1795
        %v1801 = vadd.f32 %v1769, %v1796
        %v1802 = vadd.f32 %v1770, %v1797
        %v1803 = vadd.f32 %v1771, %v1795
        %1804 = vset.pattern.permute.xlu0 3
        %1805 = vperm.xlu0 %1804, %v1624
        %v1806 = vpop.permute.xlu0 %1805
        %v1808 = vlaneseq
        %v1809 = vshrl.u32 %v1808, 7
        %v1810 = vsub.s32 3, %v1809
        %v1811 = vrot.slane %v1619, %v1810
        %v1812 = vlaneseq
        %v1813 = vshrl.u32 %v1812, 7
        %v1814 = vsub.s32 3, %v1813
        %v1815 = vrot.slane %v1620, %v1814
        %v1816 = vmul.f32 %v1806, 0.0
        %v1817 = vmul.f32 %v1806, %v1811
        %v1818 = vmul.f32 %v1806, %v1815
        %1822 = vrot.lane.b32.xlu0 %v1816, 127
        %v1823 = vpop.permute.xlu0 %1822
        %1824 = vrot.lane.b32.xlu0 %v1817, 127
        %v1825 = vpop.permute.xlu0 %1824
        %1826 = vrot.lane.b32.xlu0 %v1818, 127
        %v1827 = vpop.permute.xlu0 %1826
        %v1828 = vsel %vm485, %v1823, %v1825
        %v1829 = vsel %vm485, %v1825, %v1827
        %v1833 = vadd.f32 %v1801, %v1828
        %v1834 = vadd.f32 %v1802, %v1829
        %v1835 = vadd.f32 %v1803, %v1827
        %v1836 = vmul.f32 %v1619, %v624
        %v1837 = vmul.f32 %v1620, %v622
        %1839 = vset.pattern.permute.xlu0 0
        %1840 = vperm.xlu0 %1839, %v1625
        %v1841 = vpop.permute.xlu0 %1840
        %v1843 = vlaneseq
        %v1844 = vshrl.u32 %v1843, 7
        %v1845 = vsub.s32 0, %v1844
        %v1846 = vrot.slane %v1836, %v1845
        %v1847 = vlaneseq
        %v1848 = vshrl.u32 %v1847, 7
        %v1849 = vsub.s32 0, %v1848
        %v1850 = vrot.slane %v1837, %v1849
        %v1851 = vmul.f32 %v1841, %v639
        %v1852 = vmul.f32 %v1841, %v1846
        %v1853 = vmul.f32 %v1841, %v1850
        %1857 = vrot.lane.b32.xlu0 %v1851, 126
        %v1858 = vpop.permute.xlu0 %1857
        %1859 = vrot.lane.b32.xlu0 %v1852, 126
        %v1860 = vpop.permute.xlu0 %1859
        %1861 = vrot.lane.b32.xlu0 %v1853, 126
        %v1862 = vpop.permute.xlu0 %1861
        %v1863 = vsel %vm660, %v1858, %v1860
        %v1864 = vsel %vm660, %v1860, %v1862
        %v1868 = vadd.f32 %v1833, %v1863
        %v1869 = vadd.f32 %v1834, %v1864
        %v1870 = vadd.f32 %v1835, %v1862
        %1871 = vset.pattern.permute.xlu0 1
        %1872 = vperm.xlu0 %1871, %v1625
        %v1873 = vpop.permute.xlu0 %1872
        %v1875 = vlaneseq
        %v1876 = vshrl.u32 %v1875, 7
        %v1877 = vsub.s32 1, %v1876
        %v1878 = vrot.slane %v1836, %v1877
        %v1879 = vlaneseq
        %v1880 = vshrl.u32 %v1879, 7
        %v1881 = vsub.s32 1, %v1880
        %v1882 = vrot.slane %v1837, %v1881
        %v1883 = vmul.f32 %v1873, %v676
        %v1884 = vmul.f32 %v1873, %v1878
        %v1885 = vmul.f32 %v1873, %v1882
        %1889 = vrot.lane.b32.xlu0 %v1883, 126
        %v1890 = vpop.permute.xlu0 %1889
        %1891 = vrot.lane.b32.xlu0 %v1884, 126
        %v1892 = vpop.permute.xlu0 %1891
        %1893 = vrot.lane.b32.xlu0 %v1885, 126
        %v1894 = vpop.permute.xlu0 %1893
        %v1895 = vsel %vm660, %v1890, %v1892
        %v1896 = vsel %vm660, %v1892, %v1894
        %v1900 = vadd.f32 %v1868, %v1895
        %v1901 = vadd.f32 %v1869, %v1896
        %v1902 = vadd.f32 %v1870, %v1894
        %1903 = vset.pattern.permute.xlu0 2
        %1904 = vperm.xlu0 %1903, %v1625
        %v1905 = vpop.permute.xlu0 %1904
        %v1907 = vlaneseq
        %v1908 = vshrl.u32 %v1907, 7
        %v1909 = vsub.s32 2, %v1908
        %v1910 = vrot.slane %v1836, %v1909
        %v1911 = vlaneseq
        %v1912 = vshrl.u32 %v1911, 7
        %v1913 = vsub.s32 2, %v1912
        %v1914 = vrot.slane %v1837, %v1913
        %v1915 = vmul.f32 %v1905, %v712
        %v1916 = vmul.f32 %v1905, %v1910
        %v1917 = vmul.f32 %v1905, %v1914
        %1921 = vrot.lane.b32.xlu0 %v1915, 126
        %v1922 = vpop.permute.xlu0 %1921
        %1923 = vrot.lane.b32.xlu0 %v1916, 126
        %v1924 = vpop.permute.xlu0 %1923
        %1925 = vrot.lane.b32.xlu0 %v1917, 126
        %v1926 = vpop.permute.xlu0 %1925
        %v1927 = vsel %vm660, %v1922, %v1924
        %v1928 = vsel %vm660, %v1924, %v1926
        %v1932 = vadd.f32 %v1900, %v1927
        %v1933 = vadd.f32 %v1901, %v1928
        %v1934 = vadd.f32 %v1902, %v1926
        %1935 = vset.pattern.permute.xlu0 3
        %1936 = vperm.xlu0 %1935, %v1625
        %v1937 = vpop.permute.xlu0 %1936
        %v1939 = vlaneseq
        %v1940 = vshrl.u32 %v1939, 7
        %v1941 = vsub.s32 3, %v1940
        %v1942 = vrot.slane %v1836, %v1941
        %v1943 = vlaneseq
        %v1944 = vshrl.u32 %v1943, 7
        %v1945 = vsub.s32 3, %v1944
        %v1946 = vrot.slane %v1837, %v1945
        %v1947 = vmul.f32 %v1937, %v748
        %v1948 = vmul.f32 %v1937, %v1942
        %v1949 = vmul.f32 %v1937, %v1946
        %1953 = vrot.lane.b32.xlu0 %v1947, 126
        %v1954 = vpop.permute.xlu0 %1953
        %1955 = vrot.lane.b32.xlu0 %v1948, 126
        %v1956 = vpop.permute.xlu0 %1955
        %1957 = vrot.lane.b32.xlu0 %v1949, 126
        %v1958 = vpop.permute.xlu0 %1957
        %v1959 = vsel %vm660, %v1954, %v1956
        %v1960 = vsel %vm660, %v1956, %v1958
        %v1964 = vadd.f32 %v1932, %v1959
        %v1965 = vadd.f32 %v1933, %v1960
        %v1966 = vadd.f32 %v1934, %v1958
        %v1967 = vmul.f32 %v1619, %v781
        %v1968 = vmul.f32 %v1620, %v780
        %1970 = vset.pattern.permute.xlu0 0
        %1971 = vperm.xlu0 %1970, %v1626
        %v1972 = vpop.permute.xlu0 %1971
        %v1974 = vlaneseq
        %v1975 = vshrl.u32 %v1974, 7
        %v1976 = vsub.s32 0, %v1975
        %v1977 = vrot.slane %v1967, %v1976
        %v1978 = vlaneseq
        %v1979 = vshrl.u32 %v1978, 7
        %v1980 = vsub.s32 0, %v1979
        %v1981 = vrot.slane %v1968, %v1980
        %v1982 = vmul.f32 %v1972, %v796
        %v1983 = vmul.f32 %v1972, %v1977
        %v1984 = vmul.f32 %v1972, %v1981
        %1988 = vrot.lane.b32.xlu0 %v1982, 112
        %v1989 = vpop.permute.xlu0 %1988
        %1990 = vrot.lane.b32.xlu0 %v1983, 112
        %v1991 = vpop.permute.xlu0 %1990
        %1992 = vrot.lane.b32.xlu0 %v1984, 112
        %v1993 = vpop.permute.xlu0 %1992
        %v1994 = vsel %vm817, %v1989, %v1991
        %v1995 = vsel %vm817, %v1991, %v1993
        %v1999 = vadd.f32 %v1964, %v1994
        %v2000 = vadd.f32 %v1965, %v1995
        %v2001 = vadd.f32 %v1966, %v1993
        %2002 = vset.pattern.permute.xlu0 1
        %2003 = vperm.xlu0 %2002, %v1626
        %v2004 = vpop.permute.xlu0 %2003
        %v2006 = vlaneseq
        %v2007 = vshrl.u32 %v2006, 7
        %v2008 = vsub.s32 1, %v2007
        %v2009 = vrot.slane %v1967, %v2008
        %v2010 = vlaneseq
        %v2011 = vshrl.u32 %v2010, 7
        %v2012 = vsub.s32 1, %v2011
        %v2013 = vrot.slane %v1968, %v2012
        %v2014 = vmul.f32 %v2004, %v833
        %v2015 = vmul.f32 %v2004, %v2009
        %v2016 = vmul.f32 %v2004, %v2013
        %2020 = vrot.lane.b32.xlu0 %v2014, 112
        %v2021 = vpop.permute.xlu0 %2020
        %2022 = vrot.lane.b32.xlu0 %v2015, 112
        %v2023 = vpop.permute.xlu0 %2022
        %2024 = vrot.lane.b32.xlu0 %v2016, 112
        %v2025 = vpop.permute.xlu0 %2024
        %v2026 = vsel %vm817, %v2021, %v2023
        %v2027 = vsel %vm817, %v2023, %v2025
        %v2031 = vadd.f32 %v1999, %v2026
        %v2032 = vadd.f32 %v2000, %v2027
        %v2033 = vadd.f32 %v2001, %v2025
        %2034 = vset.pattern.permute.xlu0 2
        %2035 = vperm.xlu0 %2034, %v1626
        %v2036 = vpop.permute.xlu0 %2035
        %v2038 = vlaneseq
        %v2039 = vshrl.u32 %v2038, 7
        %v2040 = vsub.s32 2, %v2039
        %v2041 = vrot.slane %v1967, %v2040
        %v2042 = vlaneseq
        %v2043 = vshrl.u32 %v2042, 7
        %v2044 = vsub.s32 2, %v2043
        %v2045 = vrot.slane %v1968, %v2044
        %v2046 = vmul.f32 %v2036, %v869
        %v2047 = vmul.f32 %v2036, %v2041
        %v2048 = vmul.f32 %v2036, %v2045
        %2052 = vrot.lane.b32.xlu0 %v2046, 112
        %v2053 = vpop.permute.xlu0 %2052
        %2054 = vrot.lane.b32.xlu0 %v2047, 112
        %v2055 = vpop.permute.xlu0 %2054
        %2056 = vrot.lane.b32.xlu0 %v2048, 112
        %v2057 = vpop.permute.xlu0 %2056
        %v2058 = vsel %vm817, %v2053, %v2055
        %v2059 = vsel %vm817, %v2055, %v2057
        %v2063 = vadd.f32 %v2031, %v2058
        %v2064 = vadd.f32 %v2032, %v2059
        %v2065 = vadd.f32 %v2033, %v2057
        %2066 = vset.pattern.permute.xlu0 3
        %2067 = vperm.xlu0 %2066, %v1626
        %v2068 = vpop.permute.xlu0 %2067
        %v2070 = vlaneseq
        %v2071 = vshrl.u32 %v2070, 7
        %v2072 = vsub.s32 3, %v2071
        %v2073 = vrot.slane %v1967, %v2072
        %v2074 = vlaneseq
        %v2075 = vshrl.u32 %v2074, 7
        %v2076 = vsub.s32 3, %v2075
        %v2077 = vrot.slane %v1968, %v2076
        %v2078 = vmul.f32 %v2068, %v905
        %v2079 = vmul.f32 %v2068, %v2073
        %v2080 = vmul.f32 %v2068, %v2077
        %2084 = vrot.lane.b32.xlu0 %v2078, 112
        %v2085 = vpop.permute.xlu0 %2084
        %2086 = vrot.lane.b32.xlu0 %v2079, 112
        %v2087 = vpop.permute.xlu0 %2086
        %2088 = vrot.lane.b32.xlu0 %v2080, 112
        %v2089 = vpop.permute.xlu0 %2088
        %v2090 = vsel %vm817, %v2085, %v2087
        %v2091 = vsel %vm817, %v2087, %v2089
        %v2095 = vadd.f32 %v2063, %v2090
        %v2096 = vadd.f32 %v2064, %v2091
        %v2097 = vadd.f32 %v2065, %v2089
        %2099 = vset.pattern.permute.xlu0 0
        %2100 = vperm.xlu0 %2099, %v1627
        %v2101 = vpop.permute.xlu0 %2100
        %v2103 = vlaneseq
        %v2104 = vshrl.u32 %v2103, 7
        %v2105 = vsub.s32 0, %v2104
        %v2106 = vrot.slane %v1607, %v2105
        %v2107 = vlaneseq
        %v2108 = vshrl.u32 %v2107, 7
        %v2109 = vsub.s32 0, %v2108
        %v2110 = vrot.slane %v1608, %v2109
        %v2111 = vlaneseq
        %v2112 = vshrl.u32 %v2111, 7
        %v2113 = vsub.s32 0, %v2112
        %v2114 = vrot.slane %v1609, %v2113
        %v2115 = vmul.f32 %v2101, %v2106
        %v2116 = vmul.f32 %v2101, %v2110
        %v2117 = vmul.f32 %v2101, %v2114
        %v2118 = vadd.f32 %v2095, %v2115
        %v2119 = vadd.f32 %v2096, %v2116
        %v2120 = vadd.f32 %v2097, %v2117
        %2121 = vset.pattern.permute.xlu0 1
        %2122 = vperm.xlu0 %2121, %v1627
        %v2123 = vpop.permute.xlu0 %2122
        %v2125 = vlaneseq
        %v2126 = vshrl.u32 %v2125, 7
        %v2127 = vsub.s32 1, %v2126
        %v2128 = vrot.slane %v1607, %v2127
        %v2129 = vlaneseq
        %v2130 = vshrl.u32 %v2129, 7
        %v2131 = vsub.s32 1, %v2130
        %v2132 = vrot.slane %v1608, %v2131
        %v2133 = vlaneseq
        %v2134 = vshrl.u32 %v2133, 7
        %v2135 = vsub.s32 1, %v2134
        %v2136 = vrot.slane %v1609, %v2135
        %v2137 = vmul.f32 %v2123, %v2128
        %v2138 = vmul.f32 %v2123, %v2132
        %v2139 = vmul.f32 %v2123, %v2136
        %v2140 = vadd.f32 %v2118, %v2137
        %v2141 = vadd.f32 %v2119, %v2138
        %v2142 = vadd.f32 %v2120, %v2139
        %2143 = vset.pattern.permute.xlu0 2
        %2144 = vperm.xlu0 %2143, %v1627
        %v2145 = vpop.permute.xlu0 %2144
        %v2147 = vlaneseq
        %v2148 = vshrl.u32 %v2147, 7
        %v2149 = vsub.s32 2, %v2148
        %v2150 = vrot.slane %v1607, %v2149
        %v2151 = vlaneseq
        %v2152 = vshrl.u32 %v2151, 7
        %v2153 = vsub.s32 2, %v2152
        %v2154 = vrot.slane %v1608, %v2153
        %v2155 = vlaneseq
        %v2156 = vshrl.u32 %v2155, 7
        %v2157 = vsub.s32 2, %v2156
        %v2158 = vrot.slane %v1609, %v2157
        %v2159 = vmul.f32 %v2145, %v2150
        %v2160 = vmul.f32 %v2145, %v2154
        %v2161 = vmul.f32 %v2145, %v2158
        %v2162 = vadd.f32 %v2140, %v2159
        %v2163 = vadd.f32 %v2141, %v2160
        %v2164 = vadd.f32 %v2142, %v2161
        %2165 = vset.pattern.permute.xlu0 3
        %2166 = vperm.xlu0 %2165, %v1627
        %v2167 = vpop.permute.xlu0 %2166
        %v2169 = vlaneseq
        %v2170 = vshrl.u32 %v2169, 7
        %v2171 = vsub.s32 3, %v2170
        %v2172 = vrot.slane %v1607, %v2171
        %v2173 = vlaneseq
        %v2174 = vshrl.u32 %v2173, 7
        %v2175 = vsub.s32 3, %v2174
        %v2176 = vrot.slane %v1608, %v2175
        %v2177 = vlaneseq
        %v2178 = vshrl.u32 %v2177, 7
        %v2179 = vsub.s32 3, %v2178
        %v2180 = vrot.slane %v1609, %v2179
        %v2181 = vmul.f32 %v2167, %v2172
        %v2182 = vmul.f32 %v2167, %v2176
        %v2183 = vmul.f32 %v2167, %v2180
        %v2184 = vadd.f32 %v2162, %v2181
        %v2185 = vadd.f32 %v2163, %v2182
        %v2186 = vadd.f32 %v2164, %v2183
        %v2187 = vmul.f32 %v1619, %v1012
        %v2188 = vmul.f32 %v1620, %v1016
        %2190 = vset.pattern.permute.xlu0 0
        %2191 = vperm.xlu0 %2190, %v1628
        %v2192 = vpop.permute.xlu0 %2191
        %v2194 = vlaneseq
        %v2195 = vshrl.u32 %v2194, 7
        %v2196 = vsub.s32 0, %v2195
        %v2197 = vrot.slane %v2187, %v2196
        %v2198 = vlaneseq
        %v2199 = vshrl.u32 %v2198, 7
        %v2200 = vsub.s32 0, %v2199
        %v2201 = vrot.slane %v2188, %v2200
        %v2202 = vmul.f32 %v2192, %v2197
        %v2203 = vmul.f32 %v2192, %v2201
        %v2204 = vmul.f32 %v2192, %v1039
        %2208 = vrot.lane.b32.xlu0 %v2202, 110
        %v2209 = vpop.permute.xlu0 %2208
        %2210 = vrot.lane.b32.xlu0 %v2203, 110
        %v2211 = vpop.permute.xlu0 %2210
        %2212 = vrot.lane.b32.xlu0 %v2204, 110
        %v2213 = vpop.permute.xlu0 %2212
        %v2214 = vsel %vm1052, %v2209, %v2211
        %v2215 = vsel %vm1052, %v2211, %v2213
        %v2219 = vadd.f32 %v2184, %v2209
        %v2220 = vadd.f32 %v2185, %v2214
        %v2221 = vadd.f32 %v2186, %v2215
        %2222 = vset.pattern.permute.xlu0 1
        %2223 = vperm.xlu0 %2222, %v1628
        %v2224 = vpop.permute.xlu0 %2223
        %v2226 = vlaneseq
        %v2227 = vshrl.u32 %v2226, 7
        %v2228 = vsub.s32 1, %v2227
        %v2229 = vrot.slane %v2187, %v2228
        %v2230 = vlaneseq
        %v2231 = vshrl.u32 %v2230, 7
        %v2232 = vsub.s32 1, %v2231
        %v2233 = vrot.slane %v2188, %v2232
        %v2234 = vmul.f32 %v2224, %v2229
        %v2235 = vmul.f32 %v2224, %v2233
        %v2236 = vmul.f32 %v2224, %v1076
        %2240 = vrot.lane.b32.xlu0 %v2234, 110
        %v2241 = vpop.permute.xlu0 %2240
        %2242 = vrot.lane.b32.xlu0 %v2235, 110
        %v2243 = vpop.permute.xlu0 %2242
        %2244 = vrot.lane.b32.xlu0 %v2236, 110
        %v2245 = vpop.permute.xlu0 %2244
        %v2246 = vsel %vm1052, %v2241, %v2243
        %v2247 = vsel %vm1052, %v2243, %v2245
        %v2251 = vadd.f32 %v2219, %v2241
        %v2252 = vadd.f32 %v2220, %v2246
        %v2253 = vadd.f32 %v2221, %v2247
        %2254 = vset.pattern.permute.xlu0 2
        %2255 = vperm.xlu0 %2254, %v1628
        %v2256 = vpop.permute.xlu0 %2255
        %v2258 = vlaneseq
        %v2259 = vshrl.u32 %v2258, 7
        %v2260 = vsub.s32 2, %v2259
        %v2261 = vrot.slane %v2187, %v2260
        %v2262 = vlaneseq
        %v2263 = vshrl.u32 %v2262, 7
        %v2264 = vsub.s32 2, %v2263
        %v2265 = vrot.slane %v2188, %v2264
        %v2266 = vmul.f32 %v2256, %v2261
        %v2267 = vmul.f32 %v2256, %v2265
        %v2268 = vmul.f32 %v2256, %v1112
        %2272 = vrot.lane.b32.xlu0 %v2266, 110
        %v2273 = vpop.permute.xlu0 %2272
        %2274 = vrot.lane.b32.xlu0 %v2267, 110
        %v2275 = vpop.permute.xlu0 %2274
        %2276 = vrot.lane.b32.xlu0 %v2268, 110
        %v2277 = vpop.permute.xlu0 %2276
        %v2278 = vsel %vm1052, %v2273, %v2275
        %v2279 = vsel %vm1052, %v2275, %v2277
        %v2283 = vadd.f32 %v2251, %v2273
        %v2284 = vadd.f32 %v2252, %v2278
        %v2285 = vadd.f32 %v2253, %v2279
        %2286 = vset.pattern.permute.xlu0 3
        %2287 = vperm.xlu0 %2286, %v1628
        %v2288 = vpop.permute.xlu0 %2287
        %v2290 = vlaneseq
        %v2291 = vshrl.u32 %v2290, 7
        %v2292 = vsub.s32 3, %v2291
        %v2293 = vrot.slane %v2187, %v2292
        %v2294 = vlaneseq
        %v2295 = vshrl.u32 %v2294, 7
        %v2296 = vsub.s32 3, %v2295
        %v2297 = vrot.slane %v2188, %v2296
        %v2298 = vmul.f32 %v2288, %v2293
        %v2299 = vmul.f32 %v2288, %v2297
        %v2300 = vmul.f32 %v2288, %v1148
        %2304 = vrot.lane.b32.xlu0 %v2298, 110
        %v2305 = vpop.permute.xlu0 %2304
        %2306 = vrot.lane.b32.xlu0 %v2299, 110
        %v2307 = vpop.permute.xlu0 %2306
        %2308 = vrot.lane.b32.xlu0 %v2300, 110
        %v2309 = vpop.permute.xlu0 %2308
        %v2310 = vsel %vm1052, %v2305, %v2307
        %v2311 = vsel %vm1052, %v2307, %v2309
        %v2315 = vadd.f32 %v2283, %v2305
        %v2316 = vadd.f32 %v2284, %v2310
        %v2317 = vadd.f32 %v2285, %v2311
        %v2318 = vmul.f32 %v1619, %v1170
        %v2319 = vmul.f32 %v1620, %v1174
        %2321 = vset.pattern.permute.xlu0 0
        %2322 = vperm.xlu0 %2321, %v1629
        %v2323 = vpop.permute.xlu0 %2322
        %v2325 = vlaneseq
        %v2326 = vshrl.u32 %v2325, 7
        %v2327 = vsub.s32 0, %v2326
        %v2328 = vrot.slane %v2318, %v2327
        %v2329 = vlaneseq
        %v2330 = vshrl.u32 %v2329, 7
        %v2331 = vsub.s32 0, %v2330
        %v2332 = vrot.slane %v2319, %v2331
        %v2333 = vmul.f32 %v2323, %v2328
        %v2334 = vmul.f32 %v2323, %v2332
        %v2335 = vmul.f32 %v2323, %v1197
        %2339 = vrot.lane.b32.xlu0 %v2333, 96
        %v2340 = vpop.permute.xlu0 %2339
        %2341 = vrot.lane.b32.xlu0 %v2334, 96
        %v2342 = vpop.permute.xlu0 %2341
        %2343 = vrot.lane.b32.xlu0 %v2335, 96
        %v2344 = vpop.permute.xlu0 %2343
        %v2345 = vsel %vm1210, %v2340, %v2342
        %v2346 = vsel %vm1210, %v2342, %v2344
        %v2350 = vadd.f32 %v2315, %v2340
        %v2351 = vadd.f32 %v2316, %v2345
        %v2352 = vadd.f32 %v2317, %v2346
        %2353 = vset.pattern.permute.xlu0 1
        %2354 = vperm.xlu0 %2353, %v1629
        %v2355 = vpop.permute.xlu0 %2354
        %v2357 = vlaneseq
        %v2358 = vshrl.u32 %v2357, 7
        %v2359 = vsub.s32 1, %v2358
        %v2360 = vrot.slane %v2318, %v2359
        %v2361 = vlaneseq
        %v2362 = vshrl.u32 %v2361, 7
        %v2363 = vsub.s32 1, %v2362
        %v2364 = vrot.slane %v2319, %v2363
        %v2365 = vmul.f32 %v2355, %v2360
        %v2366 = vmul.f32 %v2355, %v2364
        %v2367 = vmul.f32 %v2355, %v1234
        %2371 = vrot.lane.b32.xlu0 %v2365, 96
        %v2372 = vpop.permute.xlu0 %2371
        %2373 = vrot.lane.b32.xlu0 %v2366, 96
        %v2374 = vpop.permute.xlu0 %2373
        %2375 = vrot.lane.b32.xlu0 %v2367, 96
        %v2376 = vpop.permute.xlu0 %2375
        %v2377 = vsel %vm1210, %v2372, %v2374
        %v2378 = vsel %vm1210, %v2374, %v2376
        %v2382 = vadd.f32 %v2350, %v2372
        %v2383 = vadd.f32 %v2351, %v2377
        %v2384 = vadd.f32 %v2352, %v2378
        %2385 = vset.pattern.permute.xlu0 2
        %2386 = vperm.xlu0 %2385, %v1629
        %v2387 = vpop.permute.xlu0 %2386
        %v2389 = vlaneseq
        %v2390 = vshrl.u32 %v2389, 7
        %v2391 = vsub.s32 2, %v2390
        %v2392 = vrot.slane %v2318, %v2391
        %v2393 = vlaneseq
        %v2394 = vshrl.u32 %v2393, 7
        %v2395 = vsub.s32 2, %v2394
        %v2396 = vrot.slane %v2319, %v2395
        %v2397 = vmul.f32 %v2387, %v2392
        %v2398 = vmul.f32 %v2387, %v2396
        %v2399 = vmul.f32 %v2387, %v1270
        %2403 = vrot.lane.b32.xlu0 %v2397, 96
        %v2404 = vpop.permute.xlu0 %2403
        %2405 = vrot.lane.b32.xlu0 %v2398, 96
        %v2406 = vpop.permute.xlu0 %2405
        %2407 = vrot.lane.b32.xlu0 %v2399, 96
        %v2408 = vpop.permute.xlu0 %2407
        %v2409 = vsel %vm1210, %v2404, %v2406
        %v2410 = vsel %vm1210, %v2406, %v2408
        %v2414 = vadd.f32 %v2382, %v2404
        %v2415 = vadd.f32 %v2383, %v2409
        %v2416 = vadd.f32 %v2384, %v2410
        %2417 = vset.pattern.permute.xlu0 3
        %2418 = vperm.xlu0 %2417, %v1629
        %v2419 = vpop.permute.xlu0 %2418
        %v2421 = vlaneseq
        %v2422 = vshrl.u32 %v2421, 7
        %v2423 = vsub.s32 3, %v2422
        %v2424 = vrot.slane %v2318, %v2423
        %v2425 = vlaneseq
        %v2426 = vshrl.u32 %v2425, 7
        %v2427 = vsub.s32 3, %v2426
        %v2428 = vrot.slane %v2319, %v2427
        %v2429 = vmul.f32 %v2419, %v2424
        %v2430 = vmul.f32 %v2419, %v2428
        %v2431 = vmul.f32 %v2419, %v1306
        %2435 = vrot.lane.b32.xlu0 %v2429, 96
        %v2436 = vpop.permute.xlu0 %2435
        %2437 = vrot.lane.b32.xlu0 %v2430, 96
        %v2438 = vpop.permute.xlu0 %2437
        %2439 = vrot.lane.b32.xlu0 %v2431, 96
        %v2440 = vpop.permute.xlu0 %2439
        %v2441 = vsel %vm1210, %v2436, %v2438
        %v2442 = vsel %vm1210, %v2438, %v2440
        %v2446 = vadd.f32 %v2414, %v2436
        %v2447 = vadd.f32 %v2415, %v2441
        %v2448 = vadd.f32 %v2416, %v2442
        %2450 = vset.pattern.permute.xlu0 0
        %2451 = vperm.xlu0 %2450, %v1630
        %v2452 = vpop.permute.xlu0 %2451
        %v2454 = vmul.f32 %v2452, %v1715
        %v2455 = vmul.f32 %v2452, %v1719
        %v2456 = vmul.f32 %v2452, 0.0
        %2460 = vrot.lane.b32.xlu0 %v2454, 95
        %v2461 = vpop.permute.xlu0 %2460
        %2462 = vrot.lane.b32.xlu0 %v2455, 95
        %v2463 = vpop.permute.xlu0 %2462
        %2464 = vrot.lane.b32.xlu0 %v2456, 95
        %v2465 = vpop.permute.xlu0 %2464
        %v2466 = vsel %vm1344, %v2461, %v2463
        %v2467 = vsel %vm1344, %v2463, %v2465
        %v2471 = vadd.f32 %v2446, %v2461
        %v2472 = vadd.f32 %v2447, %v2466
        %v2473 = vadd.f32 %v2448, %v2467
        %2474 = vset.pattern.permute.xlu0 1
        %2475 = vperm.xlu0 %2474, %v1630
        %v2476 = vpop.permute.xlu0 %2475
        %v2478 = vmul.f32 %v2476, %v1747
        %v2479 = vmul.f32 %v2476, %v1751
        %v2480 = vmul.f32 %v2476, 0.0
        %2484 = vrot.lane.b32.xlu0 %v2478, 95
        %v2485 = vpop.permute.xlu0 %2484
        %2486 = vrot.lane.b32.xlu0 %v2479, 95
        %v2487 = vpop.permute.xlu0 %2486
        %2488 = vrot.lane.b32.xlu0 %v2480, 95
        %v2489 = vpop.permute.xlu0 %2488
        %v2490 = vsel %vm1344, %v2485, %v2487
        %v2491 = vsel %vm1344, %v2487, %v2489
        %v2495 = vadd.f32 %v2471, %v2485
        %v2496 = vadd.f32 %v2472, %v2490
        %v2497 = vadd.f32 %v2473, %v2491
        %2498 = vset.pattern.permute.xlu0 2
        %2499 = vperm.xlu0 %2498, %v1630
        %v2500 = vpop.permute.xlu0 %2499
        %v2502 = vmul.f32 %v2500, %v1779
        %v2503 = vmul.f32 %v2500, %v1783
        %v2504 = vmul.f32 %v2500, 0.0
        %2508 = vrot.lane.b32.xlu0 %v2502, 95
        %v2509 = vpop.permute.xlu0 %2508
        %2510 = vrot.lane.b32.xlu0 %v2503, 95
        %v2511 = vpop.permute.xlu0 %2510
        %2512 = vrot.lane.b32.xlu0 %v2504, 95
        %v2513 = vpop.permute.xlu0 %2512
        %v2514 = vsel %vm1344, %v2509, %v2511
        %v2515 = vsel %vm1344, %v2511, %v2513
        %v2519 = vadd.f32 %v2495, %v2509
        %v2520 = vadd.f32 %v2496, %v2514
        %v2521 = vadd.f32 %v2497, %v2515
        %2522 = vset.pattern.permute.xlu0 3
        %2523 = vperm.xlu0 %2522, %v1630
        %v2524 = vpop.permute.xlu0 %2523
        %v2526 = vmul.f32 %v2524, %v1811
        %v2527 = vmul.f32 %v2524, %v1815
        %v2528 = vmul.f32 %v2524, 0.0
        %2532 = vrot.lane.b32.xlu0 %v2526, 95
        %v2533 = vpop.permute.xlu0 %2532
        %2534 = vrot.lane.b32.xlu0 %v2527, 95
        %v2535 = vpop.permute.xlu0 %2534
        %2536 = vrot.lane.b32.xlu0 %v2528, 95
        %v2537 = vpop.permute.xlu0 %2536
        %v2538 = vsel %vm1344, %v2533, %v2535
        %v2539 = vsel %vm1344, %v2535, %v2537
        %v2543 = vadd.f32 %v2519, %v2533
        %v2544 = vadd.f32 %v2520, %v2538
        %v2545 = vadd.f32 %v2521, %v2539
        %v2546 = vmul.f32 %v1619, %v1426
        %v2547 = vmul.f32 %v1620, %v1430
        %2549 = vset.pattern.permute.xlu0 0
        %2550 = vperm.xlu0 %2549, %v1631
        %v2551 = vpop.permute.xlu0 %2550
        %v2553 = vlaneseq
        %v2554 = vshrl.u32 %v2553, 7
        %v2555 = vsub.s32 0, %v2554
        %v2556 = vrot.slane %v2546, %v2555
        %v2557 = vlaneseq
        %v2558 = vshrl.u32 %v2557, 7
        %v2559 = vsub.s32 0, %v2558
        %v2560 = vrot.slane %v2547, %v2559
        %v2561 = vmul.f32 %v2551, %v2556
        %v2562 = vmul.f32 %v2551, %v2560
        %v2563 = vmul.f32 %v2551, %v1453
        %2567 = vrot.lane.b32.xlu0 %v2561, 94
        %v2568 = vpop.permute.xlu0 %2567
        %2569 = vrot.lane.b32.xlu0 %v2562, 94
        %v2570 = vpop.permute.xlu0 %2569
        %2571 = vrot.lane.b32.xlu0 %v2563, 94
        %v2572 = vpop.permute.xlu0 %2571
        %v2573 = vsel %vm1466, %v2568, %v2570
        %v2574 = vsel %vm1466, %v2570, %v2572
        %v2578 = vadd.f32 %v2543, %v2568
        %v2579 = vadd.f32 %v2544, %v2573
        %v2580 = vadd.f32 %v2545, %v2574
        %2581 = vset.pattern.permute.xlu0 1
        %2582 = vperm.xlu0 %2581, %v1631
        %v2583 = vpop.permute.xlu0 %2582
        %v2585 = vlaneseq
        %v2586 = vshrl.u32 %v2585, 7
        %v2587 = vsub.s32 1, %v2586
        %v2588 = vrot.slane %v2546, %v2587
        %v2589 = vlaneseq
        %v2590 = vshrl.u32 %v2589, 7
        %v2591 = vsub.s32 1, %v2590
        %v2592 = vrot.slane %v2547, %v2591
        %v2593 = vmul.f32 %v2583, %v2588
        %v2594 = vmul.f32 %v2583, %v2592
        %v2595 = vmul.f32 %v2583, %v1490
        %2599 = vrot.lane.b32.xlu0 %v2593, 94
        %v2600 = vpop.permute.xlu0 %2599
        %2601 = vrot.lane.b32.xlu0 %v2594, 94
        %v2602 = vpop.permute.xlu0 %2601
        %2603 = vrot.lane.b32.xlu0 %v2595, 94
        %v2604 = vpop.permute.xlu0 %2603
        %v2605 = vsel %vm1466, %v2600, %v2602
        %v2606 = vsel %vm1466, %v2602, %v2604
        %v2610 = vadd.f32 %v2578, %v2600
        %v2611 = vadd.f32 %v2579, %v2605
        %v2612 = vadd.f32 %v2580, %v2606
        %2613 = vset.pattern.permute.xlu0 2
        %2614 = vperm.xlu0 %2613, %v1631
        %v2615 = vpop.permute.xlu0 %2614
        %v2617 = vlaneseq
        %v2618 = vshrl.u32 %v2617, 7
        %v2619 = vsub.s32 2, %v2618
        %v2620 = vrot.slane %v2546, %v2619
        %v2621 = vlaneseq
        %v2622 = vshrl.u32 %v2621, 7
        %v2623 = vsub.s32 2, %v2622
        %v2624 = vrot.slane %v2547, %v2623
        %v2625 = vmul.f32 %v2615, %v2620
        %v2626 = vmul.f32 %v2615, %v2624
        %v2627 = vmul.f32 %v2615, %v1526
        %2631 = vrot.lane.b32.xlu0 %v2625, 94
        %v2632 = vpop.permute.xlu0 %2631
        %2633 = vrot.lane.b32.xlu0 %v2626, 94
        %v2634 = vpop.permute.xlu0 %2633
        %2635 = vrot.lane.b32.xlu0 %v2627, 94
        %v2636 = vpop.permute.xlu0 %2635
        %v2637 = vsel %vm1466, %v2632, %v2634
        %v2638 = vsel %vm1466, %v2634, %v2636
        %v2642 = vadd.f32 %v2610, %v2632
        %v2643 = vadd.f32 %v2611, %v2637
        %v2644 = vadd.f32 %v2612, %v2638
        %2645 = vset.pattern.permute.xlu0 3
        %2646 = vperm.xlu0 %2645, %v1631
        %v2647 = vpop.permute.xlu0 %2646
        %v2649 = vlaneseq
        %v2650 = vshrl.u32 %v2649, 7
        %v2651 = vsub.s32 3, %v2650
        %v2652 = vrot.slane %v2546, %v2651
        %v2653 = vlaneseq
        %v2654 = vshrl.u32 %v2653, 7
        %v2655 = vsub.s32 3, %v2654
        %v2656 = vrot.slane %v2547, %v2655
        %v2657 = vmul.f32 %v2647, %v2652
        %v2658 = vmul.f32 %v2647, %v2656
        %v2659 = vmul.f32 %v2647, %v1562
        %2663 = vrot.lane.b32.xlu0 %v2657, 94
        %v2664 = vpop.permute.xlu0 %2663
        %2665 = vrot.lane.b32.xlu0 %v2658, 94
        %v2666 = vpop.permute.xlu0 %2665
        %2667 = vrot.lane.b32.xlu0 %v2659, 94
        %v2668 = vpop.permute.xlu0 %2667
        %v2669 = vsel %vm1466, %v2664, %v2666
        %v2670 = vsel %vm1466, %v2666, %v2668
        %v2674 = vadd.f32 %v2642, %v2664
        %v2675 = vadd.f32 %v2643, %v2669
        %v2676 = vadd.f32 %v2644, %v2670
        %v2677 = vld [vmem:[%s5] sm:$0xf]
        %2679 = vset.pattern.permute.xlu0 0
        %2680 = vperm.xlu0 %2679, %v2677
        %v2681 = vpop.permute.xlu0 %2680
        %v2683 = vadd.f32 %v2674, %v2681
        %v2684 = vadd.f32 %v2675, %v2681
        %v2685 = vadd.f32 %v2676, %v2681
        %vm2686 = vcmp.gt.f32.partialorder %v2683, 0.0
        %vm2687 = vcmp.gt.f32.partialorder %v2684, 0.0
        %vm2688 = vcmp.gt.f32.partialorder %v2685, 0.0
        %v2689 = vmin.f32 %v2683, 0.0
        %v2690 = vmin.f32 %v2684, 0.0
        %v2691 = vmin.f32 %v2685, 0.0
        %v2692 = vmul.f32 %v2689, 1.442695
        %v2693 = vpow.pop %v2692
        %v2694 = vmul.f32 %v2690, 1.442695
        %v2695 = vpow.pop %v2694
        %v2696 = vmul.f32 %v2691, 1.442695
        %v2697 = vpow.pop %v2696
        %v2698 = vsub.f32 %v2693, 1.0
        %v2699 = vsub.f32 %v2695, 1.0
        %v2700 = vsub.f32 %v2697, 1.0
        %v2701 = vsel %vm2686, %v2683, %v2698
        %v2702 = vsel %vm2687, %v2684, %v2699
        %v2703 = vsel %vm2688, %v2685, %v2700
        %2707 = vrot.lane.b32.xlu0 %v2701, 17
        %v2708 = vpop.permute.xlu0 %2707
        %2709 = vrot.lane.b32.xlu0 %v2702, 17
        %v2710 = vpop.permute.xlu0 %2709
        %2711 = vrot.lane.b32.xlu0 %v2703, 17
        %v2712 = vpop.permute.xlu0 %2711
        %v2713 = vsel %vm1429, %v2708, %v2710
        %v2714 = vsel %vm1429, %v2710, %v2712
        %v2717 = vadd.f32 %v323, %v2713
        %v2718 = vadd.f32 %v324, %v2714
        %v2721 = vcombine.low %v2717, %v2718
        %2723 = vst [vmem:[%s286] sm:$0xff] %v2721
        %s2724 = sand.u32 %s186, 1
        %s2725 = scalar_lea.sflag [#allocation3], %s2724
        %s2726 = sand.u32 %s186, 1
        %s2727 = smul.addr %s2726, 8
        %s2728 = scalar_lea.vmem [#allocation2], %s2727
        // Predicated region
        $region49: #{tpu_custom_call.1} parent=47 // pred_check
          %p2729 = pneg %p196
        $region50: #{tpu_custom_call.1} parent=47 // pred_check_branch
          %2731 = sbr.rel (%p2729) target = $region52
        $region51: #{tpu_custom_call.1} parent=47 // pred_region
          %s2733 = ssub.s32 128, 128
          %2734 = vsyncadd %s2725, %s2733
          %s2735 = smul.addr %s21, 2
          %s2736 = smul.addr %s2735, 64
          %s2737 = scalar_lea.hbm %s7, %s2736
          %s2739 = sshll.u32 %s2728, 4
          %s2740 = int_to_ptr.vmem [resolvable:$true] %s2739
          %2742 = dma.vmem_to_hbm [thread:$0]  %s2740, 128, %s2737, %s2725
        $region52: #{tpu_custom_call.1} parent=47 // pred_fallthru
          _
      $region48: #{tpu_custom_call.1} parent=5 // pred_fallthru
        _
      %p2743 = scmp.le.s32.totalorder 2, %s16
      // Predicated region
      $region53: #{tpu_custom_call.1} parent=5 // pred_check
        %p2744 = pneg %p2743
      $region54: #{tpu_custom_call.1} parent=5 // pred_check_branch
        %2746 = sbr.rel (%p2744) target = $region56
      $region55: #{tpu_custom_call.1} parent=5 // pred_region
        %s2747 = ssub.s32 %s16, 2
        // Predicated region
        $region57: #{tpu_custom_call.1} parent=55 // pred_check
          %p2748 = pneg %p202
        $region58: #{tpu_custom_call.1} parent=55 // pred_check_branch
          %2750 = sbr.rel (%p2748) target = $region60
        $region59: #{tpu_custom_call.1} parent=55 // pred_region
          %s2751 = sand.u32 %s187, 1
          %s2752 = scalar_lea.sflag [#allocation3], %s2751
          %s2753 = sand.u32 %s187, 1
          %s2754 = smul.addr %s2753, 8
          %s2755 = scalar_lea.vmem [#allocation2], %s2754
          %2756 = dma.done %s2752, 128
        $region60: #{tpu_custom_call.1} parent=55 // pred_fallthru
          _
      $region56: #{tpu_custom_call.1} parent=5 // pred_fallthru
        _
    $region6: #{tpu_custom_call.1} parent=1 // loop_footer
      %s20 = sadd.s32 1, %s16
    $region7: #{tpu_custom_call.1} parent=1 // loop_footer_branch
      %15 = sbr.rel target = $region3
    $region8: #{tpu_custom_call.1} parent=1 // loop_exit
      _
    %2757 = vsyncpa [#allocation3], 1
    %s2758 = scalar_lea.sflag [#allocation3], 1
    %2759 = vsyncpa %s2758, 1

</llo_original>
